<compile_context>
chip_gen: v7x
topology: tpu7x:2x2x1
jax: 0.10.0
libtpu: 0.0.40
codegen_flags: <defaults>
</compile_context>

<pallas_src>
import functools
import math

import jax
import jax.numpy as jnp
from jax import lax
from jax.experimental import pallas as pl
from jax.experimental.pallas import tpu as pltpu

NEG_INF = -1e30                     # finite large-negative mask (no inf-inf NaNs)
LN_EPS = 1e-5
VMEM_LIMIT = 32 * 1024 * 1024       # safe on v7x (64 MiB phys) and v5e/v6e


def _pick_tile(dim, pref, align):
    """Largest tile <= pref that is a multiple of `align` and divides `dim`;
    otherwise fall back to the full dim (allowed by the (8,128) block rule)."""
    t = (min(pref, dim) // align) * align
    while t >= align:
        if dim % t == 0:
            return t
        t -= align
    return dim


# --------------------------------------------------------------------------
# fused matmul + bias (+ optional ReLU), tiled over (rows, cols)
# --------------------------------------------------------------------------
def _mm_bias_kernel(x_ref, w_ref, b_ref, o_ref, *, relu):
    y = jnp.dot(x_ref[...].astype(jnp.bfloat16), w_ref[...],
                preferred_element_type=jnp.float32) + b_ref[...]
    if relu:
        y = jnp.maximum(y, 0.0)
    o_ref[...] = y.astype(o_ref.dtype)


def linear_bias(x2d, w_t, b, relu=False, tm_pref=256, tn_pref=512):
    """y = x2d @ w_t + b  (w_t pre-transposed (Din, Dout), bf16)."""
    M, K = x2d.shape
    Dout = w_t.shape[1]
    tm = _pick_tile(M, tm_pref, 8)
    tn = _pick_tile(Dout, tn_pref, 128)
    grid = (M // tm, Dout // tn)
    return pl.pallas_call(
        functools.partial(_mm_bias_kernel, relu=relu),
        out_shape=jax.ShapeDtypeStruct((M, Dout), jnp.float32),
        grid=grid,
        in_specs=[
            pl.BlockSpec((tm, K), lambda i, j: (i, 0)),
            pl.BlockSpec((K, tn), lambda i, j: (0, j)),
            pl.BlockSpec((1, tn), lambda i, j: (0, j)),
        ],
        out_specs=pl.BlockSpec((tm, tn), lambda i, j: (i, j)),
        compiler_params=pltpu.CompilerParams(
            dimension_semantics=("parallel", "parallel"),
            vmem_limit_bytes=VMEM_LIMIT),
    )(x2d, w_t, b.reshape(1, Dout))


# --------------------------------------------------------------------------
# fused matmul + bias + residual-add + LayerNorm (epilogue), tiled over rows
# (full Dout resident per tile: LayerNorm needs the whole feature row)
# --------------------------------------------------------------------------
def _mm_bias_add_ln_kernel(x_ref, w_ref, b_ref, r_ref, g_ref, be_ref, o_ref):
    y = jnp.dot(x_ref[...].astype(jnp.bfloat16), w_ref[...],
                preferred_element_type=jnp.float32) + b_ref[...]
    z = y + r_ref[...]
    mean = jnp.mean(z, axis=-1, keepdims=True)
    var = jnp.mean((z - mean) ** 2, axis=-1, keepdims=True)
    zn = (z - mean) * lax.rsqrt(var + LN_EPS)
    o_ref[...] = (zn * g_ref[...] + be_ref[...]).astype(o_ref.dtype)


def linear_add_layernorm(x2d, w_t, b, res2d, gamma, beta, tm_pref=256):
    M, K = x2d.shape
    D = w_t.shape[1]
    tm = _pick_tile(M, tm_pref, 8)
    return pl.pallas_call(
        _mm_bias_add_ln_kernel,
        out_shape=jax.ShapeDtypeStruct((M, D), jnp.float32),
        grid=(M // tm,),
        in_specs=[
            pl.BlockSpec((tm, K), lambda i: (i, 0)),
            pl.BlockSpec((K, D), lambda i: (0, 0)),
            pl.BlockSpec((1, D), lambda i: (0, 0)),
            pl.BlockSpec((tm, D), lambda i: (i, 0)),
            pl.BlockSpec((1, D), lambda i: (0, 0)),
            pl.BlockSpec((1, D), lambda i: (0, 0)),
        ],
        out_specs=pl.BlockSpec((tm, D), lambda i: (i, 0)),
        compiler_params=pltpu.CompilerParams(
            dimension_semantics=("parallel",),
            vmem_limit_bytes=VMEM_LIMIT),
    )(x2d, w_t, b.reshape(1, D), res2d, gamma.reshape(1, D), beta.reshape(1, D))


# --------------------------------------------------------------------------
# fused multi-head attention + out-projection + residual-add + LayerNorm
# grid over batch; all heads handled inside one kernel step; causal mask is
# built in-kernel; pad mask is a tiny (1,1,Lk) additive bias (self-attn only);
# output written lane-dense as (Lq, H*Dh).
# --------------------------------------------------------------------------
def _attn_fused_kernel(*refs, num_heads, scale, causal, has_pad):
    if has_pad:
        (q_ref, k_ref, v_ref, pad_ref, wo_ref, bo_ref,
         res_ref, g_ref, b_ref, o_ref) = refs
    else:
        (q_ref, k_ref, v_ref, wo_ref, bo_ref,
         res_ref, g_ref, b_ref, o_ref) = refs
        pad_ref = None

    Lq = q_ref.shape[2]
    Lk = k_ref.shape[2]
    D = wo_ref.shape[2]

    if causal:
        rows = lax.broadcasted_iota(jnp.int32, (Lq, Lk), 0)
        cols = lax.broadcasted_iota(jnp.int32, (Lq, Lk), 1)
        causal_bias = jnp.where(cols > rows, NEG_INF, 0.0).astype(jnp.float32)
    else:
        causal_bias = None
    pad_bias = pad_ref[0] if pad_ref is not None else None      # (1, Lk)

    acc = jnp.zeros((Lq, D), jnp.float32)
    for h in range(num_heads):                                   # static unroll
        q = q_ref[0, h].astype(jnp.bfloat16)                     # (Lq, Dh)
        k = k_ref[0, h].astype(jnp.bfloat16)                     # (Lk, Dh)
        v = v_ref[0, h].astype(jnp.bfloat16)                     # (Lk, Dh)
        s = lax.dot_general(q, k, (((1,), (1,)), ((), ())),
                            preferred_element_type=jnp.float32) * scale
        if causal_bias is not None:
            s = s + causal_bias
        if pad_bias is not None:
            s = s + pad_bias
        s = s - jnp.max(s, axis=-1, keepdims=True)
        p = jnp.exp(s)
        p = p * pl.reciprocal(jnp.sum(p, axis=-1, keepdims=True), approx=True)
        o_h = jnp.dot(p.astype(jnp.bfloat16), v,
                      preferred_element_type=jnp.float32)        # (Lq, Dh)
        acc = acc + jnp.dot(o_h.astype(jnp.bfloat16), wo_ref[h],
                            preferred_element_type=jnp.float32)  # (Lq, D)

    z = acc + bo_ref[...] + res_ref[0]                           # bias + residual
    mean = jnp.mean(z, axis=-1, keepdims=True)
    var = jnp.mean((z - mean) ** 2, axis=-1, keepdims=True)
    zn = (z - mean) * lax.rsqrt(var + LN_EPS)
    o_ref[0] = (zn * g_ref[...] + b_ref[...]).astype(o_ref.dtype)


def attention_block(q, k, v, pad_bias, wo, bo, x_res, gamma, beta, *, causal):
    # q: (N, H, Lq, Dh); k, v: (N, H, Lk, Dh); pad_bias: (N, 1, Lk) or None
    # wo: (H, Dh, D) bf16; x_res: (N, Lq, D)
    N, H, Lq, Dh = q.shape
    Lk = k.shape[2]
    D = H * Dh
    scale = 1.0 / math.sqrt(Dh)
    has_pad = pad_bias is not None

    in_specs = [
        pl.BlockSpec((1, H, Lq, Dh), lambda i: (i, 0, 0, 0)),
        pl.BlockSpec((1, H, Lk, Dh), lambda i: (i, 0, 0, 0)),
        pl.BlockSpec((1, H, Lk, Dh), lambda i: (i, 0, 0, 0)),
    ]
    args = [q, k, v]
    if has_pad:
        in_specs.append(pl.BlockSpec((1, 1, Lk), lambda i: (i, 0, 0)))
        args.append(pad_bias)
    in_specs += [
        pl.BlockSpec((H, Dh, D), lambda i: (0, 0, 0)),
        pl.BlockSpec((1, D), lambda i: (0, 0)),
        pl.BlockSpec((1, Lq, D), lambda i: (i, 0, 0)),
        pl.BlockSpec((1, D), lambda i: (0, 0)),
        pl.BlockSpec((1, D), lambda i: (0, 0)),
    ]
    args += [wo, bo.reshape(1, D), x_res, gamma.reshape(1, D), beta.reshape(1, D)]

    return pl.pallas_call(
        functools.partial(_attn_fused_kernel, num_heads=H, scale=scale,
                          causal=causal, has_pad=has_pad),
        out_shape=jax.ShapeDtypeStruct((N, Lq, D), jnp.float32),
        grid=(N,),
        in_specs=in_specs,
        out_specs=pl.BlockSpec((1, Lq, D), lambda i: (i, 0, 0)),
        compiler_params=pltpu.CompilerParams(
            dimension_semantics=("parallel",),
            vmem_limit_bytes=VMEM_LIMIT),
    )(*args)


# --------------------------------------------------------------------------
# one nn.TransformerDecoderLayer (post-norm, ReLU FFN) — 7 pallas_calls
# --------------------------------------------------------------------------
def decoder_layer(x, mem, lp, num_heads, pad_bias):
    N, L, D = x.shape
    Le = mem.shape[1]
    H = num_heads
    Dh = D // H

    # ---- self-attention: packed QKV matmul, then fused attn+outproj+res+LN
    qkv = linear_bias(x.reshape(N * L, D), lp["qkv_w"], lp["qkv_b"])     # (N*L, 3D)
    qkv = qkv.reshape(N, L, 3, H, Dh).transpose(2, 0, 3, 1, 4)           # (3,N,H,L,Dh)
    x = attention_block(qkv[0], qkv[1], qkv[2], pad_bias,
                        lp["self_wo"], lp["self_bo"],
                        x, lp["norm1_g"], lp["norm1_b"], causal=True)

    # ---- cross-attention: q from x, packed KV from memory; no mask at all
    q = linear_bias(x.reshape(N * L, D), lp["cq_w"], lp["cq_b"])
    q = q.reshape(N, L, H, Dh).transpose(0, 2, 1, 3)                     # (N,H,L,Dh)
    kv = linear_bias(mem.reshape(N * Le, D), lp["ckv_w"], lp["ckv_b"])   # (N*Le, 2D)
    kv = kv.reshape(N, Le, 2, H, Dh).transpose(2, 0, 3, 1, 4)            # (2,N,H,Le,Dh)
    x = attention_block(q, kv[0], kv[1], None,
                        lp["cross_wo"], lp["cross_bo"],
                        x, lp["norm2_g"], lp["norm2_b"], causal=False)

    # ---- FFN: matmul+bias+ReLU, then matmul+bias+residual+LN fused
    x2d = x.reshape(N * L, D)
    h = linear_bias(x2d, lp["lin1_w"], lp["lin1_b"], relu=True)          # (N*L, dff)
    x = linear_add_layernorm(h, lp["lin2_w"], lp["lin2_b"], x2d,
                             lp["norm3_g"], lp["norm3_b"]).reshape(N, L, D)
    return x


# --------------------------------------------------------------------------
# full Decoder.forward
# --------------------------------------------------------------------------
def decoder_forward(params, encoder_out, tgt, *, num_heads, pad_idx):
    N, L = tgt.shape
    D = params["embedding"].shape[1]

    # key-padding additive bias (N, 1, L); causal mask is generated in-kernel.
    pad_bias = jnp.where(tgt == pad_idx, NEG_INF, 0.0).astype(jnp.float32)[:, None, :]

    # embedding gather + positional add: left to XLA so it fuses with the gather.
    # TODO(synk): decoder_pos_drop / encoder_pos_drop / in-layer dropout are eval-mode identities.
    x = jnp.take(params["embedding"], tgt, axis=0) + params["decoder_pos_embed"]
    mem = encoder_out + params["encoder_pos_embed"]

    for lp in params["layers"]:
        x = decoder_layer(x, mem, lp, num_heads, pad_bias)

    logits = linear_bias(x.reshape(N * L, D),
                         params["out_w"], params["out_b"]).reshape(N, L, -1)
    return logits, x


# --------------------------------------------------------------------------
# pure-JAX reference (f32) using the SAME packed weights — correctness guard
# --------------------------------------------------------------------------
def reference_forward(params, encoder_out, tgt, *, num_heads, pad_idx):
    N, L = tgt.shape
    Le = encoder_out.shape[1]
    D = params["embedding"].shape[1]
    H = num_heads
    Dh = D // H
    f32 = lambda a: a.astype(jnp.float32)

    causal = jnp.where(jnp.arange(L)[None, :] > jnp.arange(L)[:, None], NEG_INF, 0.0)
    pad = jnp.where(tgt == pad_idx, NEG_INF, 0.0)

    def ln(z, g, b):
        m = jnp.mean(z, -1, keepdims=True)
        v = jnp.mean((z - m) ** 2, -1, keepdims=True)
        return (z - m) / jnp.sqrt(v + LN_EPS) * g + b

    x = jnp.take(params["embedding"], tgt, axis=0) + params["decoder_pos_embed"]
    mem = encoder_out + params["encoder_pos_embed"]

    for lp in params["layers"]:
        qkv = x.reshape(N * L, D) @ f32(lp["qkv_w"]) + lp["qkv_b"]
        qkv = qkv.reshape(N, L, 3, H, Dh).transpose(2, 0, 3, 1, 4)
        q, k, v = qkv[0], qkv[1], qkv[2]
        s = jnp.einsum("nhqd,nhkd->nhqk", q, k) / math.sqrt(Dh)
        s = s + causal[None, None] + pad[:, None, None, :]
        o = jnp.einsum("nhqk,nhkd->nhqd", jax.nn.softmax(s, -1), v)
        sa = jnp.einsum("nhqd,hde->nqe", o, f32(lp["self_wo"])) + lp["self_bo"]
        x = ln(x + sa, lp["norm1_g"], lp["norm1_b"])

        qc = (x.reshape(N * L, D) @ f32(lp["cq_w"]) + lp["cq_b"]
              ).reshape(N, L, H, Dh).transpose(0, 2, 1, 3)
        kv = (mem.reshape(N * Le, D) @ f32(lp["ckv_w"]) + lp["ckv_b"]
              ).reshape(N, Le, 2, H, Dh).transpose(2, 0, 3, 1, 4)
        s = jnp.einsum("nhqd,nhkd->nhqk", qc, kv[0]) / math.sqrt(Dh)
        o = jnp.einsum("nhqk,nhkd->nhqd", jax.nn.softmax(s, -1), kv[1])
        ca = jnp.einsum("nhqd,hde->nqe", o, f32(lp["cross_wo"])) + lp["cross_bo"]
        x = ln(x + ca, lp["norm2_g"], lp["norm2_b"])

        h = jnp.maximum(x.reshape(N * L, D) @ f32(lp["lin1_w"]) + lp["lin1_b"], 0.0)
        ff = (h @ f32(lp["lin2_w"]) + lp["lin2_b"]).reshape(N, L, D)
        x = ln(x + ff, lp["norm3_g"], lp["norm3_b"])

    logits = (x.reshape(N * L, D) @ f32(params["out_w"]) + params["out_b"]
              ).reshape(N, L, -1)
    return logits, x


# --------------------------------------------------------------------------
# deterministic synthetic parameter init — weights PRE-PACKED:
#   stored (Din, Dout) in bf16, QKV / KV concatenated, out_proj as (H, Dh, D)
# --------------------------------------------------------------------------
def init_params(key, vocab_size, encoder_len, dim, num_heads, num_layers,
                max_len, dim_ff=2048):
    H = num_heads
    Dh = dim // H
    keys = jax.random.split(key, 4 + num_layers)

    def xav(k, in_d, out_d, dtype=jnp.bfloat16):
        a = math.sqrt(6.0 / (in_d + out_d))
        return jax.random.uniform(k, (in_d, out_d), jnp.float32, -a, a).astype(dtype)

    params = {
        "embedding": xav(keys[0], vocab_size, dim, jnp.float32),
        "decoder_pos_embed": 0.02 * jax.random.normal(keys[1], (1, max_len - 1, dim), jnp.float32),
        "encoder_pos_embed": 0.02 * jax.random.normal(keys[2], (1, encoder_len, dim), jnp.float32),
        "out_w": xav(keys[3], dim, vocab_size),                      # (D, V) bf16
        "out_b": jnp.zeros((vocab_size,), jnp.float32),
        "layers": [],
    }
    for li in range(num_layers):
        lk = jax.random.split(keys[4 + li], 7)
        params["layers"].append({
            "qkv_w": xav(lk[0], dim, 3 * dim),                       # packed (D, 3D)
            "qkv_b": jnp.zeros((3 * dim,), jnp.float32),
            "self_wo": xav(lk[1], dim, dim).reshape(H, Dh, dim),     # (H, Dh, D)
            "self_bo": jnp.zeros((dim,), jnp.float32),
            "cq_w": xav(lk[2], dim, dim),
            "cq_b": jnp.zeros((dim,), jnp.float32),
            "ckv_w": xav(lk[3], dim, 2 * dim),                       # packed (D, 2D)
            "ckv_b": jnp.zeros((2 * dim,), jnp.float32),
            "cross_wo": xav(lk[4], dim, dim).reshape(H, Dh, dim),
            "cross_bo": jnp.zeros((dim,), jnp.float32),
            "lin1_w": xav(lk[5], dim, dim_ff),
            "lin1_b": jnp.zeros((dim_ff,), jnp.float32),
            "lin2_w": xav(lk[6], dim_ff, dim),
            "lin2_b": jnp.zeros((dim,), jnp.float32),
            "norm1_g": jnp.ones((dim,), jnp.float32),
            "norm1_b": jnp.zeros((dim,), jnp.float32),
            "norm2_g": jnp.ones((dim,), jnp.float32),
            "norm2_b": jnp.zeros((dim,), jnp.float32),
            "norm3_g": jnp.ones((dim,), jnp.float32),
            "norm3_b": jnp.zeros((dim,), jnp.float32),
        })
    return params


if __name__ == "__main__":
    vocab_size, encoder_len, dim, num_heads, num_layers, max_len, pad_idx = 40, 10, 32, 4, 2, 17, 0
    N = 2
    L = max_len - 1  # 16 (decoder_pos_embed length)

    key = jax.random.PRNGKey(0)
    kp, ke, kt = jax.random.split(key, 3)
    params = init_params(kp, vocab_size, encoder_len, dim, num_heads, num_layers, max_len)

    encoder_out = jax.random.normal(ke, (N, encoder_len, dim), jnp.float32)
    tgt = jax.random.randint(kt, (N, L), 1, vocab_size, dtype=jnp.int32)
    tgt = tgt.at[:, -3:].set(pad_idx)  # trailing padding; first token always non-pad

    fwd = jax.jit(functools.partial(decoder_forward,
                                    num_heads=num_heads, pad_idx=pad_idx))
    logits, preds = fwd(params, encoder_out, tgt)
    jax.block_until_ready((logits, preds))

    ref_logits, ref_preds = reference_forward(params, encoder_out, tgt,
                                              num_heads=num_heads, pad_idx=pad_idx)

    assert logits.shape == (N, L, vocab_size), logits.shape
    assert preds.shape == (N, L, dim), preds.shape
    assert bool(jnp.all(jnp.isfinite(logits)))
    # generous tolerance: kernel path uses bf16 MXU inputs + approx reciprocal
    assert float(jnp.max(jnp.abs(logits - ref_logits))) < 0.2
    assert float(jnp.max(jnp.abs(preds - ref_preds))) < 0.2
    print("KERNEL_OK")
</pallas_src>

<mosaic_0001>
module attributes {stable_mosaic.version = 11 : i64} {
  func.func @_mm_bias_kernel(%arg0: i32, %arg1: i32, %arg2: memref<32x32xf32, #tpu.memory_space<vmem>>, %arg3: memref<32x96xbf16, #tpu.memory_space<vmem>>, %arg4: memref<1x96xf32, #tpu.memory_space<vmem>>, %arg5: memref<32x96xf32, #tpu.memory_space<vmem>>) attributes {dimension_semantics = [#tpu.dimension_semantics<parallel>, #tpu.dimension_semantics<parallel>], iteration_bounds = array<i64: 1, 1>, scalar_prefetch = 0 : i64, scratch_operands = 0 : i64, tpu.core_type = #tpu.core_type<tc>, window_params = [{transform_indices = @transform_0, window_bounds = array<i64: 32, 32>}, {transform_indices = @transform_1, window_bounds = array<i64: 32, 96>}, {transform_indices = @transform_2, window_bounds = array<i64: 1, 96>}, {transform_indices = @transform_3, window_bounds = array<i64: 32, 96>}]} {
    %c0 = arith.constant 0 : index
    %c0_0 = arith.constant 0 : index
    %0 = vector.load %arg2[%c0, %c0_0] : memref<32x32xf32, #tpu.memory_space<vmem>>, vector<32x32xf32>
    %1 = arith.truncf %0 : vector<32x32xf32> to vector<32x32xbf16>
    %c0_1 = arith.constant 0 : index
    %c0_2 = arith.constant 0 : index
    %2 = vector.load %arg3[%c0_1, %c0_2] : memref<32x96xbf16, #tpu.memory_space<vmem>>, vector<32x96xbf16>
    %cst = arith.constant dense<0.000000e+00> : vector<32x96xf32>
    %3 = tpu.matmul %1, %2, %cst {dimension_numbers = #tpu.dot_dimension_numbers<[1], [0], [0], [1], [0, 0, 1, 1], [], []>} : vector<32x32xbf16>, vector<32x96xbf16>, vector<32x96xf32> -> vector<32x96xf32>
    %c0_3 = arith.constant 0 : index
    %c0_4 = arith.constant 0 : index
    %4 = vector.load %arg4[%c0_3, %c0_4] : memref<1x96xf32, #tpu.memory_space<vmem>>, vector<1x96xf32>
    %5 = vector.broadcast %4 : vector<1x96xf32> to vector<32x96xf32>
    %6 = arith.addf %3, %5 : vector<32x96xf32>
    %c0_5 = arith.constant 0 : index
    %c0_6 = arith.constant 0 : index
    %7 = vector.load %arg5[%c0_5, %c0_6] : memref<32x96xf32, #tpu.memory_space<vmem>>, vector<32x96xf32>
    tpu.vector_store %arg5[%c0_5, %c0_6], %6 {strides = array<i32>} : memref<32x96xf32, #tpu.memory_space<vmem>>, vector<32x96xf32>,
    return
  }
  func.func @transform_0(%arg0: i32, %arg1: i32) -> (i32, i32) {
    %c0_i32 = arith.constant 0 : i32
    %c0_i32_0 = arith.constant 0 : i32
    return %arg0, %c0_i32 : i32, i32
  }
  func.func @transform_1(%arg0: i32, %arg1: i32) -> (i32, i32) {
    %c0_i32 = arith.constant 0 : i32
    %c0_i32_0 = arith.constant 0 : i32
    return %c0_i32, %arg1 : i32, i32
  }
  func.func @transform_2(%arg0: i32, %arg1: i32) -> (i32, i32) {
    %c0_i32 = arith.constant 0 : i32
    %c0_i32_0 = arith.constant 0 : i32
    return %c0_i32, %arg1 : i32, i32
  }
  func.func @transform_3(%arg0: i32, %arg1: i32) -> (i32, i32) {
    %c0_i32 = arith.constant 0 : i32
    return %arg0, %arg1 : i32, i32
  }
}

module attributes {stable_mosaic.version = 11 : i64} {
  func.func @_mm_bias_kernel(%arg0: i32, %arg1: i32, %arg2: memref<32x32xf32, #tpu.memory_space<vmem>>, %arg3: memref<32x32xbf16, #tpu.memory_space<vmem>>, %arg4: memref<1x32xf32, #tpu.memory_space<vmem>>, %arg5: memref<32x32xf32, #tpu.memory_space<vmem>>) attributes {dimension_semantics = [#tpu.dimension_semantics<parallel>, #tpu.dimension_semantics<parallel>], iteration_bounds = array<i64: 1, 1>, scalar_prefetch = 0 : i64, scratch_operands = 0 : i64, tpu.core_type = #tpu.core_type<tc>, window_params = [{transform_indices = @transform_0, window_bounds = array<i64: 32, 32>}, {transform_indices = @transform_1, window_bounds = array<i64: 32, 32>}, {transform_indices = @transform_2, window_bounds = array<i64: 1, 32>}, {transform_indices = @transform_3, window_bounds = array<i64: 32, 32>}]} {
    %c0 = arith.constant 0 : index
    %c0_0 = arith.constant 0 : index
    %0 = vector.load %arg2[%c0, %c0_0] : memref<32x32xf32, #tpu.memory_space<vmem>>, vector<32x32xf32>
    %1 = arith.truncf %0 : vector<32x32xf32> to vector<32x32xbf16>
    %c0_1 = arith.constant 0 : index
    %c0_2 = arith.constant 0 : index
    %2 = vector.load %arg3[%c0_1, %c0_2] : memref<32x32xbf16, #tpu.memory_space<vmem>>, vector<32x32xbf16>
    %cst = arith.constant dense<0.000000e+00> : vector<32x32xf32>
    %3 = tpu.matmul %1, %2, %cst {dimension_numbers = #tpu.dot_dimension_numbers<[1], [0], [0], [1], [0, 0, 1, 1], [], []>} : vector<32x32xbf16>, vector<32x32xbf16>, vector<32x32xf32> -> vector<32x32xf32>
    %c0_3 = arith.constant 0 : index
    %c0_4 = arith.constant 0 : index
    %4 = vector.load %arg4[%c0_3, %c0_4] : memref<1x32xf32, #tpu.memory_space<vmem>>, vector<1x32xf32>
    %5 = vector.broadcast %4 : vector<1x32xf32> to vector<32x32xf32>
    %6 = arith.addf %3, %5 : vector<32x32xf32>
    %c0_5 = arith.constant 0 : index
    %c0_6 = arith.constant 0 : index
    %7 = vector.load %arg5[%c0_5, %c0_6] : memref<32x32xf32, #tpu.memory_space<vmem>>, vector<32x32xf32>
    tpu.vector_store %arg5[%c0_5, %c0_6], %6 {strides = array<i32>} : memref<32x32xf32, #tpu.memory_space<vmem>>, vector<32x32xf32>,
    return
  }
  func.func @transform_0(%arg0: i32, %arg1: i32) -> (i32, i32) {
    %c0_i32 = arith.constant 0 : i32
    %c0_i32_0 = arith.constant 0 : i32
    return %arg0, %c0_i32 : i32, i32
  }
  func.func @transform_1(%arg0: i32, %arg1: i32) -> (i32, i32) {
    %c0_i32 = arith.constant 0 : i32
    %c0_i32_0 = arith.constant 0 : i32
    return %c0_i32, %arg1 : i32, i32
  }
  func.func @transform_2(%arg0: i32, %arg1: i32) -> (i32, i32) {
    %c0_i32 = arith.constant 0 : i32
    %c0_i32_0 = arith.constant 0 : i32
    return %c0_i32, %arg1 : i32, i32
  }
  func.func @transform_3(%arg0: i32, %arg1: i32) -> (i32, i32) {
    %c0_i32 = arith.constant 0 : i32
    return %arg0, %arg1 : i32, i32
  }
}

module attributes {stable_mosaic.version = 11 : i64} {
  func.func @_attn_fused_kernel(%arg0: i32, %arg1: memref<1x4x16x8xf32, #tpu.memory_space<vmem>>, %arg2: memref<1x4x16x8xf32, #tpu.memory_space<vmem>>, %arg3: memref<1x4x16x8xf32, #tpu.memory_space<vmem>>, %arg4: memref<1x1x16xf32, #tpu.memory_space<vmem>>, %arg5: memref<4x8x32xbf16, #tpu.memory_space<vmem>>, %arg6: memref<1x32xf32, #tpu.memory_space<vmem>>, %arg7: memref<1x16x32xf32, #tpu.memory_space<vmem>>, %arg8: memref<1x32xf32, #tpu.memory_space<vmem>>, %arg9: memref<1x32xf32, #tpu.memory_space<vmem>>, %arg10: memref<1x16x32xf32, #tpu.memory_space<vmem>>) attributes {dimension_semantics = [#tpu.dimension_semantics<parallel>], iteration_bounds = array<i64: 2>, scalar_prefetch = 0 : i64, scratch_operands = 0 : i64, tpu.core_type = #tpu.core_type<tc>, window_params = [{transform_indices = @transform_0, window_bounds = array<i64: 1, 4, 16, 8>}, {transform_indices = @transform_1, window_bounds = array<i64: 1, 4, 16, 8>}, {transform_indices = @transform_2, window_bounds = array<i64: 1, 4, 16, 8>}, {transform_indices = @transform_3, window_bounds = array<i64: 1, 1, 16>}, {pipeline_mode = #tpu.pipeline_mode<synchronous>, transform_indices = @transform_4, window_bounds = array<i64: 4, 8, 32>}, {pipeline_mode = #tpu.pipeline_mode<synchronous>, transform_indices = @transform_5, window_bounds = array<i64: 1, 32>}, {transform_indices = @transform_6, window_bounds = array<i64: 1, 16, 32>}, {pipeline_mode = #tpu.pipeline_mode<synchronous>, transform_indices = @transform_7, window_bounds = array<i64: 1, 32>}, {pipeline_mode = #tpu.pipeline_mode<synchronous>, transform_indices = @transform_8, window_bounds = array<i64: 1, 32>}, {transform_indices = @transform_9, window_bounds = array<i64: 1, 16, 32>}]} {
    %0 = tpu.iota {dimensions = array<i32: 0>} : vector<16x16xi32>
    %1 = tpu.iota {dimensions = array<i32: 1>} : vector<16x16xi32>
    %2 = arith.cmpi sgt, %1, %0 : vector<16x16xi32>
    %cst = arith.constant -1.000000e+30 : f32
    %cst_0 = arith.constant 0.000000e+00 : f32
    %3 = vector.broadcast %cst : f32 to vector<16x16xf32>
    %4 = vector.broadcast %cst_0 : f32 to vector<16x16xf32>
    %5 = arith.select %2, %3, %4 : vector<16x16xi1>, vector<16x16xf32>
    %c0 = arith.constant 0 : index
    %c0_1 = arith.constant 0 : index
    %c0_2 = arith.constant 0 : index
    %6 = vector.load %arg4[%c0, %c0_1, %c0_2] : memref<1x1x16xf32, #tpu.memory_space<vmem>>, vector<1x1x16xf32>
    %7 = vector.shape_cast %6 : vector<1x1x16xf32> to vector<1x16xf32>
    %cst_3 = arith.constant 0.000000e+00 : f32
    %8 = vector.broadcast %cst_3 : f32 to vector<16x32xf32>
    %c0_4 = arith.constant 0 : index
    %c0_5 = arith.constant 0 : index
    %c0_6 = arith.constant 0 : index
    %c0_7 = arith.constant 0 : index
    %9 = vector.load %arg1[%c0_4, %c0_5, %c0_6, %c0_7] : memref<1x4x16x8xf32, #tpu.memory_space<vmem>>, vector<1x1x16x8xf32>
    %10 = vector.shape_cast %9 : vector<1x1x16x8xf32> to vector<16x8xf32>
    %11 = arith.truncf %10 : vector<16x8xf32> to vector<16x8xbf16>
    %c0_8 = arith.constant 0 : index
    %c0_9 = arith.constant 0 : index
    %c0_10 = arith.constant 0 : index
    %c0_11 = arith.constant 0 : index
    %12 = vector.load %arg2[%c0_8, %c0_9, %c0_10, %c0_11] : memref<1x4x16x8xf32, #tpu.memory_space<vmem>>, vector<1x1x16x8xf32>
    %13 = vector.shape_cast %12 : vector<1x1x16x8xf32> to vector<16x8xf32>
    %14 = arith.truncf %13 : vector<16x8xf32> to vector<16x8xbf16>
    %c0_12 = arith.constant 0 : index
    %c0_13 = arith.constant 0 : index
    %c0_14 = arith.constant 0 : index
    %c0_15 = arith.constant 0 : index
    %15 = vector.load %arg3[%c0_12, %c0_13, %c0_14, %c0_15] : memref<1x4x16x8xf32, #tpu.memory_space<vmem>>, vector<1x1x16x8xf32>
    %16 = vector.shape_cast %15 : vector<1x1x16x8xf32> to vector<16x8xf32>
    %17 = arith.truncf %16 : vector<16x8xf32> to vector<16x8xbf16>
    %cst_16 = arith.constant dense<0.000000e+00> : vector<16x16xf32>
    %18 = tpu.matmul %11, %14, %cst_16 {dimension_numbers = #tpu.dot_dimension_numbers<[1], [1], [0], [0], [0, 0, 1, 0], [], []>} : vector<16x8xbf16>, vector<16x8xbf16>, vector<16x16xf32> -> vector<16x16xf32>
    %cst_17 = arith.constant 0.353553385 : f32
    %19 = vector.broadcast %cst_17 : f32 to vector<16x16xf32>
    %20 = arith.mulf %18, %19 : vector<16x16xf32>
    %21 = arith.addf %20, %5 : vector<16x16xf32>
    %22 = vector.broadcast %7 : vector<1x16xf32> to vector<16x16xf32>
    %23 = arith.addf %21, %22 : vector<16x16xf32>
    %cst_18 = arith.constant dense<0xFF800000> : vector<16xf32>
    %24 = vector.multi_reduction <maximumf>, %23, %cst_18 [1] : vector<16x16xf32> to vector<16xf32>
    %25 = vector.shape_cast %24 : vector<16xf32> to vector<16x1xf32>
    %26 = vector.broadcast %25 : vector<16x1xf32> to vector<16x16xf32>
    %27 = arith.subf %23, %26 : vector<16x16xf32>
    %28 = math.exp %27 : vector<16x16xf32>
    %cst_19 = arith.constant dense<0.000000e+00> : vector<16xf32>
    %29 = vector.multi_reduction <add>, %28, %cst_19 [1] : vector<16x16xf32> to vector<16xf32>
    %30 = vector.shape_cast %29 : vector<16xf32> to vector<16x1xf32>
    %31 = tpu.reciprocal %30 {approx = true} : vector<16x1xf32> -> vector<16x1xf32>
    %32 = vector.broadcast %31 : vector<16x1xf32> to vector<16x16xf32>
    %33 = arith.mulf %28, %32 : vector<16x16xf32>
    %34 = arith.truncf %33 : vector<16x16xf32> to vector<16x16xbf16>
    %cst_20 = arith.constant dense<0.000000e+00> : vector<16x8xf32>
    %35 = tpu.matmul %34, %17, %cst_20 {dimension_numbers = #tpu.dot_dimension_numbers<[1], [0], [0], [1], [0, 0, 1, 1], [], []>} : vector<16x16xbf16>, vector<16x8xbf16>, vector<16x8xf32> -> vector<16x8xf32>
    %36 = arith.truncf %35 : vector<16x8xf32> to vector<16x8xbf16>
    %c0_21 = arith.constant 0 : index
    %c0_22 = arith.constant 0 : index
    %c0_23 = arith.constant 0 : index
    %37 = vector.load %arg5[%c0_21, %c0_22, %c0_23] : memref<4x8x32xbf16, #tpu.memory_space<vmem>>, vector<1x8x32xbf16>
    %38 = vector.shape_cast %37 : vector<1x8x32xbf16> to vector<8x32xbf16>
    %cst_24 = arith.constant dense<0.000000e+00> : vector<16x32xf32>
    %39 = tpu.matmul %36, %38, %cst_24 {dimension_numbers = #tpu.dot_dimension_numbers<[1], [0], [0], [1], [0, 0, 1, 1], [], []>} : vector<16x8xbf16>, vector<8x32xbf16>, vector<16x32xf32> -> vector<16x32xf32>
    %40 = arith.addf %8, %39 : vector<16x32xf32>
    %c0_25 = arith.constant 0 : index
    %c1 = arith.constant 1 : index
    %c0_26 = arith.constant 0 : index
    %c0_27 = arith.constant 0 : index
    %41 = vector.load %arg1[%c0_25, %c1, %c0_26, %c0_27] : memref<1x4x16x8xf32, #tpu.memory_space<vmem>>, vector<1x1x16x8xf32>
    %42 = vector.shape_cast %41 : vector<1x1x16x8xf32> to vector<16x8xf32>
    %43 = arith.truncf %42 : vector<16x8xf32> to vector<16x8xbf16>
    %c0_28 = arith.constant 0 : index
    %c1_29 = arith.constant 1 : index
    %c0_30 = arith.constant 0 : index
    %c0_31 = arith.constant 0 : index
    %44 = vector.load %arg2[%c0_28, %c1_29, %c0_30, %c0_31] : memref<1x4x16x8xf32, #tpu.memory_space<vmem>>, vector<1x1x16x8xf32>
    %45 = vector.shape_cast %44 : vector<1x1x16x8xf32> to vector<16x8xf32>
    %46 = arith.truncf %45 : vector<16x8xf32> to vector<16x8xbf16>
    %c0_32 = arith.constant 0 : index
    %c1_33 = arith.constant 1 : index
    %c0_34 = arith.constant 0 : index
    %c0_35 = arith.constant 0 : index
    %47 = vector.load %arg3[%c0_32, %c1_33, %c0_34, %c0_35] : memref<1x4x16x8xf32, #tpu.memory_space<vmem>>, vector<1x1x16x8xf32>
    %48 = vector.shape_cast %47 : vector<1x1x16x8xf32> to vector<16x8xf32>
    %49 = arith.truncf %48 : vector<16x8xf32> to vector<16x8xbf16>
    %cst_36 = arith.constant dense<0.000000e+00> : vector<16x16xf32>
    %50 = tpu.matmul %43, %46, %cst_36 {dimension_numbers = #tpu.dot_dimension_numbers<[1], [1], [0], [0], [0, 0, 1, 0], [], []>} : vector<16x8xbf16>, vector<16x8xbf16>, vector<16x16xf32> -> vector<16x16xf32>
    %cst_37 = arith.constant 0.353553385 : f32
    %51 = vector.broadcast %cst_37 : f32 to vector<16x16xf32>
    %52 = arith.mulf %50, %51 : vector<16x16xf32>
    %53 = arith.addf %52, %5 : vector<16x16xf32>
    %54 = vector.broadcast %7 : vector<1x16xf32> to vector<16x16xf32>
    %55 = arith.addf %53, %54 : vector<16x16xf32>
    %cst_38 = arith.constant dense<0xFF800000> : vector<16xf32>
    %56 = vector.multi_reduction <maximumf>, %55, %cst_38 [1] : vector<16x16xf32> to vector<16xf32>
    %57 = vector.shape_cast %56 : vector<16xf32> to vector<16x1xf32>
    %58 = vector.broadcast %57 : vector<16x1xf32> to vector<16x16xf32>
    %59 = arith.subf %55, %58 : vector<16x16xf32>
    %60 = math.exp %59 : vector<16x16xf32>
    %cst_39 = arith.constant dense<0.000000e+00> : vector<16xf32>
    %61 = vector.multi_reduction <add>, %60, %cst_39 [1] : vector<16x16xf32> to vector<16xf32>
    %62 = vector.shape_cast %61 : vector<16xf32> to vector<16x1xf32>
    %63 = tpu.reciprocal %62 {approx = true} : vector<16x1xf32> -> vector<16x1xf32>
    %64 = vector.broadcast %63 : vector<16x1xf32> to vector<16x16xf32>
    %65 = arith.mulf %60, %64 : vector<16x16xf32>
    %66 = arith.truncf %65 : vector<16x16xf32> to vector<16x16xbf16>
    %cst_40 = arith.constant dense<0.000000e+00> : vector<16x8xf32>
    %67 = tpu.matmul %66, %49, %cst_40 {dimension_numbers = #tpu.dot_dimension_numbers<[1], [0], [0], [1], [0, 0, 1, 1], [], []>} : vector<16x16xbf16>, vector<16x8xbf16>, vector<16x8xf32> -> vector<16x8xf32>
    %68 = arith.truncf %67 : vector<16x8xf32> to vector<16x8xbf16>
    %c1_41 = arith.constant 1 : index
    %c0_42 = arith.constant 0 : index
    %c0_43 = arith.constant 0 : index
    %69 = vector.load %arg5[%c1_41, %c0_42, %c0_43] : memref<4x8x32xbf16, #tpu.memory_space<vmem>>, vector<1x8x32xbf16>
    %70 = vector.shape_cast %69 : vector<1x8x32xbf16> to vector<8x32xbf16>
    %cst_44 = arith.constant dense<0.000000e+00> : vector<16x32xf32>
    %71 = tpu.matmul %68, %70, %cst_44 {dimension_numbers = #tpu.dot_dimension_numbers<[1], [0], [0], [1], [0, 0, 1, 1], [], []>} : vector<16x8xbf16>, vector<8x32xbf16>, vector<16x32xf32> -> vector<16x32xf32>
    %72 = arith.addf %40, %71 : vector<16x32xf32>
    %c0_45 = arith.constant 0 : index
    %c2 = arith.constant 2 : index
    %c0_46 = arith.constant 0 : index
    %c0_47 = arith.constant 0 : index
    %73 = vector.load %arg1[%c0_45, %c2, %c0_46, %c0_47] : memref<1x4x16x8xf32, #tpu.memory_space<vmem>>, vector<1x1x16x8xf32>
    %74 = vector.shape_cast %73 : vector<1x1x16x8xf32> to vector<16x8xf32>
    %75 = arith.truncf %74 : vector<16x8xf32> to vector<16x8xbf16>
    %c0_48 = arith.constant 0 : index
    %c2_49 = arith.constant 2 : index
    %c0_50 = arith.constant 0 : index
    %c0_51 = arith.constant 0 : index
    %76 = vector.load %arg2[%c0_48, %c2_49, %c0_50, %c0_51] : memref<1x4x16x8xf32, #tpu.memory_space<vmem>>, vector<1x1x16x8xf32>
    %77 = vector.shape_cast %76 : vector<1x1x16x8xf32> to vector<16x8xf32>
    %78 = arith.truncf %77 : vector<16x8xf32> to vector<16x8xbf16>
    %c0_52 = arith.constant 0 : index
    %c2_53 = arith.constant 2 : index
    %c0_54 = arith.constant 0 : index
    %c0_55 = arith.constant 0 : index
    %79 = vector.load %arg3[%c0_52, %c2_53, %c0_54, %c0_55] : memref<1x4x16x8xf32, #tpu.memory_space<vmem>>, vector<1x1x16x8xf32>
    %80 = vector.shape_cast %79 : vector<1x1x16x8xf32> to vector<16x8xf32>
    %81 = arith.truncf %80 : vector<16x8xf32> to vector<16x8xbf16>
    %cst_56 = arith.constant dense<0.000000e+00> : vector<16x16xf32>
    %82 = tpu.matmul %75, %78, %cst_56 {dimension_numbers = #tpu.dot_dimension_numbers<[1], [1], [0], [0], [0, 0, 1, 0], [], []>} : vector<16x8xbf16>, vector<16x8xbf16>, vector<16x16xf32> -> vector<16x16xf32>
    %cst_57 = arith.constant 0.353553385 : f32
    %83 = vector.broadcast %cst_57 : f32 to vector<16x16xf32>
    %84 = arith.mulf %82, %83 : vector<16x16xf32>
    %85 = arith.addf %84, %5 : vector<16x16xf32>
    %86 = vector.broadcast %7 : vector<1x16xf32> to vector<16x16xf32>
    %87 = arith.addf %85, %86 : vector<16x16xf32>
    %cst_58 = arith.constant dense<0xFF800000> : vector<16xf32>
    %88 = vector.multi_reduction <maximumf>, %87, %cst_58 [1] : vector<16x16xf32> to vector<16xf32>
    %89 = vector.shape_cast %88 : vector<16xf32> to vector<16x1xf32>
    %90 = vector.broadcast %89 : vector<16x1xf32> to vector<16x16xf32>
    %91 = arith.subf %87, %90 : vector<16x16xf32>
    %92 = math.exp %91 : vector<16x16xf32>
    %cst_59 = arith.constant dense<0.000000e+00> : vector<16xf32>
    %93 = vector.multi_reduction <add>, %92, %cst_59 [1] : vector<16x16xf32> to vector<16xf32>
    %94 = vector.shape_cast %93 : vector<16xf32> to vector<16x1xf32>
    %95 = tpu.reciprocal %94 {approx = true} : vector<16x1xf32> -> vector<16x1xf32>
    %96 = vector.broadcast %95 : vector<16x1xf32> to vector<16x16xf32>
    %97 = arith.mulf %92, %96 : vector<16x16xf32>
    %98 = arith.truncf %97 : vector<16x16xf32> to vector<16x16xbf16>
    %cst_60 = arith.constant dense<0.000000e+00> : vector<16x8xf32>
    %99 = tpu.matmul %98, %81, %cst_60 {dimension_numbers = #tpu.dot_dimension_numbers<[1], [0], [0], [1], [0, 0, 1, 1], [], []>} : vector<16x16xbf16>, vector<16x8xbf16>, vector<16x8xf32> -> vector<16x8xf32>
    %100 = arith.truncf %99 : vector<16x8xf32> to vector<16x8xbf16>
    %c2_61 = arith.constant 2 : index
    %c0_62 = arith.constant 0 : index
    %c0_63 = arith.constant 0 : index
    %101 = vector.load %arg5[%c2_61, %c0_62, %c0_63] : memref<4x8x32xbf16, #tpu.memory_space<vmem>>, vector<1x8x32xbf16>
    %102 = vector.shape_cast %101 : vector<1x8x32xbf16> to vector<8x32xbf16>
    %cst_64 = arith.constant dense<0.000000e+00> : vector<16x32xf32>
    %103 = tpu.matmul %100, %102, %cst_64 {dimension_numbers = #tpu.dot_dimension_numbers<[1], [0], [0], [1], [0, 0, 1, 1], [], []>} : vector<16x8xbf16>, vector<8x32xbf16>, vector<16x32xf32> -> vector<16x32xf32>
    %104 = arith.addf %72, %103 : vector<16x32xf32>
    %c0_65 = arith.constant 0 : index
    %c3 = arith.constant 3 : index
    %c0_66 = arith.constant 0 : index
    %c0_67 = arith.constant 0 : index
    %105 = vector.load %arg1[%c0_65, %c3, %c0_66, %c0_67] : memref<1x4x16x8xf32, #tpu.memory_space<vmem>>, vector<1x1x16x8xf32>
    %106 = vector.shape_cast %105 : vector<1x1x16x8xf32> to vector<16x8xf32>
    %107 = arith.truncf %106 : vector<16x8xf32> to vector<16x8xbf16>
    %c0_68 = arith.constant 0 : index
    %c3_69 = arith.constant 3 : index
    %c0_70 = arith.constant 0 : index
    %c0_71 = arith.constant 0 : index
    %108 = vector.load %arg2[%c0_68, %c3_69, %c0_70, %c0_71] : memref<1x4x16x8xf32, #tpu.memory_space<vmem>>, vector<1x1x16x8xf32>
    %109 = vector.shape_cast %108 : vector<1x1x16x8xf32> to vector<16x8xf32>
    %110 = arith.truncf %109 : vector<16x8xf32> to vector<16x8xbf16>
    %c0_72 = arith.constant 0 : index
    %c3_73 = arith.constant 3 : index
    %c0_74 = arith.constant 0 : index
    %c0_75 = arith.constant 0 : index
    %111 = vector.load %arg3[%c0_72, %c3_73, %c0_74, %c0_75] : memref<1x4x16x8xf32, #tpu.memory_space<vmem>>, vector<1x1x16x8xf32>
    %112 = vector.shape_cast %111 : vector<1x1x16x8xf32> to vector<16x8xf32>
    %113 = arith.truncf %112 : vector<16x8xf32> to vector<16x8xbf16>
    %cst_76 = arith.constant dense<0.000000e+00> : vector<16x16xf32>
    %114 = tpu.matmul %107, %110, %cst_76 {dimension_numbers = #tpu.dot_dimension_numbers<[1], [1], [0], [0], [0, 0, 1, 0], [], []>} : vector<16x8xbf16>, vector<16x8xbf16>, vector<16x16xf32> -> vector<16x16xf32>
    %cst_77 = arith.constant 0.353553385 : f32
    %115 = vector.broadcast %cst_77 : f32 to vector<16x16xf32>
    %116 = arith.mulf %114, %115 : vector<16x16xf32>
    %117 = arith.addf %116, %5 : vector<16x16xf32>
    %118 = vector.broadcast %7 : vector<1x16xf32> to vector<16x16xf32>
    %119 = arith.addf %117, %118 : vector<16x16xf32>
    %cst_78 = arith.constant dense<0xFF800000> : vector<16xf32>
    %120 = vector.multi_reduction <maximumf>, %119, %cst_78 [1] : vector<16x16xf32> to vector<16xf32>
    %121 = vector.shape_cast %120 : vector<16xf32> to vector<16x1xf32>
    %122 = vector.broadcast %121 : vector<16x1xf32> to vector<16x16xf32>
    %123 = arith.subf %119, %122 : vector<16x16xf32>
    %124 = math.exp %123 : vector<16x16xf32>
    %cst_79 = arith.constant dense<0.000000e+00> : vector<16xf32>
    %125 = vector.multi_reduction <add>, %124, %cst_79 [1] : vector<16x16xf32> to vector<16xf32>
    %126 = vector.shape_cast %125 : vector<16xf32> to vector<16x1xf32>
    %127 = tpu.reciprocal %126 {approx = true} : vector<16x1xf32> -> vector<16x1xf32>
    %128 = vector.broadcast %127 : vector<16x1xf32> to vector<16x16xf32>
    %129 = arith.mulf %124, %128 : vector<16x16xf32>
    %130 = arith.truncf %129 : vector<16x16xf32> to vector<16x16xbf16>
    %cst_80 = arith.constant dense<0.000000e+00> : vector<16x8xf32>
    %131 = tpu.matmul %130, %113, %cst_80 {dimension_numbers = #tpu.dot_dimension_numbers<[1], [0], [0], [1], [0, 0, 1, 1], [], []>} : vector<16x16xbf16>, vector<16x8xbf16>, vector<16x8xf32> -> vector<16x8xf32>
    %132 = arith.truncf %131 : vector<16x8xf32> to vector<16x8xbf16>
    %c3_81 = arith.constant 3 : index
    %c0_82 = arith.constant 0 : index
    %c0_83 = arith.constant 0 : index
    %133 = vector.load %arg5[%c3_81, %c0_82, %c0_83] : memref<4x8x32xbf16, #tpu.memory_space<vmem>>, vector<1x8x32xbf16>
    %134 = vector.shape_cast %133 : vector<1x8x32xbf16> to vector<8x32xbf16>
    %cst_84 = arith.constant dense<0.000000e+00> : vector<16x32xf32>
    %135 = tpu.matmul %132, %134, %cst_84 {dimension_numbers = #tpu.dot_dimension_numbers<[1], [0], [0], [1], [0, 0, 1, 1], [], []>} : vector<16x8xbf16>, vector<8x32xbf16>, vector<16x32xf32> -> vector<16x32xf32>
    %136 = arith.addf %104, %135 : vector<16x32xf32>
    %c0_85 = arith.constant 0 : index
    %c0_86 = arith.constant 0 : index
    %137 = vector.load %arg6[%c0_85, %c0_86] : memref<1x32xf32, #tpu.memory_space<vmem>>, vector<1x32xf32>
    %138 = vector.broadcast %137 : vector<1x32xf32> to vector<16x32xf32>
    %139 = arith.addf %136, %138 : vector<16x32xf32>
    %c0_87 = arith.constant 0 : index
    %c0_88 = arith.constant 0 : index
    %c0_89 = arith.constant 0 : index
    %140 = vector.load %arg7[%c0_87, %c0_88, %c0_89] : memref<1x16x32xf32, #tpu.memory_space<vmem>>, vector<1x16x32xf32>
    %141 = vector.shape_cast %140 : vector<1x16x32xf32> to vector<16x32xf32>
    %142 = arith.addf %139, %141 : vector<16x32xf32>
    %cst_90 = arith.constant dense<0.000000e+00> : vector<16xf32>
    %143 = vector.multi_reduction <add>, %142, %cst_90 [1] : vector<16x32xf32> to vector<16xf32>
    %144 = vector.shape_cast %143 : vector<16xf32> to vector<16x1xf32>
    %cst_91 = arith.constant 3.200000e+01 : f32
    %145 = vector.broadcast %cst_91 : f32 to vector<16x1xf32>
    %146 = arith.divf %144, %145 : vector<16x1xf32>
    %147 = vector.broadcast %146 : vector<16x1xf32> to vector<16x32xf32>
    %148 = arith.subf %142, %147 : vector<16x32xf32>
    %149 = arith.mulf %148, %148 : vector<16x32xf32>
    %cst_92 = arith.constant dense<0.000000e+00> : vector<16xf32>
    %150 = vector.multi_reduction <add>, %149, %cst_92 [1] : vector<16x32xf32> to vector<16xf32>
    %151 = vector.shape_cast %150 : vector<16xf32> to vector<16x1xf32>
    %cst_93 = arith.constant 3.200000e+01 : f32
    %152 = vector.broadcast %cst_93 : f32 to vector<16x1xf32>
    %153 = arith.divf %151, %152 : vector<16x1xf32>
    %154 = vector.broadcast %146 : vector<16x1xf32> to vector<16x32xf32>
    %155 = arith.subf %142, %154 : vector<16x32xf32>
    %cst_94 = arith.constant 9.99999974E-6 : f32
    %156 = vector.broadcast %cst_94 : f32 to vector<16x1xf32>
    %157 = arith.addf %153, %156 : vector<16x1xf32>
    %158 = math.rsqrt %157 : vector<16x1xf32>
    %159 = vector.broadcast %158 : vector<16x1xf32> to vector<16x32xf32>
    %160 = arith.mulf %155, %159 : vector<16x32xf32>
    %c0_95 = arith.constant 0 : index
    %c0_96 = arith.constant 0 : index
    %161 = vector.load %arg8[%c0_95, %c0_96] : memref<1x32xf32, #tpu.memory_space<vmem>>, vector<1x32xf32>
    %162 = vector.broadcast %161 : vector<1x32xf32> to vector<16x32xf32>
    %163 = arith.mulf %160, %162 : vector<16x32xf32>
    %c0_97 = arith.constant 0 : index
    %c0_98 = arith.constant 0 : index
    %164 = vector.load %arg9[%c0_97, %c0_98] : memref<1x32xf32, #tpu.memory_space<vmem>>, vector<1x32xf32>
    %165 = vector.broadcast %164 : vector<1x32xf32> to vector<16x32xf32>
    %166 = arith.addf %163, %165 : vector<16x32xf32>
    %c0_99 = arith.constant 0 : index
    %c0_100 = arith.constant 0 : index
    %c0_101 = arith.constant 0 : index
    %167 = vector.load %arg10[%c0_99, %c0_100, %c0_101] : memref<1x16x32xf32, #tpu.memory_space<vmem>>, vector<1x16x32xf32>
    %168 = vector.shape_cast %167 : vector<1x16x32xf32> to vector<16x32xf32>
    %169 = vector.shape_cast %166 : vector<16x32xf32> to vector<1x16x32xf32>
    tpu.vector_store %arg10[%c0_99, %c0_100, %c0_101], %169 {strides = array<i32>} : memref<1x16x32xf32, #tpu.memory_space<vmem>>, vector<1x16x32xf32>,
    return
  }
  func.func @transform_0(%arg0: i32) -> (i32, i32, i32, i32) {
    %c0_i32 = arith.constant 0 : i32
    %c0_i32_0 = arith.constant 0 : i32
    %c0_i32_1 = arith.constant 0 : i32
    %c0_i32_2 = arith.constant 0 : i32
    return %arg0, %c0_i32, %c0_i32_0, %c0_i32_1 : i32, i32, i32, i32
  }
  func.func @transform_1(%arg0: i32) -> (i32, i32, i32, i32) {
    %c0_i32 = arith.constant 0 : i32
    %c0_i32_0 = arith.constant 0 : i32
    %c0_i32_1 = arith.constant 0 : i32
    %c0_i32_2 = arith.constant 0 : i32
    return %arg0, %c0_i32, %c0_i32_0, %c0_i32_1 : i32, i32, i32, i32
  }
  func.func @transform_2(%arg0: i32) -> (i32, i32, i32, i32) {
    %c0_i32 = arith.constant 0 : i32
    %c0_i32_0 = arith.constant 0 : i32
    %c0_i32_1 = arith.constant 0 : i32
    %c0_i32_2 = arith.constant 0 : i32
    return %arg0, %c0_i32, %c0_i32_0, %c0_i32_1 : i32, i32, i32, i32
  }
  func.func @transform_3(%arg0: i32) -> (i32, i32, i32) {
    %c0_i32 = arith.constant 0 : i32
    %c0_i32_0 = arith.constant 0 : i32
    %c0_i32_1 = arith.constant 0 : i32
    return %arg0, %c0_i32, %c0_i32_0 : i32, i32, i32
  }
  func.func @transform_4(%arg0: i32) -> (i32, i32, i32) {
    %c0_i32 = arith.constant 0 : i32
    %c0_i32_0 = arith.constant 0 : i32
    %c0_i32_1 = arith.constant 0 : i32
    %c0_i32_2 = arith.constant 0 : i32
    return %c0_i32, %c0_i32_0, %c0_i32_1 : i32, i32, i32
  }
  func.func @transform_5(%arg0: i32) -> (i32, i32) {
    %c0_i32 = arith.constant 0 : i32
    %c0_i32_0 = arith.constant 0 : i32
    %c0_i32_1 = arith.constant 0 : i32
    return %c0_i32, %c0_i32_0 : i32, i32
  }
  func.func @transform_6(%arg0: i32) -> (i32, i32, i32) {
    %c0_i32 = arith.constant 0 : i32
    %c0_i32_0 = arith.constant 0 : i32
    %c0_i32_1 = arith.constant 0 : i32
    return %arg0, %c0_i32, %c0_i32_0 : i32, i32, i32
  }
  func.func @transform_7(%arg0: i32) -> (i32, i32) {
    %c0_i32 = arith.constant 0 : i32
    %c0_i32_0 = arith.constant 0 : i32
    %c0_i32_1 = arith.constant 0 : i32
    return %c0_i32, %c0_i32_0 : i32, i32
  }
  func.func @transform_8(%arg0: i32) -> (i32, i32) {
    %c0_i32 = arith.constant 0 : i32
    %c0_i32_0 = arith.constant 0 : i32
    %c0_i32_1 = arith.constant 0 : i32
    return %c0_i32, %c0_i32_0 : i32, i32
  }
  func.func @transform_9(%arg0: i32) -> (i32, i32, i32) {
    %c0_i32 = arith.constant 0 : i32
    %c0_i32_0 = arith.constant 0 : i32
    %c0_i32_1 = arith.constant 0 : i32
    return %arg0, %c0_i32, %c0_i32_0 : i32, i32, i32
  }
}

module attributes {stable_mosaic.version = 11 : i64} {
  func.func @_mm_bias_kernel(%arg0: i32, %arg1: i32, %arg2: memref<20x32xf32, #tpu.memory_space<vmem>>, %arg3: memref<32x64xbf16, #tpu.memory_space<vmem>>, %arg4: memref<1x64xf32, #tpu.memory_space<vmem>>, %arg5: memref<20x64xf32, #tpu.memory_space<vmem>>) attributes {dimension_semantics = [#tpu.dimension_semantics<parallel>, #tpu.dimension_semantics<parallel>], iteration_bounds = array<i64: 1, 1>, scalar_prefetch = 0 : i64, scratch_operands = 0 : i64, tpu.core_type = #tpu.core_type<tc>, window_params = [{transform_indices = @transform_0, window_bounds = array<i64: 20, 32>}, {transform_indices = @transform_1, window_bounds = array<i64: 32, 64>}, {transform_indices = @transform_2, window_bounds = array<i64: 1, 64>}, {transform_indices = @transform_3, window_bounds = array<i64: 20, 64>}]} {
    %c0 = arith.constant 0 : index
    %c0_0 = arith.constant 0 : index
    %0 = vector.load %arg2[%c0, %c0_0] : memref<20x32xf32, #tpu.memory_space<vmem>>, vector<20x32xf32>
    %1 = arith.truncf %0 : vector<20x32xf32> to vector<20x32xbf16>
    %c0_1 = arith.constant 0 : index
    %c0_2 = arith.constant 0 : index
    %2 = vector.load %arg3[%c0_1, %c0_2] : memref<32x64xbf16, #tpu.memory_space<vmem>>, vector<32x64xbf16>
    %cst = arith.constant dense<0.000000e+00> : vector<20x64xf32>
    %3 = tpu.matmul %1, %2, %cst {dimension_numbers = #tpu.dot_dimension_numbers<[1], [0], [0], [1], [0, 0, 1, 1], [], []>} : vector<20x32xbf16>, vector<32x64xbf16>, vector<20x64xf32> -> vector<20x64xf32>
    %c0_3 = arith.constant 0 : index
    %c0_4 = arith.constant 0 : index
    %4 = vector.load %arg4[%c0_3, %c0_4] : memref<1x64xf32, #tpu.memory_space<vmem>>, vector<1x64xf32>
    %5 = vector.broadcast %4 : vector<1x64xf32> to vector<20x64xf32>
    %6 = arith.addf %3, %5 : vector<20x64xf32>
    %c0_5 = arith.constant 0 : index
    %c0_6 = arith.constant 0 : index
    %7 = vector.load %arg5[%c0_5, %c0_6] : memref<20x64xf32, #tpu.memory_space<vmem>>, vector<20x64xf32>
    tpu.vector_store %arg5[%c0_5, %c0_6], %6 {strides = array<i32>} : memref<20x64xf32, #tpu.memory_space<vmem>>, vector<20x64xf32>,
    return
  }
  func.func @transform_0(%arg0: i32, %arg1: i32) -> (i32, i32) {
    %c0_i32 = arith.constant 0 : i32
    %c0_i32_0 = arith.constant 0 : i32
    return %arg0, %c0_i32 : i32, i32
  }
  func.func @transform_1(%arg0: i32, %arg1: i32) -> (i32, i32) {
    %c0_i32 = arith.constant 0 : i32
    %c0_i32_0 = arith.constant 0 : i32
    return %c0_i32, %arg1 : i32, i32
  }
  func.func @transform_2(%arg0: i32, %arg1: i32) -> (i32, i32) {
    %c0_i32 = arith.constant 0 : i32
    %c0_i32_0 = arith.constant 0 : i32
    return %c0_i32, %arg1 : i32, i32
  }
  func.func @transform_3(%arg0: i32, %arg1: i32) -> (i32, i32) {
    %c0_i32 = arith.constant 0 : i32
    return %arg0, %arg1 : i32, i32
  }
}

module attributes {stable_mosaic.version = 11 : i64} {
  func.func @_mm_bias_kernel(%arg0: i32, %arg1: i32, %arg2: memref<32x32xf32, #tpu.memory_space<vmem>>, %arg3: memref<32x512xbf16, #tpu.memory_space<vmem>>, %arg4: memref<1x512xf32, #tpu.memory_space<vmem>>, %arg5: memref<32x512xf32, #tpu.memory_space<vmem>>) attributes {dimension_semantics = [#tpu.dimension_semantics<parallel>, #tpu.dimension_semantics<parallel>], iteration_bounds = array<i64: 1, 4>, scalar_prefetch = 0 : i64, scratch_operands = 0 : i64, tpu.core_type = #tpu.core_type<tc>, window_params = [{transform_indices = @transform_0, window_bounds = array<i64: 32, 32>}, {transform_indices = @transform_1, window_bounds = array<i64: 32, 512>}, {transform_indices = @transform_2, window_bounds = array<i64: 1, 512>}, {transform_indices = @transform_3, window_bounds = array<i64: 32, 512>}]} {
    %c0 = arith.constant 0 : index
    %c0_0 = arith.constant 0 : index
    %0 = vector.load %arg2[%c0, %c0_0] : memref<32x32xf32, #tpu.memory_space<vmem>>, vector<32x32xf32>
    %1 = arith.truncf %0 : vector<32x32xf32> to vector<32x32xbf16>
    %c0_1 = arith.constant 0 : index
    %c0_2 = arith.constant 0 : index
    %2 = vector.load %arg3[%c0_1, %c0_2] : memref<32x512xbf16, #tpu.memory_space<vmem>>, vector<32x512xbf16>
    %cst = arith.constant dense<0.000000e+00> : vector<32x512xf32>
    %3 = tpu.matmul %1, %2, %cst {dimension_numbers = #tpu.dot_dimension_numbers<[1], [0], [0], [1], [0, 0, 1, 1], [], []>} : vector<32x32xbf16>, vector<32x512xbf16>, vector<32x512xf32> -> vector<32x512xf32>
    %c0_3 = arith.constant 0 : index
    %c0_4 = arith.constant 0 : index
    %4 = vector.load %arg4[%c0_3, %c0_4] : memref<1x512xf32, #tpu.memory_space<vmem>>, vector<1x512xf32>
    %5 = vector.broadcast %4 : vector<1x512xf32> to vector<32x512xf32>
    %6 = arith.addf %3, %5 : vector<32x512xf32>
    %cst_5 = arith.constant 0.000000e+00 : f32
    %7 = vector.broadcast %cst_5 : f32 to vector<32x512xf32>
    %8 = arith.maximumf %6, %7 : vector<32x512xf32>
    %c0_6 = arith.constant 0 : index
    %c0_7 = arith.constant 0 : index
    %9 = vector.load %arg5[%c0_6, %c0_7] : memref<32x512xf32, #tpu.memory_space<vmem>>, vector<32x512xf32>
    tpu.vector_store %arg5[%c0_6, %c0_7], %8 {strides = array<i32>} : memref<32x512xf32, #tpu.memory_space<vmem>>, vector<32x512xf32>,
    return
  }
  func.func @transform_0(%arg0: i32, %arg1: i32) -> (i32, i32) {
    %c0_i32 = arith.constant 0 : i32
    %c0_i32_0 = arith.constant 0 : i32
    return %arg0, %c0_i32 : i32, i32
  }
  func.func @transform_1(%arg0: i32, %arg1: i32) -> (i32, i32) {
    %c0_i32 = arith.constant 0 : i32
    %c0_i32_0 = arith.constant 0 : i32
    return %c0_i32, %arg1 : i32, i32
  }
  func.func @transform_2(%arg0: i32, %arg1: i32) -> (i32, i32) {
    %c0_i32 = arith.constant 0 : i32
    %c0_i32_0 = arith.constant 0 : i32
    return %c0_i32, %arg1 : i32, i32
  }
  func.func @transform_3(%arg0: i32, %arg1: i32) -> (i32, i32) {
    %c0_i32 = arith.constant 0 : i32
    return %arg0, %arg1 : i32, i32
  }
}

module attributes {stable_mosaic.version = 11 : i64} {
  func.func @_attn_fused_kernel(%arg0: i32, %arg1: memref<1x4x16x8xf32, #tpu.memory_space<vmem>>, %arg2: memref<1x4x10x8xf32, #tpu.memory_space<vmem>>, %arg3: memref<1x4x10x8xf32, #tpu.memory_space<vmem>>, %arg4: memref<4x8x32xbf16, #tpu.memory_space<vmem>>, %arg5: memref<1x32xf32, #tpu.memory_space<vmem>>, %arg6: memref<1x16x32xf32, #tpu.memory_space<vmem>>, %arg7: memref<1x32xf32, #tpu.memory_space<vmem>>, %arg8: memref<1x32xf32, #tpu.memory_space<vmem>>, %arg9: memref<1x16x32xf32, #tpu.memory_space<vmem>>) attributes {dimension_semantics = [#tpu.dimension_semantics<parallel>], iteration_bounds = array<i64: 2>, scalar_prefetch = 0 : i64, scratch_operands = 0 : i64, tpu.core_type = #tpu.core_type<tc>, window_params = [{transform_indices = @transform_0, window_bounds = array<i64: 1, 4, 16, 8>}, {transform_indices = @transform_1, window_bounds = array<i64: 1, 4, 10, 8>}, {transform_indices = @transform_2, window_bounds = array<i64: 1, 4, 10, 8>}, {pipeline_mode = #tpu.pipeline_mode<synchronous>, transform_indices = @transform_3, window_bounds = array<i64: 4, 8, 32>}, {pipeline_mode = #tpu.pipeline_mode<synchronous>, transform_indices = @transform_4, window_bounds = array<i64: 1, 32>}, {transform_indices = @transform_5, window_bounds = array<i64: 1, 16, 32>}, {pipeline_mode = #tpu.pipeline_mode<synchronous>, transform_indices = @transform_6, window_bounds = array<i64: 1, 32>}, {pipeline_mode = #tpu.pipeline_mode<synchronous>, transform_indices = @transform_7, window_bounds = array<i64: 1, 32>}, {transform_indices = @transform_8, window_bounds = array<i64: 1, 16, 32>}]} {
    %cst = arith.constant 0.000000e+00 : f32
    %0 = vector.broadcast %cst : f32 to vector<16x32xf32>
    %c0 = arith.constant 0 : index
    %c0_0 = arith.constant 0 : index
    %c0_1 = arith.constant 0 : index
    %c0_2 = arith.constant 0 : index
    %1 = vector.load %arg1[%c0, %c0_0, %c0_1, %c0_2] : memref<1x4x16x8xf32, #tpu.memory_space<vmem>>, vector<1x1x16x8xf32>
    %2 = vector.shape_cast %1 : vector<1x1x16x8xf32> to vector<16x8xf32>
    %3 = arith.truncf %2 : vector<16x8xf32> to vector<16x8xbf16>
    %c0_3 = arith.constant 0 : index
    %c0_4 = arith.constant 0 : index
    %c0_5 = arith.constant 0 : index
    %c0_6 = arith.constant 0 : index
    %4 = vector.load %arg2[%c0_3, %c0_4, %c0_5, %c0_6] : memref<1x4x10x8xf32, #tpu.memory_space<vmem>>, vector<1x1x10x8xf32>
    %5 = vector.shape_cast %4 : vector<1x1x10x8xf32> to vector<10x8xf32>
    %6 = arith.truncf %5 : vector<10x8xf32> to vector<10x8xbf16>
    %c0_7 = arith.constant 0 : index
    %c0_8 = arith.constant 0 : index
    %c0_9 = arith.constant 0 : index
    %c0_10 = arith.constant 0 : index
    %7 = vector.load %arg3[%c0_7, %c0_8, %c0_9, %c0_10] : memref<1x4x10x8xf32, #tpu.memory_space<vmem>>, vector<1x1x10x8xf32>
    %8 = vector.shape_cast %7 : vector<1x1x10x8xf32> to vector<10x8xf32>
    %9 = arith.truncf %8 : vector<10x8xf32> to vector<10x8xbf16>
    %cst_11 = arith.constant dense<0.000000e+00> : vector<16x10xf32>
    %10 = tpu.matmul %3, %6, %cst_11 {dimension_numbers = #tpu.dot_dimension_numbers<[1], [1], [0], [0], [0, 0, 1, 0], [], []>} : vector<16x8xbf16>, vector<10x8xbf16>, vector<16x10xf32> -> vector<16x10xf32>
    %cst_12 = arith.constant 0.353553385 : f32
    %11 = vector.broadcast %cst_12 : f32 to vector<16x10xf32>
    %12 = arith.mulf %10, %11 : vector<16x10xf32>
    %cst_13 = arith.constant dense<0xFF800000> : vector<16xf32>
    %13 = vector.multi_reduction <maximumf>, %12, %cst_13 [1] : vector<16x10xf32> to vector<16xf32>
    %14 = vector.shape_cast %13 : vector<16xf32> to vector<16x1xf32>
    %15 = vector.broadcast %14 : vector<16x1xf32> to vector<16x10xf32>
    %16 = arith.subf %12, %15 : vector<16x10xf32>
    %17 = math.exp %16 : vector<16x10xf32>
    %cst_14 = arith.constant dense<0.000000e+00> : vector<16xf32>
    %18 = vector.multi_reduction <add>, %17, %cst_14 [1] : vector<16x10xf32> to vector<16xf32>
    %19 = vector.shape_cast %18 : vector<16xf32> to vector<16x1xf32>
    %20 = tpu.reciprocal %19 {approx = true} : vector<16x1xf32> -> vector<16x1xf32>
    %21 = vector.broadcast %20 : vector<16x1xf32> to vector<16x10xf32>
    %22 = arith.mulf %17, %21 : vector<16x10xf32>
    %23 = arith.truncf %22 : vector<16x10xf32> to vector<16x10xbf16>
    %cst_15 = arith.constant dense<0.000000e+00> : vector<16x8xf32>
    %24 = tpu.matmul %23, %9, %cst_15 {dimension_numbers = #tpu.dot_dimension_numbers<[1], [0], [0], [1], [0, 0, 1, 1], [], []>} : vector<16x10xbf16>, vector<10x8xbf16>, vector<16x8xf32> -> vector<16x8xf32>
    %25 = arith.truncf %24 : vector<16x8xf32> to vector<16x8xbf16>
    %c0_16 = arith.constant 0 : index
    %c0_17 = arith.constant 0 : index
    %c0_18 = arith.constant 0 : index
    %26 = vector.load %arg4[%c0_16, %c0_17, %c0_18] : memref<4x8x32xbf16, #tpu.memory_space<vmem>>, vector<1x8x32xbf16>
    %27 = vector.shape_cast %26 : vector<1x8x32xbf16> to vector<8x32xbf16>
    %cst_19 = arith.constant dense<0.000000e+00> : vector<16x32xf32>
    %28 = tpu.matmul %25, %27, %cst_19 {dimension_numbers = #tpu.dot_dimension_numbers<[1], [0], [0], [1], [0, 0, 1, 1], [], []>} : vector<16x8xbf16>, vector<8x32xbf16>, vector<16x32xf32> -> vector<16x32xf32>
    %29 = arith.addf %0, %28 : vector<16x32xf32>
    %c0_20 = arith.constant 0 : index
    %c1 = arith.constant 1 : index
    %c0_21 = arith.constant 0 : index
    %c0_22 = arith.constant 0 : index
    %30 = vector.load %arg1[%c0_20, %c1, %c0_21, %c0_22] : memref<1x4x16x8xf32, #tpu.memory_space<vmem>>, vector<1x1x16x8xf32>
    %31 = vector.shape_cast %30 : vector<1x1x16x8xf32> to vector<16x8xf32>
    %32 = arith.truncf %31 : vector<16x8xf32> to vector<16x8xbf16>
    %c0_23 = arith.constant 0 : index
    %c1_24 = arith.constant 1 : index
    %c0_25 = arith.constant 0 : index
    %c0_26 = arith.constant 0 : index
    %33 = vector.load %arg2[%c0_23, %c1_24, %c0_25, %c0_26] : memref<1x4x10x8xf32, #tpu.memory_space<vmem>>, vector<1x1x10x8xf32>
    %34 = vector.shape_cast %33 : vector<1x1x10x8xf32> to vector<10x8xf32>
    %35 = arith.truncf %34 : vector<10x8xf32> to vector<10x8xbf16>
    %c0_27 = arith.constant 0 : index
    %c1_28 = arith.constant 1 : index
    %c0_29 = arith.constant 0 : index
    %c0_30 = arith.constant 0 : index
    %36 = vector.load %arg3[%c0_27, %c1_28, %c0_29, %c0_30] : memref<1x4x10x8xf32, #tpu.memory_space<vmem>>, vector<1x1x10x8xf32>
    %37 = vector.shape_cast %36 : vector<1x1x10x8xf32> to vector<10x8xf32>
    %38 = arith.truncf %37 : vector<10x8xf32> to vector<10x8xbf16>
    %cst_31 = arith.constant dense<0.000000e+00> : vector<16x10xf32>
    %39 = tpu.matmul %32, %35, %cst_31 {dimension_numbers = #tpu.dot_dimension_numbers<[1], [1], [0], [0], [0, 0, 1, 0], [], []>} : vector<16x8xbf16>, vector<10x8xbf16>, vector<16x10xf32> -> vector<16x10xf32>
    %cst_32 = arith.constant 0.353553385 : f32
    %40 = vector.broadcast %cst_32 : f32 to vector<16x10xf32>
    %41 = arith.mulf %39, %40 : vector<16x10xf32>
    %cst_33 = arith.constant dense<0xFF800000> : vector<16xf32>
    %42 = vector.multi_reduction <maximumf>, %41, %cst_33 [1] : vector<16x10xf32> to vector<16xf32>
    %43 = vector.shape_cast %42 : vector<16xf32> to vector<16x1xf32>
    %44 = vector.broadcast %43 : vector<16x1xf32> to vector<16x10xf32>
    %45 = arith.subf %41, %44 : vector<16x10xf32>
    %46 = math.exp %45 : vector<16x10xf32>
    %cst_34 = arith.constant dense<0.000000e+00> : vector<16xf32>
    %47 = vector.multi_reduction <add>, %46, %cst_34 [1] : vector<16x10xf32> to vector<16xf32>
    %48 = vector.shape_cast %47 : vector<16xf32> to vector<16x1xf32>
    %49 = tpu.reciprocal %48 {approx = true} : vector<16x1xf32> -> vector<16x1xf32>
    %50 = vector.broadcast %49 : vector<16x1xf32> to vector<16x10xf32>
    %51 = arith.mulf %46, %50 : vector<16x10xf32>
    %52 = arith.truncf %51 : vector<16x10xf32> to vector<16x10xbf16>
    %cst_35 = arith.constant dense<0.000000e+00> : vector<16x8xf32>
    %53 = tpu.matmul %52, %38, %cst_35 {dimension_numbers = #tpu.dot_dimension_numbers<[1], [0], [0], [1], [0, 0, 1, 1], [], []>} : vector<16x10xbf16>, vector<10x8xbf16>, vector<16x8xf32> -> vector<16x8xf32>
    %54 = arith.truncf %53 : vector<16x8xf32> to vector<16x8xbf16>
    %c1_36 = arith.constant 1 : index
    %c0_37 = arith.constant 0 : index
    %c0_38 = arith.constant 0 : index
    %55 = vector.load %arg4[%c1_36, %c0_37, %c0_38] : memref<4x8x32xbf16, #tpu.memory_space<vmem>>, vector<1x8x32xbf16>
    %56 = vector.shape_cast %55 : vector<1x8x32xbf16> to vector<8x32xbf16>
    %cst_39 = arith.constant dense<0.000000e+00> : vector<16x32xf32>
    %57 = tpu.matmul %54, %56, %cst_39 {dimension_numbers = #tpu.dot_dimension_numbers<[1], [0], [0], [1], [0, 0, 1, 1], [], []>} : vector<16x8xbf16>, vector<8x32xbf16>, vector<16x32xf32> -> vector<16x32xf32>
    %58 = arith.addf %29, %57 : vector<16x32xf32>
    %c0_40 = arith.constant 0 : index
    %c2 = arith.constant 2 : index
    %c0_41 = arith.constant 0 : index
    %c0_42 = arith.constant 0 : index
    %59 = vector.load %arg1[%c0_40, %c2, %c0_41, %c0_42] : memref<1x4x16x8xf32, #tpu.memory_space<vmem>>, vector<1x1x16x8xf32>
    %60 = vector.shape_cast %59 : vector<1x1x16x8xf32> to vector<16x8xf32>
    %61 = arith.truncf %60 : vector<16x8xf32> to vector<16x8xbf16>
    %c0_43 = arith.constant 0 : index
    %c2_44 = arith.constant 2 : index
    %c0_45 = arith.constant 0 : index
    %c0_46 = arith.constant 0 : index
    %62 = vector.load %arg2[%c0_43, %c2_44, %c0_45, %c0_46] : memref<1x4x10x8xf32, #tpu.memory_space<vmem>>, vector<1x1x10x8xf32>
    %63 = vector.shape_cast %62 : vector<1x1x10x8xf32> to vector<10x8xf32>
    %64 = arith.truncf %63 : vector<10x8xf32> to vector<10x8xbf16>
    %c0_47 = arith.constant 0 : index
    %c2_48 = arith.constant 2 : index
    %c0_49 = arith.constant 0 : index
    %c0_50 = arith.constant 0 : index
    %65 = vector.load %arg3[%c0_47, %c2_48, %c0_49, %c0_50] : memref<1x4x10x8xf32, #tpu.memory_space<vmem>>, vector<1x1x10x8xf32>
    %66 = vector.shape_cast %65 : vector<1x1x10x8xf32> to vector<10x8xf32>
    %67 = arith.truncf %66 : vector<10x8xf32> to vector<10x8xbf16>
    %cst_51 = arith.constant dense<0.000000e+00> : vector<16x10xf32>
    %68 = tpu.matmul %61, %64, %cst_51 {dimension_numbers = #tpu.dot_dimension_numbers<[1], [1], [0], [0], [0, 0, 1, 0], [], []>} : vector<16x8xbf16>, vector<10x8xbf16>, vector<16x10xf32> -> vector<16x10xf32>
    %cst_52 = arith.constant 0.353553385 : f32
    %69 = vector.broadcast %cst_52 : f32 to vector<16x10xf32>
    %70 = arith.mulf %68, %69 : vector<16x10xf32>
    %cst_53 = arith.constant dense<0xFF800000> : vector<16xf32>
    %71 = vector.multi_reduction <maximumf>, %70, %cst_53 [1] : vector<16x10xf32> to vector<16xf32>
    %72 = vector.shape_cast %71 : vector<16xf32> to vector<16x1xf32>
    %73 = vector.broadcast %72 : vector<16x1xf32> to vector<16x10xf32>
    %74 = arith.subf %70, %73 : vector<16x10xf32>
    %75 = math.exp %74 : vector<16x10xf32>
    %cst_54 = arith.constant dense<0.000000e+00> : vector<16xf32>
    %76 = vector.multi_reduction <add>, %75, %cst_54 [1] : vector<16x10xf32> to vector<16xf32>
    %77 = vector.shape_cast %76 : vector<16xf32> to vector<16x1xf32>
    %78 = tpu.reciprocal %77 {approx = true} : vector<16x1xf32> -> vector<16x1xf32>
    %79 = vector.broadcast %78 : vector<16x1xf32> to vector<16x10xf32>
    %80 = arith.mulf %75, %79 : vector<16x10xf32>
    %81 = arith.truncf %80 : vector<16x10xf32> to vector<16x10xbf16>
    %cst_55 = arith.constant dense<0.000000e+00> : vector<16x8xf32>
    %82 = tpu.matmul %81, %67, %cst_55 {dimension_numbers = #tpu.dot_dimension_numbers<[1], [0], [0], [1], [0, 0, 1, 1], [], []>} : vector<16x10xbf16>, vector<10x8xbf16>, vector<16x8xf32> -> vector<16x8xf32>
    %83 = arith.truncf %82 : vector<16x8xf32> to vector<16x8xbf16>
    %c2_56 = arith.constant 2 : index
    %c0_57 = arith.constant 0 : index
    %c0_58 = arith.constant 0 : index
    %84 = vector.load %arg4[%c2_56, %c0_57, %c0_58] : memref<4x8x32xbf16, #tpu.memory_space<vmem>>, vector<1x8x32xbf16>
    %85 = vector.shape_cast %84 : vector<1x8x32xbf16> to vector<8x32xbf16>
    %cst_59 = arith.constant dense<0.000000e+00> : vector<16x32xf32>
    %86 = tpu.matmul %83, %85, %cst_59 {dimension_numbers = #tpu.dot_dimension_numbers<[1], [0], [0], [1], [0, 0, 1, 1], [], []>} : vector<16x8xbf16>, vector<8x32xbf16>, vector<16x32xf32> -> vector<16x32xf32>
    %87 = arith.addf %58, %86 : vector<16x32xf32>
    %c0_60 = arith.constant 0 : index
    %c3 = arith.constant 3 : index
    %c0_61 = arith.constant 0 : index
    %c0_62 = arith.constant 0 : index
    %88 = vector.load %arg1[%c0_60, %c3, %c0_61, %c0_62] : memref<1x4x16x8xf32, #tpu.memory_space<vmem>>, vector<1x1x16x8xf32>
    %89 = vector.shape_cast %88 : vector<1x1x16x8xf32> to vector<16x8xf32>
    %90 = arith.truncf %89 : vector<16x8xf32> to vector<16x8xbf16>
    %c0_63 = arith.constant 0 : index
    %c3_64 = arith.constant 3 : index
    %c0_65 = arith.constant 0 : index
    %c0_66 = arith.constant 0 : index
    %91 = vector.load %arg2[%c0_63, %c3_64, %c0_65, %c0_66] : memref<1x4x10x8xf32, #tpu.memory_space<vmem>>, vector<1x1x10x8xf32>
    %92 = vector.shape_cast %91 : vector<1x1x10x8xf32> to vector<10x8xf32>
    %93 = arith.truncf %92 : vector<10x8xf32> to vector<10x8xbf16>
    %c0_67 = arith.constant 0 : index
    %c3_68 = arith.constant 3 : index
    %c0_69 = arith.constant 0 : index
    %c0_70 = arith.constant 0 : index
    %94 = vector.load %arg3[%c0_67, %c3_68, %c0_69, %c0_70] : memref<1x4x10x8xf32, #tpu.memory_space<vmem>>, vector<1x1x10x8xf32>
    %95 = vector.shape_cast %94 : vector<1x1x10x8xf32> to vector<10x8xf32>
    %96 = arith.truncf %95 : vector<10x8xf32> to vector<10x8xbf16>
    %cst_71 = arith.constant dense<0.000000e+00> : vector<16x10xf32>
    %97 = tpu.matmul %90, %93, %cst_71 {dimension_numbers = #tpu.dot_dimension_numbers<[1], [1], [0], [0], [0, 0, 1, 0], [], []>} : vector<16x8xbf16>, vector<10x8xbf16>, vector<16x10xf32> -> vector<16x10xf32>
    %cst_72 = arith.constant 0.353553385 : f32
    %98 = vector.broadcast %cst_72 : f32 to vector<16x10xf32>
    %99 = arith.mulf %97, %98 : vector<16x10xf32>
    %cst_73 = arith.constant dense<0xFF800000> : vector<16xf32>
    %100 = vector.multi_reduction <maximumf>, %99, %cst_73 [1] : vector<16x10xf32> to vector<16xf32>
    %101 = vector.shape_cast %100 : vector<16xf32> to vector<16x1xf32>
    %102 = vector.broadcast %101 : vector<16x1xf32> to vector<16x10xf32>
    %103 = arith.subf %99, %102 : vector<16x10xf32>
    %104 = math.exp %103 : vector<16x10xf32>
    %cst_74 = arith.constant dense<0.000000e+00> : vector<16xf32>
    %105 = vector.multi_reduction <add>, %104, %cst_74 [1] : vector<16x10xf32> to vector<16xf32>
    %106 = vector.shape_cast %105 : vector<16xf32> to vector<16x1xf32>
    %107 = tpu.reciprocal %106 {approx = true} : vector<16x1xf32> -> vector<16x1xf32>
    %108 = vector.broadcast %107 : vector<16x1xf32> to vector<16x10xf32>
    %109 = arith.mulf %104, %108 : vector<16x10xf32>
    %110 = arith.truncf %109 : vector<16x10xf32> to vector<16x10xbf16>
    %cst_75 = arith.constant dense<0.000000e+00> : vector<16x8xf32>
    %111 = tpu.matmul %110, %96, %cst_75 {dimension_numbers = #tpu.dot_dimension_numbers<[1], [0], [0], [1], [0, 0, 1, 1], [], []>} : vector<16x10xbf16>, vector<10x8xbf16>, vector<16x8xf32> -> vector<16x8xf32>
    %112 = arith.truncf %111 : vector<16x8xf32> to vector<16x8xbf16>
    %c3_76 = arith.constant 3 : index
    %c0_77 = arith.constant 0 : index
    %c0_78 = arith.constant 0 : index
    %113 = vector.load %arg4[%c3_76, %c0_77, %c0_78] : memref<4x8x32xbf16, #tpu.memory_space<vmem>>, vector<1x8x32xbf16>
    %114 = vector.shape_cast %113 : vector<1x8x32xbf16> to vector<8x32xbf16>
    %cst_79 = arith.constant dense<0.000000e+00> : vector<16x32xf32>
    %115 = tpu.matmul %112, %114, %cst_79 {dimension_numbers = #tpu.dot_dimension_numbers<[1], [0], [0], [1], [0, 0, 1, 1], [], []>} : vector<16x8xbf16>, vector<8x32xbf16>, vector<16x32xf32> -> vector<16x32xf32>
    %116 = arith.addf %87, %115 : vector<16x32xf32>
    %c0_80 = arith.constant 0 : index
    %c0_81 = arith.constant 0 : index
    %117 = vector.load %arg5[%c0_80, %c0_81] : memref<1x32xf32, #tpu.memory_space<vmem>>, vector<1x32xf32>
    %118 = vector.broadcast %117 : vector<1x32xf32> to vector<16x32xf32>
    %119 = arith.addf %116, %118 : vector<16x32xf32>
    %c0_82 = arith.constant 0 : index
    %c0_83 = arith.constant 0 : index
    %c0_84 = arith.constant 0 : index
    %120 = vector.load %arg6[%c0_82, %c0_83, %c0_84] : memref<1x16x32xf32, #tpu.memory_space<vmem>>, vector<1x16x32xf32>
    %121 = vector.shape_cast %120 : vector<1x16x32xf32> to vector<16x32xf32>
    %122 = arith.addf %119, %121 : vector<16x32xf32>
    %cst_85 = arith.constant dense<0.000000e+00> : vector<16xf32>
    %123 = vector.multi_reduction <add>, %122, %cst_85 [1] : vector<16x32xf32> to vector<16xf32>
    %124 = vector.shape_cast %123 : vector<16xf32> to vector<16x1xf32>
    %cst_86 = arith.constant 3.200000e+01 : f32
    %125 = vector.broadcast %cst_86 : f32 to vector<16x1xf32>
    %126 = arith.divf %124, %125 : vector<16x1xf32>
    %127 = vector.broadcast %126 : vector<16x1xf32> to vector<16x32xf32>
    %128 = arith.subf %122, %127 : vector<16x32xf32>
    %129 = arith.mulf %128, %128 : vector<16x32xf32>
    %cst_87 = arith.constant dense<0.000000e+00> : vector<16xf32>
    %130 = vector.multi_reduction <add>, %129, %cst_87 [1] : vector<16x32xf32> to vector<16xf32>
    %131 = vector.shape_cast %130 : vector<16xf32> to vector<16x1xf32>
    %cst_88 = arith.constant 3.200000e+01 : f32
    %132 = vector.broadcast %cst_88 : f32 to vector<16x1xf32>
    %133 = arith.divf %131, %132 : vector<16x1xf32>
    %134 = vector.broadcast %126 : vector<16x1xf32> to vector<16x32xf32>
    %135 = arith.subf %122, %134 : vector<16x32xf32>
    %cst_89 = arith.constant 9.99999974E-6 : f32
    %136 = vector.broadcast %cst_89 : f32 to vector<16x1xf32>
    %137 = arith.addf %133, %136 : vector<16x1xf32>
    %138 = math.rsqrt %137 : vector<16x1xf32>
    %139 = vector.broadcast %138 : vector<16x1xf32> to vector<16x32xf32>
    %140 = arith.mulf %135, %139 : vector<16x32xf32>
    %c0_90 = arith.constant 0 : index
    %c0_91 = arith.constant 0 : index
    %141 = vector.load %arg7[%c0_90, %c0_91] : memref<1x32xf32, #tpu.memory_space<vmem>>, vector<1x32xf32>
    %142 = vector.broadcast %141 : vector<1x32xf32> to vector<16x32xf32>
    %143 = arith.mulf %140, %142 : vector<16x32xf32>
    %c0_92 = arith.constant 0 : index
    %c0_93 = arith.constant 0 : index
    %144 = vector.load %arg8[%c0_92, %c0_93] : memref<1x32xf32, #tpu.memory_space<vmem>>, vector<1x32xf32>
    %145 = vector.broadcast %144 : vector<1x32xf32> to vector<16x32xf32>
    %146 = arith.addf %143, %145 : vector<16x32xf32>
    %c0_94 = arith.constant 0 : index
    %c0_95 = arith.constant 0 : index
    %c0_96 = arith.constant 0 : index
    %147 = vector.load %arg9[%c0_94, %c0_95, %c0_96] : memref<1x16x32xf32, #tpu.memory_space<vmem>>, vector<1x16x32xf32>
    %148 = vector.shape_cast %147 : vector<1x16x32xf32> to vector<16x32xf32>
    %149 = vector.shape_cast %146 : vector<16x32xf32> to vector<1x16x32xf32>
    tpu.vector_store %arg9[%c0_94, %c0_95, %c0_96], %149 {strides = array<i32>} : memref<1x16x32xf32, #tpu.memory_space<vmem>>, vector<1x16x32xf32>,
    return
  }
  func.func @transform_0(%arg0: i32) -> (i32, i32, i32, i32) {
    %c0_i32 = arith.constant 0 : i32
    %c0_i32_0 = arith.constant 0 : i32
    %c0_i32_1 = arith.constant 0 : i32
    %c0_i32_2 = arith.constant 0 : i32
    return %arg0, %c0_i32, %c0_i32_0, %c0_i32_1 : i32, i32, i32, i32
  }
  func.func @transform_1(%arg0: i32) -> (i32, i32, i32, i32) {
    %c0_i32 = arith.constant 0 : i32
    %c0_i32_0 = arith.constant 0 : i32
    %c0_i32_1 = arith.constant 0 : i32
    %c0_i32_2 = arith.constant 0 : i32
    return %arg0, %c0_i32, %c0_i32_0, %c0_i32_1 : i32, i32, i32, i32
  }
  func.func @transform_2(%arg0: i32) -> (i32, i32, i32, i32) {
    %c0_i32 = arith.constant 0 : i32
    %c0_i32_0 = arith.constant 0 : i32
    %c0_i32_1 = arith.constant 0 : i32
    %c0_i32_2 = arith.constant 0 : i32
    return %arg0, %c0_i32, %c0_i32_0, %c0_i32_1 : i32, i32, i32, i32
  }
  func.func @transform_3(%arg0: i32) -> (i32, i32, i32) {
    %c0_i32 = arith.constant 0 : i32
    %c0_i32_0 = arith.constant 0 : i32
    %c0_i32_1 = arith.constant 0 : i32
    %c0_i32_2 = arith.constant 0 : i32
    return %c0_i32, %c0_i32_0, %c0_i32_1 : i32, i32, i32
  }
  func.func @transform_4(%arg0: i32) -> (i32, i32) {
    %c0_i32 = arith.constant 0 : i32
    %c0_i32_0 = arith.constant 0 : i32
    %c0_i32_1 = arith.constant 0 : i32
    return %c0_i32, %c0_i32_0 : i32, i32
  }
  func.func @transform_5(%arg0: i32) -> (i32, i32, i32) {
    %c0_i32 = arith.constant 0 : i32
    %c0_i32_0 = arith.constant 0 : i32
    %c0_i32_1 = arith.constant 0 : i32
    return %arg0, %c0_i32, %c0_i32_0 : i32, i32, i32
  }
  func.func @transform_6(%arg0: i32) -> (i32, i32) {
    %c0_i32 = arith.constant 0 : i32
    %c0_i32_0 = arith.constant 0 : i32
    %c0_i32_1 = arith.constant 0 : i32
    return %c0_i32, %c0_i32_0 : i32, i32
  }
  func.func @transform_7(%arg0: i32) -> (i32, i32) {
    %c0_i32 = arith.constant 0 : i32
    %c0_i32_0 = arith.constant 0 : i32
    %c0_i32_1 = arith.constant 0 : i32
    return %c0_i32, %c0_i32_0 : i32, i32
  }
  func.func @transform_8(%arg0: i32) -> (i32, i32, i32) {
    %c0_i32 = arith.constant 0 : i32
    %c0_i32_0 = arith.constant 0 : i32
    %c0_i32_1 = arith.constant 0 : i32
    return %arg0, %c0_i32, %c0_i32_0 : i32, i32, i32
  }
}

module attributes {stable_mosaic.version = 11 : i64} {
  func.func @_mm_bias_kernel(%arg0: i32, %arg1: i32, %arg2: memref<32x32xf32, #tpu.memory_space<vmem>>, %arg3: memref<32x40xbf16, #tpu.memory_space<vmem>>, %arg4: memref<1x40xf32, #tpu.memory_space<vmem>>, %arg5: memref<32x40xf32, #tpu.memory_space<vmem>>) attributes {dimension_semantics = [#tpu.dimension_semantics<parallel>, #tpu.dimension_semantics<parallel>], iteration_bounds = array<i64: 1, 1>, scalar_prefetch = 0 : i64, scratch_operands = 0 : i64, tpu.core_type = #tpu.core_type<tc>, window_params = [{transform_indices = @transform_0, window_bounds = array<i64: 32, 32>}, {transform_indices = @transform_1, window_bounds = array<i64: 32, 40>}, {transform_indices = @transform_2, window_bounds = array<i64: 1, 40>}, {transform_indices = @transform_3, window_bounds = array<i64: 32, 40>}]} {
    %c0 = arith.constant 0 : index
    %c0_0 = arith.constant 0 : index
    %0 = vector.load %arg2[%c0, %c0_0] : memref<32x32xf32, #tpu.memory_space<vmem>>, vector<32x32xf32>
    %1 = arith.truncf %0 : vector<32x32xf32> to vector<32x32xbf16>
    %c0_1 = arith.constant 0 : index
    %c0_2 = arith.constant 0 : index
    %2 = vector.load %arg3[%c0_1, %c0_2] : memref<32x40xbf16, #tpu.memory_space<vmem>>, vector<32x40xbf16>
    %cst = arith.constant dense<0.000000e+00> : vector<32x40xf32>
    %3 = tpu.matmul %1, %2, %cst {dimension_numbers = #tpu.dot_dimension_numbers<[1], [0], [0], [1], [0, 0, 1, 1], [], []>} : vector<32x32xbf16>, vector<32x40xbf16>, vector<32x40xf32> -> vector<32x40xf32>
    %c0_3 = arith.constant 0 : index
    %c0_4 = arith.constant 0 : index
    %4 = vector.load %arg4[%c0_3, %c0_4] : memref<1x40xf32, #tpu.memory_space<vmem>>, vector<1x40xf32>
    %5 = vector.broadcast %4 : vector<1x40xf32> to vector<32x40xf32>
    %6 = arith.addf %3, %5 : vector<32x40xf32>
    %c0_5 = arith.constant 0 : index
    %c0_6 = arith.constant 0 : index
    %7 = vector.load %arg5[%c0_5, %c0_6] : memref<32x40xf32, #tpu.memory_space<vmem>>, vector<32x40xf32>
    tpu.vector_store %arg5[%c0_5, %c0_6], %6 {strides = array<i32>} : memref<32x40xf32, #tpu.memory_space<vmem>>, vector<32x40xf32>,
    return
  }
  func.func @transform_0(%arg0: i32, %arg1: i32) -> (i32, i32) {
    %c0_i32 = arith.constant 0 : i32
    %c0_i32_0 = arith.constant 0 : i32
    return %arg0, %c0_i32 : i32, i32
  }
  func.func @transform_1(%arg0: i32, %arg1: i32) -> (i32, i32) {
    %c0_i32 = arith.constant 0 : i32
    %c0_i32_0 = arith.constant 0 : i32
    return %c0_i32, %arg1 : i32, i32
  }
  func.func @transform_2(%arg0: i32, %arg1: i32) -> (i32, i32) {
    %c0_i32 = arith.constant 0 : i32
    %c0_i32_0 = arith.constant 0 : i32
    return %c0_i32, %arg1 : i32, i32
  }
  func.func @transform_3(%arg0: i32, %arg1: i32) -> (i32, i32) {
    %c0_i32 = arith.constant 0 : i32
    return %arg0, %arg1 : i32, i32
  }
}

module attributes {stable_mosaic.version = 11 : i64} {
  func.func @_mm_bias_add_ln_kernel(%arg0: i32, %arg1: memref<32x2048xf32, #tpu.memory_space<vmem>>, %arg2: memref<2048x32xbf16, #tpu.memory_space<vmem>>, %arg3: memref<1x32xf32, #tpu.memory_space<vmem>>, %arg4: memref<32x32xf32, #tpu.memory_space<vmem>>, %arg5: memref<1x32xf32, #tpu.memory_space<vmem>>, %arg6: memref<1x32xf32, #tpu.memory_space<vmem>>, %arg7: memref<32x32xf32, #tpu.memory_space<vmem>>) attributes {dimension_semantics = [#tpu.dimension_semantics<parallel>], iteration_bounds = array<i64: 1>, scalar_prefetch = 0 : i64, scratch_operands = 0 : i64, tpu.core_type = #tpu.core_type<tc>, window_params = [{transform_indices = @transform_0, window_bounds = array<i64: 32, 2048>}, {pipeline_mode = #tpu.pipeline_mode<synchronous>, transform_indices = @transform_1, window_bounds = array<i64: 2048, 32>}, {pipeline_mode = #tpu.pipeline_mode<synchronous>, transform_indices = @transform_2, window_bounds = array<i64: 1, 32>}, {transform_indices = @transform_3, window_bounds = array<i64: 32, 32>}, {pipeline_mode = #tpu.pipeline_mode<synchronous>, transform_indices = @transform_4, window_bounds = array<i64: 1, 32>}, {pipeline_mode = #tpu.pipeline_mode<synchronous>, transform_indices = @transform_5, window_bounds = array<i64: 1, 32>}, {transform_indices = @transform_6, window_bounds = array<i64: 32, 32>}]} {
    %c0 = arith.constant 0 : index
    %c0_0 = arith.constant 0 : index
    %0 = vector.load %arg1[%c0, %c0_0] : memref<32x2048xf32, #tpu.memory_space<vmem>>, vector<32x2048xf32>
    %1 = arith.truncf %0 : vector<32x2048xf32> to vector<32x2048xbf16>
    %c0_1 = arith.constant 0 : index
    %c0_2 = arith.constant 0 : index
    %2 = vector.load %arg2[%c0_1, %c0_2] : memref<2048x32xbf16, #tpu.memory_space<vmem>>, vector<2048x32xbf16>
    %cst = arith.constant dense<0.000000e+00> : vector<32x32xf32>
    %3 = tpu.matmul %1, %2, %cst {dimension_numbers = #tpu.dot_dimension_numbers<[1], [0], [0], [1], [0, 0, 1, 1], [], []>} : vector<32x2048xbf16>, vector<2048x32xbf16>, vector<32x32xf32> -> vector<32x32xf32>
    %c0_3 = arith.constant 0 : index
    %c0_4 = arith.constant 0 : index
    %4 = vector.load %arg3[%c0_3, %c0_4] : memref<1x32xf32, #tpu.memory_space<vmem>>, vector<1x32xf32>
    %5 = vector.broadcast %4 : vector<1x32xf32> to vector<32x32xf32>
    %6 = arith.addf %3, %5 : vector<32x32xf32>
    %c0_5 = arith.constant 0 : index
    %c0_6 = arith.constant 0 : index
    %7 = vector.load %arg4[%c0_5, %c0_6] : memref<32x32xf32, #tpu.memory_space<vmem>>, vector<32x32xf32>
    %8 = arith.addf %6, %7 : vector<32x32xf32>
    %cst_7 = arith.constant dense<0.000000e+00> : vector<32xf32>
    %9 = vector.multi_reduction <add>, %8, %cst_7 [1] : vector<32x32xf32> to vector<32xf32>
    %10 = vector.shape_cast %9 : vector<32xf32> to vector<32x1xf32>
    %cst_8 = arith.constant 3.200000e+01 : f32
    %11 = vector.broadcast %cst_8 : f32 to vector<32x1xf32>
    %12 = arith.divf %10, %11 : vector<32x1xf32>
    %13 = vector.broadcast %12 : vector<32x1xf32> to vector<32x32xf32>
    %14 = arith.subf %8, %13 : vector<32x32xf32>
    %15 = arith.mulf %14, %14 : vector<32x32xf32>
    %cst_9 = arith.constant dense<0.000000e+00> : vector<32xf32>
    %16 = vector.multi_reduction <add>, %15, %cst_9 [1] : vector<32x32xf32> to vector<32xf32>
    %17 = vector.shape_cast %16 : vector<32xf32> to vector<32x1xf32>
    %cst_10 = arith.constant 3.200000e+01 : f32
    %18 = vector.broadcast %cst_10 : f32 to vector<32x1xf32>
    %19 = arith.divf %17, %18 : vector<32x1xf32>
    %20 = vector.broadcast %12 : vector<32x1xf32> to vector<32x32xf32>
    %21 = arith.subf %8, %20 : vector<32x32xf32>
    %cst_11 = arith.constant 9.99999974E-6 : f32
    %22 = vector.broadcast %cst_11 : f32 to vector<32x1xf32>
    %23 = arith.addf %19, %22 : vector<32x1xf32>
    %24 = math.rsqrt %23 : vector<32x1xf32>
    %25 = vector.broadcast %24 : vector<32x1xf32> to vector<32x32xf32>
    %26 = arith.mulf %21, %25 : vector<32x32xf32>
    %c0_12 = arith.constant 0 : index
    %c0_13 = arith.constant 0 : index
    %27 = vector.load %arg5[%c0_12, %c0_13] : memref<1x32xf32, #tpu.memory_space<vmem>>, vector<1x32xf32>
    %28 = vector.broadcast %27 : vector<1x32xf32> to vector<32x32xf32>
    %29 = arith.mulf %26, %28 : vector<32x32xf32>
    %c0_14 = arith.constant 0 : index
    %c0_15 = arith.constant 0 : index
    %30 = vector.load %arg6[%c0_14, %c0_15] : memref<1x32xf32, #tpu.memory_space<vmem>>, vector<1x32xf32>
    %31 = vector.broadcast %30 : vector<1x32xf32> to vector<32x32xf32>
    %32 = arith.addf %29, %31 : vector<32x32xf32>
    %c0_16 = arith.constant 0 : index
    %c0_17 = arith.constant 0 : index
    %33 = vector.load %arg7[%c0_16, %c0_17] : memref<32x32xf32, #tpu.memory_space<vmem>>, vector<32x32xf32>
    tpu.vector_store %arg7[%c0_16, %c0_17], %32 {strides = array<i32>} : memref<32x32xf32, #tpu.memory_space<vmem>>, vector<32x32xf32>,
    return
  }
  func.func @transform_0(%arg0: i32) -> (i32, i32) {
    %c0_i32 = arith.constant 0 : i32
    %c0_i32_0 = arith.constant 0 : i32
    return %arg0, %c0_i32 : i32, i32
  }
  func.func @transform_1(%arg0: i32) -> (i32, i32) {
    %c0_i32 = arith.constant 0 : i32
    %c0_i32_0 = arith.constant 0 : i32
    %c0_i32_1 = arith.constant 0 : i32
    return %c0_i32, %c0_i32_0 : i32, i32
  }
  func.func @transform_2(%arg0: i32) -> (i32, i32) {
    %c0_i32 = arith.constant 0 : i32
    %c0_i32_0 = arith.constant 0 : i32
    %c0_i32_1 = arith.constant 0 : i32
    return %c0_i32, %c0_i32_0 : i32, i32
  }
  func.func @transform_3(%arg0: i32) -> (i32, i32) {
    %c0_i32 = arith.constant 0 : i32
    %c0_i32_0 = arith.constant 0 : i32
    return %arg0, %c0_i32 : i32, i32
  }
  func.func @transform_4(%arg0: i32) -> (i32, i32) {
    %c0_i32 = arith.constant 0 : i32
    %c0_i32_0 = arith.constant 0 : i32
    %c0_i32_1 = arith.constant 0 : i32
    return %c0_i32, %c0_i32_0 : i32, i32
  }
  func.func @transform_5(%arg0: i32) -> (i32, i32) {
    %c0_i32 = arith.constant 0 : i32
    %c0_i32_0 = arith.constant 0 : i32
    %c0_i32_1 = arith.constant 0 : i32
    return %c0_i32, %c0_i32_0 : i32, i32
  }
  func.func @transform_6(%arg0: i32) -> (i32, i32) {
    %c0_i32 = arith.constant 0 : i32
    %c0_i32_0 = arith.constant 0 : i32
    return %arg0, %c0_i32 : i32, i32
  }
}

</mosaic_0001>

<llo_original>
// kernel: decoder_forward.15
$region0: #{decoder_forward.15}
  #allocation0 [shape = 'u32[]', space=smem, size = 0x4, offset = 0x4, fixed_abs, tag = 'smem constant byte address 0x4 - core index']
  #allocation1 [shape = 'u32[144,128]{1,0:T(1,128)}', space=vmem, size = 0x12000, scoped, tag = 'internal scratch']
  %s0 = inlined_call_operand.vmem [shape: f32[32,32], index: 0, kind: input, shape index: {}]
  %s1 = inlined_call_operand.vmem [shape: bf16[32,96], index: 1, kind: input, shape index: {}]
  %s2 = inlined_call_operand.vmem [shape: f32[1,96], index: 2, kind: input, shape index: {}]
  %s3 = inlined_call_operand.vmem [shape: f32[32,96], index: 3, kind: output, shape index: {}]
  %s4 = sld [smem:[#allocation0]]
  $region22: #{decoder_forward.15} parent=0
    _
  %s6 = ssub.s32 1, %s4
  %s7 = scalar_select 0, %s6, %s4
  // Predicated region
  $region2: #{decoder_forward.15} parent=0 // pred_check
    _
  $region3: #{decoder_forward.15} parent=0 // pred_check_branch
    %9 = sbr.rel (0) target = $region5
  $region4: #{decoder_forward.15} parent=0 // pred_region
    _
  $region5: #{decoder_forward.15} parent=0 // pred_fallthru
    _
  // Predicated region
  $region6: #{decoder_forward.15} parent=0 // pred_check
    _
  $region7: #{decoder_forward.15} parent=0 // pred_check_branch
    %11 = sbr.rel (0) target = $region9
  $region8: #{decoder_forward.15} parent=0 // pred_region
    _
  $region9: #{decoder_forward.15} parent=0 // pred_fallthru
    _
  // Predicated region
  $region10: #{decoder_forward.15} parent=0 // pred_check
    _
  $region11: #{decoder_forward.15} parent=0 // pred_check_branch
    %13 = sbr.rel (0) target = $region13
  $region12: #{decoder_forward.15} parent=0 // pred_region
    _
  $region13: #{decoder_forward.15} parent=0 // pred_fallthru
    _
  %v15 = vld [vmem:[%s0] sm:$0xff]
  %v16 = vld [vmem:[%s0 + $0x8] sm:$0xff]
  %v17 = vld [vmem:[%s0 + $0x10] sm:$0xff]
  %v18 = vld [vmem:[%s0 + $0x18] sm:$0xff]
  %v19 = vpack.c.bf16 %v16, %v15
  %v20 = vpack.c.bf16 %v18, %v17
  %v21 = vld [vmem:[%s1] sm:$0xf]
  %v22 = vld [vmem:[%s1 + $0x4] sm:$0xf]
  %v23 = vld [vmem:[%s1 + $0x8] sm:$0xf]
  %v24 = vld [vmem:[%s1 + $0xc] sm:$0xf]
  %v25 = vld [vmem:[%s2] sm:$0x1]
  %v27 = vlaneseq
  %v28 = vshrl.u32 %v27, 7
  %v29 = vsub.s32 0, %v28
  %v30 = vrot.slane %v25, %v29
  %v36 = vunpack.c.l.b16 %v21
  %v37 = vunpack.c.l.b16 %v22
  %v38 = vunpack.c.l.b16 %v23
  %v39 = vunpack.c.l.b16 %v24
  %v40 = vpack.c.b16 %v37, %v36
  %v41 = vpack.c.b16 %v39, %v38
  %vm44 = vcmask 261120
  %v46 = vsel %vm44, %v19, 0
  %v49 = vsel %vm44, %v20, 0
  %51 = vmatprep.subr.bf16.mxu0 0
  %52 = vmatpush1.bf16.msra.mxu0 %v40
  %53 = vmatprep.subr.bf16.mxu0 0
  %54 = vmatpush1.bf16.msra.mxu0 %v41
  %55 = vmatprep.subr.bf16.mxu0 0
  %56 = vmatpush1.bf16.msra.mxu0 0
  %57 = vmatprep.subr.bf16.mxu0 0
  %58 = vmatpush1.bf16.msra.mxu0 0
  %59 = vmatprep.subr.bf16.mxu0 0
  %60 = vmatpush1.bf16.msra.mxu0 0
  %61 = vmatprep.subr.bf16.mxu0 0
  %62 = vmatpush1.bf16.msra.mxu0 0
  %63 = vmatprep.subr.bf16.mxu0 0
  %64 = vmatpush1.bf16.msra.mxu0 0
  %65 = vmatprep.subr.bf16.mxu0 0
  %66 = vmatpush1.bf16.msra.mxu0 0
  %67 = vmatprep.subr.bf16.mxu0 0
  %68 = vmatpush1.bf16.msra.mxu0 0
  %69 = vmatprep.subr.bf16.mxu0 0
  %70 = vmatpush1.bf16.msra.mxu0 0
  %71 = vmatprep.subr.bf16.mxu0 0
  %72 = vmatpush1.bf16.msra.mxu0 0
  %73 = vmatprep.subr.bf16.mxu0 0
  %74 = vmatpush1.bf16.msra.mxu0 0
  %75 = vmatprep.subr.bf16.mxu0 0
  %76 = vmatpush1.bf16.msra.mxu0 0
  %77 = vmatprep.subr.bf16.mxu0 0
  %78 = vmatpush1.bf16.msra.mxu0 0
  %79 = vmatprep.subr.bf16.mxu0 0
  %80 = vmatpush1.bf16.msra.mxu0 0
  %81 = vmatprep.subr.bf16.mxu0 0
  %82 = vmatpush1.bf16.msra.mxu0 0
  %83 = vmatprep.mubr.bf16.mxu0 0
  %84 = vmatmul.mubr.bf16.gmra.mrb[0].mxu0 %v46
  %v85 = vpop.f32.mrb[0].mxu0
  %v86 = vadd.f32 %v30, %v85
  %v87 = vpop.f32.mrb[0].mxu0
  %v88 = vpop.f32.mrb[0].mxu0
  %v89 = vadd.f32 %v30, %v88
  %v90 = vpop.f32.mrb[0].mxu0
  %91 = vmatprep.mubr.bf16.mxu0 0
  %92 = vmatmul.mubr.bf16.gmra.mrb[0].mxu0 %v49
  %v93 = vpop.f32.mrb[0].mxu0
  %v94 = vadd.f32 %v30, %v93
  %v95 = vpop.f32.mrb[0].mxu0
  %v96 = vpop.f32.mrb[0].mxu0
  %v97 = vadd.f32 %v30, %v96
  %v98 = vpop.f32.mrb[0].mxu0
  %99 = vdwg.mxu0
  %vm100 = vcmask 785408
  %101 = vst.msk [vmem:[%s3] sm:$0xff] %vm100, %v86
  %102 = vst.msk [vmem:[%s3 + $0x8] sm:$0xff] %vm100, %v89
  %103 = vst.msk [vmem:[%s3 + $0x10] sm:$0xff] %vm100, %v94
  %104 = vst.msk [vmem:[%s3 + $0x18] sm:$0xff] %vm100, %v97
  // Predicated region
  $region14: #{decoder_forward.15} parent=0 // pred_check
    _
  $region15: #{decoder_forward.15} parent=0 // pred_check_branch
    %106 = sbr.rel (0) target = $region17
  $region16: #{decoder_forward.15} parent=0 // pred_region
    _
  $region17: #{decoder_forward.15} parent=0 // pred_fallthru
    _
  // Predicated region
  $region18: #{decoder_forward.15} parent=0 // pred_check
    _
  $region19: #{decoder_forward.15} parent=0 // pred_check_branch
    %108 = sbr.rel (0) target = $region21
  $region20: #{decoder_forward.15} parent=0 // pred_region
    _
  $region21: #{decoder_forward.15} parent=0 // pred_fallthru
    _

// kernel: decoder_forward.17
$region0: #{decoder_forward.17}
  #allocation0 [shape = 'u32[]', space=smem, size = 0x4, offset = 0x4, fixed_abs, tag = 'smem constant byte address 0x4 - core index']
  #allocation1 [shape = 'u32[144,128]{1,0:T(1,128)}', space=vmem, size = 0x12000, scoped, tag = 'internal scratch']
  %s0 = inlined_call_operand.vmem [shape: f32[32,32], index: 0, kind: input, shape index: {}]
  %s1 = inlined_call_operand.vmem [shape: bf16[32,32], index: 1, kind: input, shape index: {}]
  %s2 = inlined_call_operand.vmem [shape: f32[1,32], index: 2, kind: input, shape index: {}]
  %s3 = inlined_call_operand.vmem [shape: f32[32,32], index: 3, kind: output, shape index: {}]
  %s4 = sld [smem:[#allocation0]]
  $region22: #{decoder_forward.17} parent=0
    _
  %s6 = ssub.s32 1, %s4
  %s7 = scalar_select 0, %s6, %s4
  // Predicated region
  $region2: #{decoder_forward.17} parent=0 // pred_check
    _
  $region3: #{decoder_forward.17} parent=0 // pred_check_branch
    %9 = sbr.rel (0) target = $region5
  $region4: #{decoder_forward.17} parent=0 // pred_region
    _
  $region5: #{decoder_forward.17} parent=0 // pred_fallthru
    _
  // Predicated region
  $region6: #{decoder_forward.17} parent=0 // pred_check
    _
  $region7: #{decoder_forward.17} parent=0 // pred_check_branch
    %11 = sbr.rel (0) target = $region9
  $region8: #{decoder_forward.17} parent=0 // pred_region
    _
  $region9: #{decoder_forward.17} parent=0 // pred_fallthru
    _
  // Predicated region
  $region10: #{decoder_forward.17} parent=0 // pred_check
    _
  $region11: #{decoder_forward.17} parent=0 // pred_check_branch
    %13 = sbr.rel (0) target = $region13
  $region12: #{decoder_forward.17} parent=0 // pred_region
    _
  $region13: #{decoder_forward.17} parent=0 // pred_fallthru
    _
  %v15 = vld [vmem:[%s0] sm:$0xff]
  %v16 = vld [vmem:[%s0 + $0x8] sm:$0xff]
  %v17 = vld [vmem:[%s0 + $0x10] sm:$0xff]
  %v18 = vld [vmem:[%s0 + $0x18] sm:$0xff]
  %v19 = vpack.c.bf16 %v16, %v15
  %v20 = vpack.c.bf16 %v18, %v17
  %v21 = vld [vmem:[%s1] sm:$0xf]
  %v22 = vld [vmem:[%s1 + $0x4] sm:$0xf]
  %v23 = vld [vmem:[%s1 + $0x8] sm:$0xf]
  %v24 = vld [vmem:[%s1 + $0xc] sm:$0xf]
  %v25 = vld [vmem:[%s2] sm:$0x1]
  %v27 = vlaneseq
  %v28 = vshrl.u32 %v27, 7
  %v29 = vsub.s32 0, %v28
  %v30 = vrot.slane %v25, %v29
  %v36 = vunpack.c.l.b16 %v21
  %v37 = vunpack.c.l.b16 %v22
  %v38 = vunpack.c.l.b16 %v23
  %v39 = vunpack.c.l.b16 %v24
  %v40 = vpack.c.b16 %v37, %v36
  %v41 = vpack.c.b16 %v39, %v38
  %vm44 = vcmask 261120
  %v46 = vsel %vm44, %v19, 0
  %v49 = vsel %vm44, %v20, 0
  %51 = vmatprep.subr.bf16.mxu0 0
  %52 = vmatpush1.bf16.msra.mxu0 %v40
  %53 = vmatprep.subr.bf16.mxu0 0
  %54 = vmatpush1.bf16.msra.mxu0 %v41
  %55 = vmatprep.subr.bf16.mxu0 0
  %56 = vmatpush1.bf16.msra.mxu0 0
  %57 = vmatprep.subr.bf16.mxu0 0
  %58 = vmatpush1.bf16.msra.mxu0 0
  %59 = vmatprep.subr.bf16.mxu0 0
  %60 = vmatpush1.bf16.msra.mxu0 0
  %61 = vmatprep.subr.bf16.mxu0 0
  %62 = vmatpush1.bf16.msra.mxu0 0
  %63 = vmatprep.subr.bf16.mxu0 0
  %64 = vmatpush1.bf16.msra.mxu0 0
  %65 = vmatprep.subr.bf16.mxu0 0
  %66 = vmatpush1.bf16.msra.mxu0 0
  %67 = vmatprep.subr.bf16.mxu0 0
  %68 = vmatpush1.bf16.msra.mxu0 0
  %69 = vmatprep.subr.bf16.mxu0 0
  %70 = vmatpush1.bf16.msra.mxu0 0
  %71 = vmatprep.subr.bf16.mxu0 0
  %72 = vmatpush1.bf16.msra.mxu0 0
  %73 = vmatprep.subr.bf16.mxu0 0
  %74 = vmatpush1.bf16.msra.mxu0 0
  %75 = vmatprep.subr.bf16.mxu0 0
  %76 = vmatpush1.bf16.msra.mxu0 0
  %77 = vmatprep.subr.bf16.mxu0 0
  %78 = vmatpush1.bf16.msra.mxu0 0
  %79 = vmatprep.subr.bf16.mxu0 0
  %80 = vmatpush1.bf16.msra.mxu0 0
  %81 = vmatprep.subr.bf16.mxu0 0
  %82 = vmatpush1.bf16.msra.mxu0 0
  %83 = vmatprep.mubr.bf16.mxu0 0
  %84 = vmatmul.mubr.bf16.gmra.mrb[0].mxu0 %v46
  %v85 = vpop.f32.mrb[0].mxu0
  %v86 = vadd.f32 %v30, %v85
  %v87 = vpop.f32.mrb[0].mxu0
  %v88 = vpop.f32.mrb[0].mxu0
  %v89 = vadd.f32 %v30, %v88
  %v90 = vpop.f32.mrb[0].mxu0
  %91 = vmatprep.mubr.bf16.mxu0 0
  %92 = vmatmul.mubr.bf16.gmra.mrb[0].mxu0 %v49
  %v93 = vpop.f32.mrb[0].mxu0
  %v94 = vadd.f32 %v30, %v93
  %v95 = vpop.f32.mrb[0].mxu0
  %v96 = vpop.f32.mrb[0].mxu0
  %v97 = vadd.f32 %v30, %v96
  %v98 = vpop.f32.mrb[0].mxu0
  %99 = vdwg.mxu0
  %100 = vst.msk [vmem:[%s3] sm:$0xff] %vm44, %v86
  %101 = vst.msk [vmem:[%s3 + $0x8] sm:$0xff] %vm44, %v89
  %102 = vst.msk [vmem:[%s3 + $0x10] sm:$0xff] %vm44, %v94
  %103 = vst.msk [vmem:[%s3 + $0x18] sm:$0xff] %vm44, %v97
  // Predicated region
  $region14: #{decoder_forward.17} parent=0 // pred_check
    _
  $region15: #{decoder_forward.17} parent=0 // pred_check_branch
    %105 = sbr.rel (0) target = $region17
  $region16: #{decoder_forward.17} parent=0 // pred_region
    _
  $region17: #{decoder_forward.17} parent=0 // pred_fallthru
    _
  // Predicated region
  $region18: #{decoder_forward.17} parent=0 // pred_check
    _
  $region19: #{decoder_forward.17} parent=0 // pred_check_branch
    %107 = sbr.rel (0) target = $region21
  $region20: #{decoder_forward.17} parent=0 // pred_region
    _
  $region21: #{decoder_forward.17} parent=0 // pred_fallthru
    _

// kernel: decoder_forward.18
$region0: #{decoder_forward.18}
  #allocation0 [shape = 'u32[]', space=smem, size = 0x4, offset = 0x4, fixed_abs, tag = 'smem constant byte address 0x4 - core index']
  #allocation1 [shape = 'u32[144,128]{1,0:T(1,128)}', space=vmem, size = 0x12000, scoped, tag = 'internal scratch']
  %s0 = inlined_call_operand.vmem [shape: f32[20,32], index: 0, kind: input, shape index: {}]
  %s1 = inlined_call_operand.vmem [shape: bf16[32,64], index: 1, kind: input, shape index: {}]
  %s2 = inlined_call_operand.vmem [shape: f32[1,64], index: 2, kind: input, shape index: {}]
  %s3 = inlined_call_operand.vmem [shape: f32[20,64], index: 3, kind: output, shape index: {}]
  %s4 = sld [smem:[#allocation0]]
  $region22: #{decoder_forward.18} parent=0
    _
  %s6 = ssub.s32 1, %s4
  %s7 = scalar_select 0, %s6, %s4
  // Predicated region
  $region2: #{decoder_forward.18} parent=0 // pred_check
    _
  $region3: #{decoder_forward.18} parent=0 // pred_check_branch
    %9 = sbr.rel (0) target = $region5
  $region4: #{decoder_forward.18} parent=0 // pred_region
    _
  $region5: #{decoder_forward.18} parent=0 // pred_fallthru
    _
  // Predicated region
  $region6: #{decoder_forward.18} parent=0 // pred_check
    _
  $region7: #{decoder_forward.18} parent=0 // pred_check_branch
    %11 = sbr.rel (0) target = $region9
  $region8: #{decoder_forward.18} parent=0 // pred_region
    _
  $region9: #{decoder_forward.18} parent=0 // pred_fallthru
    _
  // Predicated region
  $region10: #{decoder_forward.18} parent=0 // pred_check
    _
  $region11: #{decoder_forward.18} parent=0 // pred_check_branch
    %13 = sbr.rel (0) target = $region13
  $region12: #{decoder_forward.18} parent=0 // pred_region
    _
  $region13: #{decoder_forward.18} parent=0 // pred_fallthru
    _
  %v15 = vld [vmem:[%s0] sm:$0xff]
  %v16 = vld [vmem:[%s0 + $0x8] sm:$0xff]
  %v17 = vld [vmem:[%s0 + $0x10] sm:$0xf]
  %v18 = vpack.c.bf16 %v16, %v15
  %v19 = vpack.c.bf16 %v17, %v17
  %v20 = vld [vmem:[%s1] sm:$0xf]
  %v21 = vld [vmem:[%s1 + $0x4] sm:$0xf]
  %v22 = vld [vmem:[%s1 + $0x8] sm:$0xf]
  %v23 = vld [vmem:[%s1 + $0xc] sm:$0xf]
  %v24 = vld [vmem:[%s2] sm:$0x1]
  %v26 = vlaneseq
  %v27 = vshrl.u32 %v26, 7
  %v28 = vsub.s32 0, %v27
  %v29 = vrot.slane %v24, %v28
  %v35 = vunpack.c.l.b16 %v20
  %v36 = vunpack.c.l.b16 %v21
  %v37 = vunpack.c.l.b16 %v22
  %v38 = vunpack.c.l.b16 %v23
  %v39 = vpack.c.b16 %v36, %v35
  %v40 = vpack.c.b16 %v38, %v37
  %vm43 = vcmask 261120
  %v45 = vsel %vm43, %v18, 0
  %v48 = vsel %vm43, %v19, 0
  %50 = vmatprep.subr.bf16.mxu0 0
  %51 = vmatpush1.bf16.msra.mxu0 %v39
  %52 = vmatprep.subr.bf16.mxu0 0
  %53 = vmatpush1.bf16.msra.mxu0 %v40
  %54 = vmatprep.subr.bf16.mxu0 0
  %55 = vmatpush1.bf16.msra.mxu0 0
  %56 = vmatprep.subr.bf16.mxu0 0
  %57 = vmatpush1.bf16.msra.mxu0 0
  %58 = vmatprep.subr.bf16.mxu0 0
  %59 = vmatpush1.bf16.msra.mxu0 0
  %60 = vmatprep.subr.bf16.mxu0 0
  %61 = vmatpush1.bf16.msra.mxu0 0
  %62 = vmatprep.subr.bf16.mxu0 0
  %63 = vmatpush1.bf16.msra.mxu0 0
  %64 = vmatprep.subr.bf16.mxu0 0
  %65 = vmatpush1.bf16.msra.mxu0 0
  %66 = vmatprep.subr.bf16.mxu0 0
  %67 = vmatpush1.bf16.msra.mxu0 0
  %68 = vmatprep.subr.bf16.mxu0 0
  %69 = vmatpush1.bf16.msra.mxu0 0
  %70 = vmatprep.subr.bf16.mxu0 0
  %71 = vmatpush1.bf16.msra.mxu0 0
  %72 = vmatprep.subr.bf16.mxu0 0
  %73 = vmatpush1.bf16.msra.mxu0 0
  %74 = vmatprep.subr.bf16.mxu0 0
  %75 = vmatpush1.bf16.msra.mxu0 0
  %76 = vmatprep.subr.bf16.mxu0 0
  %77 = vmatpush1.bf16.msra.mxu0 0
  %78 = vmatprep.subr.bf16.mxu0 0
  %79 = vmatpush1.bf16.msra.mxu0 0
  %80 = vmatprep.subr.bf16.mxu0 0
  %81 = vmatpush1.bf16.msra.mxu0 0
  %82 = vmatprep.mubr.bf16.mxu0 0
  %83 = vmatmul.mubr.bf16.gmra.mrb[0].mxu0 %v45
  %v84 = vpop.f32.mrb[0].mxu0
  %v85 = vadd.f32 %v29, %v84
  %v86 = vpop.f32.mrb[0].mxu0
  %v87 = vpop.f32.mrb[0].mxu0
  %v88 = vadd.f32 %v29, %v87
  %v89 = vpop.f32.mrb[0].mxu0
  %90 = vmatprep.mubr.bf16.mxu0 0
  %91 = vmatmul.mubr.bf16.gmra.mrb[0].mxu0 %v48
  %v92 = vpop.f32.mrb[0].mxu0
  %v93 = vadd.f32 %v29, %v92
  %v94 = vpop.f32.mrb[0].mxu0
  %v95 = vpop.f32.mrb[0].mxu0
  %v96 = vpop.f32.mrb[0].mxu0
  %97 = vdwg.mxu0
  %vm98 = vcmask 523264
  %99 = vst.msk [vmem:[%s3] sm:$0xff] %vm98, %v85
  %100 = vst.msk [vmem:[%s3 + $0x8] sm:$0xff] %vm98, %v88
  %vm101 = vcmask 519168
  %102 = vst.msk [vmem:[%s3 + $0x10] sm:$0xf] %vm101, %v93
  // Predicated region
  $region14: #{decoder_forward.18} parent=0 // pred_check
    _
  $region15: #{decoder_forward.18} parent=0 // pred_check_branch
    %104 = sbr.rel (0) target = $region17
  $region16: #{decoder_forward.18} parent=0 // pred_region
    _
  $region17: #{decoder_forward.18} parent=0 // pred_fallthru
    _
  // Predicated region
  $region18: #{decoder_forward.18} parent=0 // pred_check
    _
  $region19: #{decoder_forward.18} parent=0 // pred_check_branch
    %106 = sbr.rel (0) target = $region21
  $region20: #{decoder_forward.18} parent=0 // pred_region
    _
  $region21: #{decoder_forward.18} parent=0 // pred_fallthru
    _

// kernel: decoder_forward.16
$region0: #{decoder_forward.16}
  #allocation0 [shape = 'u32[]', space=smem, size = 0x4, offset = 0x4, fixed_abs, tag = 'smem constant byte address 0x4 - core index']
  #allocation1 [shape = 'u32[144,128]{1,0:T(1,128)}', space=vmem, size = 0x12000, scoped, tag = 'internal scratch']
  %s0 = inlined_call_operand.vmem [shape: f32[2,4,16,8], index: 0, kind: input, shape index: {}]
  %s1 = inlined_call_operand.vmem [shape: f32[2,4,16,8], index: 1, kind: input, shape index: {}]
  %s2 = inlined_call_operand.vmem [shape: f32[2,4,16,8], index: 2, kind: input, shape index: {}]
  %s3 = inlined_call_operand.vmem [shape: f32[2,1,16], index: 3, kind: input, shape index: {}]
  %s4 = inlined_call_operand.vmem [shape: bf16[4,8,32], index: 4, kind: input, shape index: {}]
  %s5 = inlined_call_operand.vmem [shape: f32[1,32], index: 5, kind: input, shape index: {}]
  %s6 = inlined_call_operand.vmem [shape: f32[2,16,32], index: 6, kind: input, shape index: {}]
  %s7 = inlined_call_operand.vmem [shape: f32[1,32], index: 7, kind: input, shape index: {}]
  %s8 = inlined_call_operand.vmem [shape: f32[1,32], index: 8, kind: input, shape index: {}]
  %s9 = inlined_call_operand.vmem [shape: f32[2,16,32], index: 9, kind: output, shape index: {}]
  %s10 = sld [smem:[#allocation0]]
  $region69: #{decoder_forward.16} parent=0
    _
  %s12 = ssub.s32 1, %s10
  %s13 = scalar_select 0, %s12, %s10
  loop: start=0, step=1, limit=4
  $region2: #{decoder_forward.16} parent=0 // loop_pre_header
    _
  $region3: #{decoder_forward.16} parent=0 // loop_header
    %s15 = sphi 0, %s19
    %p16 = scmp.ge.s32.totalorder %s15, 4
    %s25 = sphi 0, %s27
    %s28 = sphi 0, %s25
    %s29 = sphi 0, %s28
    %s45 = sphi 0, %s29
    %s51 = sphi 0, %s53
    %s54 = sphi 0, %s51
    %s55 = sphi 0, %s54
    %s71 = sphi 0, %s55
    %s77 = sphi 0, %s79
    %s80 = sphi 0, %s77
    %s81 = sphi 0, %s80
    %s97 = sphi 0, %s81
    %s103 = sphi 0, %s105
    %s106 = sphi 0, %s103
    %s107 = sphi 0, %s106
    %s123 = sphi 0, %s107
    %s127 = sphi 0, %s127
    %s129 = sphi 0, %s127
    %s130 = sphi 0, %s129
    %s144 = sphi 0, %s130
    %s148 = sphi 0, %s148
    %s150 = sphi 0, %s148
    %s151 = sphi 0, %s150
    %s165 = sphi 0, %s151
    %s171 = sphi 0, %s173
    %s174 = sphi 0, %s171
    %s175 = sphi 0, %s174
    %s191 = sphi 0, %s175
    %s195 = sphi 0, %s195
    %s197 = sphi 0, %s195
    %s198 = sphi 0, %s197
    %s212 = sphi 0, %s198
    %s216 = sphi 0, %s216
    %s218 = sphi 0, %s216
    %s219 = sphi 0, %s218
    %s233 = sphi 0, %s219
    %s239 = sphi 0, %s241
    %s242 = sphi 0, %s239
    %s243 = sphi 0, %s242
    %s259 = sphi 0, %s243
  $region4: #{decoder_forward.16} parent=0 // loop_header_branch
    %18 = sbr.rel (%p16) target = $region8
  $region5: #{decoder_forward.16} parent=0 // loop_body
    %s20 = ssub.s32 %s15, 1
    %s21 = ssub.s32 %s15, 2
    %s22 = sadd.s32 %s15, 1
    %s23 = ssub.s32 %s15, %s22
    %p24 = scmp.eq.s32.totalorder %s23, 0
    %s26 = sadd.s32 %s25, 1
    %s27 = scalar_select %p24, %s25, %s26
    %p30 = pneg %p24
    %p31 = scmp.eq.s32.totalorder %s15, 1
    %p32 = por %p30, %p31
    %p33 = scmp.ne.s32.totalorder %s25, %s28
    %p34 = scmp.eq.s32.totalorder %s15, 0
    %p35 = por %p33, %p34
    %p36 = scmp.ne.s32.totalorder %s25, %s28
    %p37 = scmp.eq.s32.totalorder %s20, 1
    %p38 = por %p36, %p37
    %p39 = scmp.ne.s32.totalorder %s28, %s29
    %p40 = scmp.eq.s32.totalorder %s20, 0
    %p41 = por %p39, %p40
    %p42 = scmp.ne.s32.totalorder %s28, %s29
    %p43 = scmp.eq.s32.totalorder %s21, 1
    %p44 = por %p42, %p43
    %p46 = scmp.ne.s32.totalorder %s29, %s45
    %p47 = scmp.eq.s32.totalorder %s21, 0
    %p48 = por %p46, %p47
    %s49 = ssub.s32 %s15, %s22
    %p50 = scmp.eq.s32.totalorder %s49, 0
    %s52 = sadd.s32 %s51, 1
    %s53 = scalar_select %p50, %s51, %s52
    %p56 = pneg %p50
    %p57 = scmp.eq.s32.totalorder %s15, 1
    %p58 = por %p56, %p57
    %p59 = scmp.ne.s32.totalorder %s51, %s54
    %p60 = scmp.eq.s32.totalorder %s15, 0
    %p61 = por %p59, %p60
    %p62 = scmp.ne.s32.totalorder %s51, %s54
    %p63 = scmp.eq.s32.totalorder %s20, 1
    %p64 = por %p62, %p63
    %p65 = scmp.ne.s32.totalorder %s54, %s55
    %p66 = scmp.eq.s32.totalorder %s20, 0
    %p67 = por %p65, %p66
    %p68 = scmp.ne.s32.totalorder %s54, %s55
    %p69 = scmp.eq.s32.totalorder %s21, 1
    %p70 = por %p68, %p69
    %p72 = scmp.ne.s32.totalorder %s55, %s71
    %p73 = scmp.eq.s32.totalorder %s21, 0
    %p74 = por %p72, %p73
    %s75 = ssub.s32 %s15, %s22
    %p76 = scmp.eq.s32.totalorder %s75, 0
    %s78 = sadd.s32 %s77, 1
    %s79 = scalar_select %p76, %s77, %s78
    %p82 = pneg %p76
    %p83 = scmp.eq.s32.totalorder %s15, 1
    %p84 = por %p82, %p83
    %p85 = scmp.ne.s32.totalorder %s77, %s80
    %p86 = scmp.eq.s32.totalorder %s15, 0
    %p87 = por %p85, %p86
    %p88 = scmp.ne.s32.totalorder %s77, %s80
    %p89 = scmp.eq.s32.totalorder %s20, 1
    %p90 = por %p88, %p89
    %p91 = scmp.ne.s32.totalorder %s80, %s81
    %p92 = scmp.eq.s32.totalorder %s20, 0
    %p93 = por %p91, %p92
    %p94 = scmp.ne.s32.totalorder %s80, %s81
    %p95 = scmp.eq.s32.totalorder %s21, 1
    %p96 = por %p94, %p95
    %p98 = scmp.ne.s32.totalorder %s81, %s97
    %p99 = scmp.eq.s32.totalorder %s21, 0
    %p100 = por %p98, %p99
    %s101 = ssub.s32 %s15, %s22
    %p102 = scmp.eq.s32.totalorder %s101, 0
    %s104 = sadd.s32 %s103, 1
    %s105 = scalar_select %p102, %s103, %s104
    %p108 = pneg %p102
    %p109 = scmp.eq.s32.totalorder %s15, 1
    %p110 = por %p108, %p109
    %p111 = scmp.ne.s32.totalorder %s103, %s106
    %p112 = scmp.eq.s32.totalorder %s15, 0
    %p113 = por %p111, %p112
    %p114 = scmp.ne.s32.totalorder %s103, %s106
    %p115 = scmp.eq.s32.totalorder %s20, 1
    %p116 = por %p114, %p115
    %p117 = scmp.ne.s32.totalorder %s106, %s107
    %p118 = scmp.eq.s32.totalorder %s20, 0
    %p119 = por %p117, %p118
    %p120 = scmp.ne.s32.totalorder %s106, %s107
    %p121 = scmp.eq.s32.totalorder %s21, 1
    %p122 = por %p120, %p121
    %p124 = scmp.ne.s32.totalorder %s107, %s123
    %p125 = scmp.eq.s32.totalorder %s21, 0
    %p126 = por %p124, %p125
    %s128 = sadd.s32 %s127, 1
    %p131 = scmp.eq.s32.totalorder %s15, 1
    %p132 = scmp.ne.s32.totalorder %s127, %s129
    %p133 = scmp.eq.s32.totalorder %s15, 0
    %p134 = por %p132, %p133
    %p135 = scmp.ne.s32.totalorder %s127, %s129
    %p136 = scmp.eq.s32.totalorder %s20, 1
    %p137 = por %p135, %p136
    %p138 = scmp.ne.s32.totalorder %s129, %s130
    %p139 = scmp.eq.s32.totalorder %s20, 0
    %p140 = por %p138, %p139
    %p141 = scmp.ne.s32.totalorder %s129, %s130
    %p142 = scmp.eq.s32.totalorder %s21, 1
    %p143 = por %p141, %p142
    %p145 = scmp.ne.s32.totalorder %s130, %s144
    %p146 = scmp.eq.s32.totalorder %s21, 0
    %p147 = por %p145, %p146
    %s149 = sadd.s32 %s148, 1
    %p152 = scmp.eq.s32.totalorder %s15, 1
    %p153 = scmp.ne.s32.totalorder %s148, %s150
    %p154 = scmp.eq.s32.totalorder %s15, 0
    %p155 = por %p153, %p154
    %p156 = scmp.ne.s32.totalorder %s148, %s150
    %p157 = scmp.eq.s32.totalorder %s20, 1
    %p158 = por %p156, %p157
    %p159 = scmp.ne.s32.totalorder %s150, %s151
    %p160 = scmp.eq.s32.totalorder %s20, 0
    %p161 = por %p159, %p160
    %p162 = scmp.ne.s32.totalorder %s150, %s151
    %p163 = scmp.eq.s32.totalorder %s21, 1
    %p164 = por %p162, %p163
    %p166 = scmp.ne.s32.totalorder %s151, %s165
    %p167 = scmp.eq.s32.totalorder %s21, 0
    %p168 = por %p166, %p167
    %s169 = ssub.s32 %s15, %s22
    %p170 = scmp.eq.s32.totalorder %s169, 0
    %s172 = sadd.s32 %s171, 1
    %s173 = scalar_select %p170, %s171, %s172
    %p176 = pneg %p170
    %p177 = scmp.eq.s32.totalorder %s15, 1
    %p178 = por %p176, %p177
    %p179 = scmp.ne.s32.totalorder %s171, %s174
    %p180 = scmp.eq.s32.totalorder %s15, 0
    %p181 = por %p179, %p180
    %p182 = scmp.ne.s32.totalorder %s171, %s174
    %p183 = scmp.eq.s32.totalorder %s20, 1
    %p184 = por %p182, %p183
    %p185 = scmp.ne.s32.totalorder %s174, %s175
    %p186 = scmp.eq.s32.totalorder %s20, 0
    %p187 = por %p185, %p186
    %p188 = scmp.ne.s32.totalorder %s174, %s175
    %p189 = scmp.eq.s32.totalorder %s21, 1
    %p190 = por %p188, %p189
    %p192 = scmp.ne.s32.totalorder %s175, %s191
    %p193 = scmp.eq.s32.totalorder %s21, 0
    %p194 = por %p192, %p193
    %s196 = sadd.s32 %s195, 1
    %p199 = scmp.eq.s32.totalorder %s15, 1
    %p200 = scmp.ne.s32.totalorder %s195, %s197
    %p201 = scmp.eq.s32.totalorder %s15, 0
    %p202 = por %p200, %p201
    %p203 = scmp.ne.s32.totalorder %s195, %s197
    %p204 = scmp.eq.s32.totalorder %s20, 1
    %p205 = por %p203, %p204
    %p206 = scmp.ne.s32.totalorder %s197, %s198
    %p207 = scmp.eq.s32.totalorder %s20, 0
    %p208 = por %p206, %p207
    %p209 = scmp.ne.s32.totalorder %s197, %s198
    %p210 = scmp.eq.s32.totalorder %s21, 1
    %p211 = por %p209, %p210
    %p213 = scmp.ne.s32.totalorder %s198, %s212
    %p214 = scmp.eq.s32.totalorder %s21, 0
    %p215 = por %p213, %p214
    %s217 = sadd.s32 %s216, 1
    %p220 = scmp.eq.s32.totalorder %s15, 1
    %p221 = scmp.ne.s32.totalorder %s216, %s218
    %p222 = scmp.eq.s32.totalorder %s15, 0
    %p223 = por %p221, %p222
    %p224 = scmp.ne.s32.totalorder %s216, %s218
    %p225 = scmp.eq.s32.totalorder %s20, 1
    %p226 = por %p224, %p225
    %p227 = scmp.ne.s32.totalorder %s218, %s219
    %p228 = scmp.eq.s32.totalorder %s20, 0
    %p229 = por %p227, %p228
    %p230 = scmp.ne.s32.totalorder %s218, %s219
    %p231 = scmp.eq.s32.totalorder %s21, 1
    %p232 = por %p230, %p231
    %p234 = scmp.ne.s32.totalorder %s219, %s233
    %p235 = scmp.eq.s32.totalorder %s21, 0
    %p236 = por %p234, %p235
    %s237 = ssub.s32 %s15, %s22
    %p238 = scmp.eq.s32.totalorder %s237, 0
    %s240 = sadd.s32 %s239, 1
    %s241 = scalar_select %p238, %s239, %s240
    %p244 = pneg %p238
    %p245 = scmp.eq.s32.totalorder %s15, 1
    %p246 = por %p244, %p245
    %p247 = scmp.ne.s32.totalorder %s239, %s242
    %p248 = scmp.eq.s32.totalorder %s15, 0
    %p249 = por %p247, %p248
    %p250 = scmp.ne.s32.totalorder %s239, %s242
    %p251 = scmp.eq.s32.totalorder %s20, 1
    %p252 = por %p250, %p251
    %p253 = scmp.ne.s32.totalorder %s242, %s243
    %p254 = scmp.eq.s32.totalorder %s20, 0
    %p255 = por %p253, %p254
    %p256 = scmp.ne.s32.totalorder %s242, %s243
    %p257 = scmp.eq.s32.totalorder %s21, 1
    %p258 = por %p256, %p257
    %p260 = scmp.ne.s32.totalorder %s243, %s259
    %p261 = scmp.eq.s32.totalorder %s21, 0
    %p262 = por %p260, %p261
    %p263 = scmp.le.s32.totalorder 1, %s15
    %p264 = scmp.lt.s32.totalorder %s15, 3
    %p265 = pnand %p263, %p264
    %p266 = pneg %p265
    // Predicated region
    $region9: #{decoder_forward.16} parent=5 // pred_check
      _
    $region10: #{decoder_forward.16} parent=5 // pred_check_branch
      %268 = sbr.rel (%p265) target = $region12
    $region11: #{decoder_forward.16} parent=5 // pred_region
      %s269 = ssub.s32 %s15, 1
      // Predicated region
      $region13: #{decoder_forward.16} parent=11 // pred_check
        %p270 = pneg %p140
      $region14: #{decoder_forward.16} parent=11 // pred_check_branch
        %272 = sbr.rel (%p270) target = $region16
      $region15: #{decoder_forward.16} parent=11 // pred_region
        _
      $region16: #{decoder_forward.16} parent=11 // pred_fallthru
        _
      // Predicated region
      $region17: #{decoder_forward.16} parent=11 // pred_check
        %p273 = pneg %p161
      $region18: #{decoder_forward.16} parent=11 // pred_check_branch
        %275 = sbr.rel (%p273) target = $region20
      $region19: #{decoder_forward.16} parent=11 // pred_region
        _
      $region20: #{decoder_forward.16} parent=11 // pred_fallthru
        _
      // Predicated region
      $region21: #{decoder_forward.16} parent=11 // pred_check
        %p276 = pneg %p208
      $region22: #{decoder_forward.16} parent=11 // pred_check_branch
        %278 = sbr.rel (%p276) target = $region24
      $region23: #{decoder_forward.16} parent=11 // pred_region
        _
      $region24: #{decoder_forward.16} parent=11 // pred_fallthru
        _
      // Predicated region
      $region25: #{decoder_forward.16} parent=11 // pred_check
        %p279 = pneg %p229
      $region26: #{decoder_forward.16} parent=11 // pred_check_branch
        %281 = sbr.rel (%p279) target = $region28
      $region27: #{decoder_forward.16} parent=11 // pred_region
        _
      $region28: #{decoder_forward.16} parent=11 // pred_fallthru
        _
    $region12: #{decoder_forward.16} parent=5 // pred_fallthru
      _
    %p282 = scmp.lt.s32.totalorder %s15, 2
    // Predicated region
    $region29: #{decoder_forward.16} parent=5 // pred_check
      %p283 = pneg %p282
    $region30: #{decoder_forward.16} parent=5 // pred_check_branch
      %285 = sbr.rel (%p283) target = $region32
    $region31: #{decoder_forward.16} parent=5 // pred_region
      // Predicated region
      $region33: #{decoder_forward.16} parent=31 // pred_check
        %p286 = pneg %p35
      $region34: #{decoder_forward.16} parent=31 // pred_check_branch
        %288 = sbr.rel (%p286) target = $region36
      $region35: #{decoder_forward.16} parent=31 // pred_region
        %p289 = scmp.lt.s32.totalorder %s15, 1
        %s290 = scalar_select %p289, %s15, 1
        %s291 = smul.addr %s290, 8
        %s292 = smul.addr %s291, 8
        %s293 = scalar_lea.vmem %s0, %s292
      $region36: #{decoder_forward.16} parent=31 // pred_fallthru
        _
      // Predicated region
      $region37: #{decoder_forward.16} parent=31 // pred_check
        %p294 = pneg %p61
      $region38: #{decoder_forward.16} parent=31 // pred_check_branch
        %296 = sbr.rel (%p294) target = $region40
      $region39: #{decoder_forward.16} parent=31 // pred_region
        %p297 = scmp.lt.s32.totalorder %s15, 1
        %s298 = scalar_select %p297, %s15, 1
        %s299 = smul.addr %s298, 8
        %s300 = smul.addr %s299, 8
        %s301 = scalar_lea.vmem %s1, %s300
      $region40: #{decoder_forward.16} parent=31 // pred_fallthru
        _
      // Predicated region
      $region41: #{decoder_forward.16} parent=31 // pred_check
        %p302 = pneg %p87
      $region42: #{decoder_forward.16} parent=31 // pred_check_branch
        %304 = sbr.rel (%p302) target = $region44
      $region43: #{decoder_forward.16} parent=31 // pred_region
        %p305 = scmp.lt.s32.totalorder %s15, 1
        %s306 = scalar_select %p305, %s15, 1
        %s307 = smul.addr %s306, 8
        %s308 = smul.addr %s307, 8
        %s309 = scalar_lea.vmem %s2, %s308
      $region44: #{decoder_forward.16} parent=31 // pred_fallthru
        _
      // Predicated region
      $region45: #{decoder_forward.16} parent=31 // pred_check
        %p310 = pneg %p113
      $region46: #{decoder_forward.16} parent=31 // pred_check_branch
        %312 = sbr.rel (%p310) target = $region48
      $region47: #{decoder_forward.16} parent=31 // pred_region
        %p313 = scmp.lt.s32.totalorder %s15, 1
        %s314 = scalar_select %p313, %s15, 1
        %s315 = scalar_lea.vmem %s3, %s314
      $region48: #{decoder_forward.16} parent=31 // pred_fallthru
        _
      // Predicated region
      $region49: #{decoder_forward.16} parent=31 // pred_check
        %p316 = pneg %p181
      $region50: #{decoder_forward.16} parent=31 // pred_check_branch
        %318 = sbr.rel (%p316) target = $region52
      $region51: #{decoder_forward.16} parent=31 // pred_region
        %p319 = scmp.lt.s32.totalorder %s15, 1
        %s320 = scalar_select %p319, %s15, 1
        %s321 = smul.addr %s320, 2
        %s322 = smul.addr %s321, 8
        %s323 = scalar_lea.vmem %s6, %s322
      $region52: #{decoder_forward.16} parent=31 // pred_fallthru
        _
    $region32: #{decoder_forward.16} parent=5 // pred_fallthru
      _
    %p324 = scmp.le.s32.totalorder 1, %s15
    %p325 = scmp.lt.s32.totalorder %s15, 3
    %p326 = pnand %p324, %p325
    %p327 = pneg %p326
    // Predicated region
    $region53: #{decoder_forward.16} parent=5 // pred_check
      _
    $region54: #{decoder_forward.16} parent=5 // pred_check_branch
      %329 = sbr.rel (%p326) target = $region56
    $region55: #{decoder_forward.16} parent=5 // pred_region
      %s330 = ssub.s32 %s15, 1
      %p331 = scmp.lt.s32.totalorder %s20, 1
      %s332 = scalar_select %p331, %s20, 1
      %s333 = smul.addr %s332, 8
      %s334 = smul.addr %s333, 8
      %s335 = scalar_lea.vmem %s0, %s334
      %p336 = pneg %p41
      %p337 = pneg %p38
      %p338 = scmp.lt.s32.totalorder %s20, 1
      %s339 = scalar_select %p338, %s20, 1
      %s340 = smul.addr %s339, 8
      %s341 = smul.addr %s340, 8
      %s342 = scalar_lea.vmem %s1, %s341
      %p343 = pneg %p67
      %p344 = pneg %p64
      %p345 = scmp.lt.s32.totalorder %s20, 1
      %s346 = scalar_select %p345, %s20, 1
      %s347 = smul.addr %s346, 8
      %s348 = smul.addr %s347, 8
      %s349 = scalar_lea.vmem %s2, %s348
      %p350 = pneg %p93
      %p351 = pneg %p90
      %p352 = scmp.lt.s32.totalorder %s20, 1
      %s353 = scalar_select %p352, %s20, 1
      %s354 = scalar_lea.vmem %s3, %s353
      %p355 = pneg %p119
      %p356 = pneg %p116
      %p357 = pneg %p140
      %p358 = pneg %p137
      %p359 = pneg %p161
      %p360 = pneg %p158
      %p361 = scmp.lt.s32.totalorder %s20, 1
      %s362 = scalar_select %p361, %s20, 1
      %s363 = smul.addr %s362, 2
      %s364 = smul.addr %s363, 8
      %s365 = scalar_lea.vmem %s6, %s364
      %p366 = pneg %p187
      %p367 = pneg %p184
      %p368 = pneg %p208
      %p369 = pneg %p205
      %p370 = pneg %p229
      %p371 = pneg %p226
      %p372 = pneg %p255
      %p373 = pneg %p252
      %p374 = scmp.lt.s32.totalorder %s20, 1
      %s375 = scalar_select %p374, %s20, 1
      %s376 = smul.addr %s375, 2
      %s377 = smul.addr %s376, 8
      %s378 = scalar_lea.vmem %s9, %s377
      %p379 = scmp.lt.s32.totalorder %s20, 1
      %s380 = scalar_select %p379, %s20, 1
      %s381 = smul.addr %s380, 8
      %s382 = smul.addr %s381, 8
      %s383 = scalar_lea.vmem %s0, %s382
      %p384 = scmp.lt.s32.totalorder %s20, 1
      %s385 = scalar_select %p384, %s20, 1
      %s386 = smul.addr %s385, 8
      %s387 = smul.addr %s386, 8
      %s388 = scalar_lea.vmem %s1, %s387
      %p389 = scmp.lt.s32.totalorder %s20, 1
      %s390 = scalar_select %p389, %s20, 1
      %s391 = smul.addr %s390, 8
      %s392 = smul.addr %s391, 8
      %s393 = scalar_lea.vmem %s2, %s392
      %p394 = scmp.lt.s32.totalorder %s20, 1
      %s395 = scalar_select %p394, %s20, 1
      %s396 = scalar_lea.vmem %s3, %s395
      %p397 = scmp.lt.s32.totalorder %s20, 1
      %s398 = scalar_select %p397, %s20, 1
      %s399 = smul.addr %s398, 2
      %s400 = smul.addr %s399, 8
      %s401 = scalar_lea.vmem %s6, %s400
      %p402 = scmp.lt.s32.totalorder %s20, 1
      %s403 = scalar_select %p402, %s20, 1
      %s404 = smul.addr %s403, 2
      %s405 = smul.addr %s404, 8
      %s406 = scalar_lea.vmem %s9, %s405
      %v408 = vlaneseq
      %v409 = vshrl.u32 %v408, 7
      %v410 = vadd.s32 %v409, 8
      %v411 = vlaneseq
      %v412 = vand.u32 %v411, 127
      %vm413 = vcmp.gt.s32.totalorder %v412, %v409
      %vm414 = vcmp.gt.s32.totalorder %v412, %v410
      %v415 = vsel %vm413, -1e+30, 0.0
      %v416 = vsel %vm414, -1e+30, 0.0
      %v417 = vld [vmem:[%s396] sm:$0x1]
      %v418 = vld [vmem:[%s383] sm:$0xff]
      %v419 = vld [vmem:[%s383 + $0x8] sm:$0xff]
      %v420 = vpack.c.bf16 %v419, %v418
      %v421 = vld [vmem:[%s388] sm:$0xff]
      %v422 = vld [vmem:[%s388 + $0x8] sm:$0xff]
      %v423 = vpack.c.bf16 %v422, %v421
      %v424 = vld [vmem:[%s393] sm:$0xff]
      %v425 = vld [vmem:[%s393 + $0x8] sm:$0xff]
      %v426 = vpack.c.bf16 %v425, %v424
      %vm427 = vcmask 64512
      %v429 = vsel %vm427, %v420, 0
      %v432 = vsel %vm427, %v423, 0
      %434 = vmatprep.subr.bf16.mxu0 0
      %435 = vmatpush1.bf16.xpose.msra.mxu0 %v432
      %436 = vmatprep.subr.bf16.mxu0 0
      %437 = vmatpush1.bf16.xpose.msra.mxu0 0
      %438 = vmatprep.subr.bf16.mxu0 0
      %439 = vmatpush1.bf16.xpose.msra.mxu0 0
      %440 = vmatprep.subr.bf16.mxu0 0
      %441 = vmatpush1.bf16.xpose.msra.mxu0 0
      %442 = vmatprep.subr.bf16.mxu0 0
      %443 = vmatpush1.bf16.xpose.msra.mxu0 0
      %444 = vmatprep.subr.bf16.mxu0 0
      %445 = vmatpush1.bf16.xpose.msra.mxu0 0
      %446 = vmatprep.subr.bf16.mxu0 0
      %447 = vmatpush1.bf16.xpose.msra.mxu0 0
      %448 = vmatprep.subr.bf16.mxu0 0
      %449 = vmatpush1.bf16.xpose.msra.mxu0 0
      %450 = vmatprep.subr.bf16.mxu0 0
      %451 = vmatpush1.bf16.xpose.msra.mxu0 0
      %452 = vmatprep.subr.bf16.mxu0 0
      %453 = vmatpush1.bf16.xpose.msra.mxu0 0
      %454 = vmatprep.subr.bf16.mxu0 0
      %455 = vmatpush1.bf16.xpose.msra.mxu0 0
      %456 = vmatprep.subr.bf16.mxu0 0
      %457 = vmatpush1.bf16.xpose.msra.mxu0 0
      %458 = vmatprep.subr.bf16.mxu0 0
      %459 = vmatpush1.bf16.xpose.msra.mxu0 0
      %460 = vmatprep.subr.bf16.mxu0 0
      %461 = vmatpush1.bf16.xpose.msra.mxu0 0
      %462 = vmatprep.subr.bf16.mxu0 0
      %463 = vmatpush1.bf16.xpose.msra.mxu0 0
      %464 = vmatprep.subr.bf16.mxu0 0
      %465 = vmatpush1.bf16.xpose.msra.mxu0 0
      %466 = vmatprep.mubr.bf16.mxu0 0
      %467 = vmatmul.mubr.bf16.gmra.mrb[0].mxu0 %v429
      %v468 = vpop.f32.mrb[0].mxu0
      %v469 = vadd.f32 0.0, %v468
      %v470 = vpop.f32.mrb[0].mxu0
      %v471 = vpop.f32.mrb[0].mxu0
      %v472 = vadd.f32 0.0, %v471
      %v473 = vpop.f32.mrb[0].mxu0
      %474 = vdwg.mxu0
      %v475 = vmul.f32 %v469, 0.35355338
      %v476 = vmul.f32 %v472, 0.35355338
      %v477 = vadd.f32 %v475, %v415
      %v478 = vadd.f32 %v476, %v416
      %v480 = vlaneseq
      %v481 = vshrl.u32 %v480, 7
      %v482 = vsub.s32 0, %v481
      %v483 = vrot.slane %v417, %v482
      %v485 = vadd.f32 %v477, %v483
      %v486 = vadd.f32 %v478, %v483
      %vm487 = vcmask 130048
      %v488 = vsel %vm487, %v485, -inf
      %489 = vmax.xlane.f32.xlu0 %v488
      %v490 = vpop.xlane.xlu0 %489
      %v491 = vsel %vm487, %v486, -inf
      %492 = vmax.xlane.f32.xlu0 %v491
      %v493 = vpop.xlane.xlu0 %492
      %v494 = vsub.f32 %v485, %v490
      %v495 = vsub.f32 %v486, %v493
      %v496 = vmul.f32 %v494, 1.442695
      %v497 = vpow.pop %v496
      %v498 = vmul.f32 %v495, 1.442695
      %v499 = vpow.pop %v498
      %v500 = vsel %vm487, %v497, 0.0
      %501 = vadd.xlane.f32.xlu0 %v500
      %v502 = vpop.xlane.xlu0 %501
      %v503 = vsel %vm487, %v499, 0.0
      %504 = vadd.xlane.f32.xlu0 %v503
      %v505 = vpop.xlane.xlu0 %504
      %v506 = vrcp.pop %v502
      %v507 = vrcp.pop %v505
      %v508 = vmul.f32 %v497, %v506
      %v509 = vmul.f32 %v499, %v507
      %v510 = vpack.c.bf16 %v509, %v508
      %v512 = vsel %vm487, %v510, 0
      %514 = vmatprep.subr.bf16.mxu0 0
      %515 = vmatpush1.bf16.msra.mxu0 %v426
      %516 = vmatprep.subr.bf16.mxu0 0
      %517 = vmatpush1.bf16.msra.mxu0 0
      %518 = vmatprep.subr.bf16.mxu0 0
      %519 = vmatpush1.bf16.msra.mxu0 0
      %520 = vmatprep.subr.bf16.mxu0 0
      %521 = vmatpush1.bf16.msra.mxu0 0
      %522 = vmatprep.subr.bf16.mxu0 0
      %523 = vmatpush1.bf16.msra.mxu0 0
      %524 = vmatprep.subr.bf16.mxu0 0
      %525 = vmatpush1.bf16.msra.mxu0 0
      %526 = vmatprep.subr.bf16.mxu0 0
      %527 = vmatpush1.bf16.msra.mxu0 0
      %528 = vmatprep.subr.bf16.mxu0 0
      %529 = vmatpush1.bf16.msra.mxu0 0
      %530 = vmatprep.subr.bf16.mxu0 0
      %531 = vmatpush1.bf16.msra.mxu0 0
      %532 = vmatprep.subr.bf16.mxu0 0
      %533 = vmatpush1.bf16.msra.mxu0 0
      %534 = vmatprep.subr.bf16.mxu0 0
      %535 = vmatpush1.bf16.msra.mxu0 0
      %536 = vmatprep.subr.bf16.mxu0 0
      %537 = vmatpush1.bf16.msra.mxu0 0
      %538 = vmatprep.subr.bf16.mxu0 0
      %539 = vmatpush1.bf16.msra.mxu0 0
      %540 = vmatprep.subr.bf16.mxu0 0
      %541 = vmatpush1.bf16.msra.mxu0 0
      %542 = vmatprep.subr.bf16.mxu0 0
      %543 = vmatpush1.bf16.msra.mxu0 0
      %544 = vmatprep.subr.bf16.mxu0 0
      %545 = vmatpush1.bf16.msra.mxu0 0
      %546 = vmatprep.mubr.bf16.mxu0 0
      %547 = vmatmul.mubr.bf16.gmra.mrb[0].mxu0 %v512
      %v548 = vpop.f32.mrb[0].mxu0
      %v549 = vadd.f32 0.0, %v548
      %v550 = vpop.f32.mrb[0].mxu0
      %v551 = vpop.f32.mrb[0].mxu0
      %v552 = vadd.f32 0.0, %v551
      %v553 = vpop.f32.mrb[0].mxu0
      %554 = vdwg.mxu0
      %v555 = vpack.c.bf16 %v552, %v549
      %v556 = vld [vmem:[%s4] sm:$0xf]
      %s557 = scalar_lea.vmem %s383, 16
      %v558 = vld [vmem:[%s557] sm:$0xff]
      %v559 = vld [vmem:[%s557 + $0x8] sm:$0xff]
      %v560 = vpack.c.bf16 %v559, %v558
      %s561 = scalar_lea.vmem %s388, 16
      %v562 = vld [vmem:[%s561] sm:$0xff]
      %v563 = vld [vmem:[%s561 + $0x8] sm:$0xff]
      %v564 = vpack.c.bf16 %v563, %v562
      %s565 = scalar_lea.vmem %s393, 16
      %v566 = vld [vmem:[%s565] sm:$0xff]
      %v567 = vld [vmem:[%s565 + $0x8] sm:$0xff]
      %v568 = vpack.c.bf16 %v567, %v566
      %v570 = vsel %vm427, %v560, 0
      %v573 = vsel %vm427, %v564, 0
      %575 = vmatprep.subr.bf16.mxu0 0
      %576 = vmatpush1.bf16.xpose.msra.mxu0 %v573
      %577 = vmatprep.subr.bf16.mxu0 0
      %578 = vmatpush1.bf16.xpose.msra.mxu0 0
      %579 = vmatprep.subr.bf16.mxu0 0
      %580 = vmatpush1.bf16.xpose.msra.mxu0 0
      %581 = vmatprep.subr.bf16.mxu0 0
      %582 = vmatpush1.bf16.xpose.msra.mxu0 0
      %583 = vmatprep.subr.bf16.mxu0 0
      %584 = vmatpush1.bf16.xpose.msra.mxu0 0
      %585 = vmatprep.subr.bf16.mxu0 0
      %586 = vmatpush1.bf16.xpose.msra.mxu0 0
      %587 = vmatprep.subr.bf16.mxu0 0
      %588 = vmatpush1.bf16.xpose.msra.mxu0 0
      %589 = vmatprep.subr.bf16.mxu0 0
      %590 = vmatpush1.bf16.xpose.msra.mxu0 0
      %591 = vmatprep.subr.bf16.mxu0 0
      %592 = vmatpush1.bf16.xpose.msra.mxu0 0
      %593 = vmatprep.subr.bf16.mxu0 0
      %594 = vmatpush1.bf16.xpose.msra.mxu0 0
      %595 = vmatprep.subr.bf16.mxu0 0
      %596 = vmatpush1.bf16.xpose.msra.mxu0 0
      %597 = vmatprep.subr.bf16.mxu0 0
      %598 = vmatpush1.bf16.xpose.msra.mxu0 0
      %599 = vmatprep.subr.bf16.mxu0 0
      %600 = vmatpush1.bf16.xpose.msra.mxu0 0
      %601 = vmatprep.subr.bf16.mxu0 0
      %602 = vmatpush1.bf16.xpose.msra.mxu0 0
      %603 = vmatprep.subr.bf16.mxu0 0
      %604 = vmatpush1.bf16.xpose.msra.mxu0 0
      %605 = vmatprep.subr.bf16.mxu0 0
      %606 = vmatpush1.bf16.xpose.msra.mxu0 0
      %607 = vmatprep.mubr.bf16.mxu0 0
      %608 = vmatmul.mubr.bf16.gmra.mrb[0].mxu0 %v570
      %v609 = vpop.f32.mrb[0].mxu0
      %v610 = vadd.f32 0.0, %v609
      %v611 = vpop.f32.mrb[0].mxu0
      %v612 = vpop.f32.mrb[0].mxu0
      %v613 = vadd.f32 0.0, %v612
      %v614 = vpop.f32.mrb[0].mxu0
      %615 = vdwg.mxu0
      %v616 = vmul.f32 %v610, 0.35355338
      %v617 = vmul.f32 %v613, 0.35355338
      %v618 = vadd.f32 %v616, %v415
      %v619 = vadd.f32 %v617, %v416
      %v620 = vadd.f32 %v618, %v483
      %v621 = vadd.f32 %v619, %v483
      %v622 = vsel %vm487, %v620, -inf
      %623 = vmax.xlane.f32.xlu0 %v622
      %v624 = vpop.xlane.xlu0 %623
      %v625 = vsel %vm487, %v621, -inf
      %626 = vmax.xlane.f32.xlu0 %v625
      %v627 = vpop.xlane.xlu0 %626
      %v628 = vsub.f32 %v620, %v624
      %v629 = vsub.f32 %v621, %v627
      %v630 = vmul.f32 %v628, 1.442695
      %v631 = vpow.pop %v630
      %v632 = vmul.f32 %v629, 1.442695
      %v633 = vpow.pop %v632
      %v634 = vsel %vm487, %v631, 0.0
      %635 = vadd.xlane.f32.xlu0 %v634
      %v636 = vpop.xlane.xlu0 %635
      %v637 = vsel %vm487, %v633, 0.0
      %638 = vadd.xlane.f32.xlu0 %v637
      %v639 = vpop.xlane.xlu0 %638
      %v640 = vrcp.pop %v636
      %v641 = vrcp.pop %v639
      %v642 = vmul.f32 %v631, %v640
      %v643 = vmul.f32 %v633, %v641
      %v644 = vpack.c.bf16 %v643, %v642
      %v646 = vsel %vm487, %v644, 0
      %648 = vmatprep.subr.bf16.mxu0 0
      %649 = vmatpush1.bf16.msra.mxu0 %v568
      %650 = vmatprep.subr.bf16.mxu0 0
      %651 = vmatpush1.bf16.msra.mxu0 0
      %652 = vmatprep.subr.bf16.mxu0 0
      %653 = vmatpush1.bf16.msra.mxu0 0
      %654 = vmatprep.subr.bf16.mxu0 0
      %655 = vmatpush1.bf16.msra.mxu0 0
      %656 = vmatprep.subr.bf16.mxu0 0
      %657 = vmatpush1.bf16.msra.mxu0 0
      %658 = vmatprep.subr.bf16.mxu0 0
      %659 = vmatpush1.bf16.msra.mxu0 0
      %660 = vmatprep.subr.bf16.mxu0 0
      %661 = vmatpush1.bf16.msra.mxu0 0
      %662 = vmatprep.subr.bf16.mxu0 0
      %663 = vmatpush1.bf16.msra.mxu0 0
      %664 = vmatprep.subr.bf16.mxu0 0
      %665 = vmatpush1.bf16.msra.mxu0 0
      %666 = vmatprep.subr.bf16.mxu0 0
      %667 = vmatpush1.bf16.msra.mxu0 0
      %668 = vmatprep.subr.bf16.mxu0 0
      %669 = vmatpush1.bf16.msra.mxu0 0
      %670 = vmatprep.subr.bf16.mxu0 0
      %671 = vmatpush1.bf16.msra.mxu0 0
      %672 = vmatprep.subr.bf16.mxu0 0
      %673 = vmatpush1.bf16.msra.mxu0 0
      %674 = vmatprep.subr.bf16.mxu0 0
      %675 = vmatpush1.bf16.msra.mxu0 0
      %676 = vmatprep.subr.bf16.mxu0 0
      %677 = vmatpush1.bf16.msra.mxu0 0
      %678 = vmatprep.subr.bf16.mxu0 0
      %679 = vmatpush1.bf16.msra.mxu0 0
      %680 = vmatprep.mubr.bf16.mxu0 0
      %681 = vmatmul.mubr.bf16.gmra.mrb[0].mxu0 %v646
      %v682 = vpop.f32.mrb[0].mxu0
      %v683 = vadd.f32 0.0, %v682
      %v684 = vpop.f32.mrb[0].mxu0
      %v685 = vpop.f32.mrb[0].mxu0
      %v686 = vadd.f32 0.0, %v685
      %v687 = vpop.f32.mrb[0].mxu0
      %688 = vdwg.mxu0
      %v689 = vpack.c.bf16 %v686, %v683
      %s690 = scalar_lea.vmem %s4, 4
      %v691 = vld [vmem:[%s690] sm:$0xf]
      %v693 = vsel %vm427, %v689, 0
      %vm695 = vcmask 1043456
      %v697 = vsel %vm695, %v691, 0
      %699 = vmatprep.subr.bf16.mxu0 0
      %700 = vmatpush1.bf16.msra.mxu0 %v697
      %701 = vmatprep.subr.bf16.mxu0 0
      %702 = vmatpush1.bf16.msra.mxu0 0
      %703 = vmatprep.subr.bf16.mxu0 0
      %704 = vmatpush1.bf16.msra.mxu0 0
      %705 = vmatprep.subr.bf16.mxu0 0
      %706 = vmatpush1.bf16.msra.mxu0 0
      %707 = vmatprep.subr.bf16.mxu0 0
      %708 = vmatpush1.bf16.msra.mxu0 0
      %709 = vmatprep.subr.bf16.mxu0 0
      %710 = vmatpush1.bf16.msra.mxu0 0
      %711 = vmatprep.subr.bf16.mxu0 0
      %712 = vmatpush1.bf16.msra.mxu0 0
      %713 = vmatprep.subr.bf16.mxu0 0
      %714 = vmatpush1.bf16.msra.mxu0 0
      %715 = vmatprep.subr.bf16.mxu0 0
      %716 = vmatpush1.bf16.msra.mxu0 0
      %717 = vmatprep.subr.bf16.mxu0 0
      %718 = vmatpush1.bf16.msra.mxu0 0
      %719 = vmatprep.subr.bf16.mxu0 0
      %720 = vmatpush1.bf16.msra.mxu0 0
      %721 = vmatprep.subr.bf16.mxu0 0
      %722 = vmatpush1.bf16.msra.mxu0 0
      %723 = vmatprep.subr.bf16.mxu0 0
      %724 = vmatpush1.bf16.msra.mxu0 0
      %725 = vmatprep.subr.bf16.mxu0 0
      %726 = vmatpush1.bf16.msra.mxu0 0
      %727 = vmatprep.subr.bf16.mxu0 0
      %728 = vmatpush1.bf16.msra.mxu0 0
      %729 = vmatprep.subr.bf16.mxu0 0
      %730 = vmatpush1.bf16.msra.mxu0 0
      %731 = vmatprep.mubr.bf16.mxu0 0
      %732 = vmatmul.mubr.bf16.gmra.mrb[0].mxu0 %v693
      %v733 = vpop.f32.mrb[0].mxu0
      %v734 = vadd.f32 0.0, %v733
      %v735 = vpop.f32.mrb[0].mxu0
      %v736 = vpop.f32.mrb[0].mxu0
      %v737 = vadd.f32 0.0, %v736
      %v738 = vpop.f32.mrb[0].mxu0
      %739 = vdwg.mxu0
      %v741 = vsel %vm427, %v555, 0
      %v744 = vsel %vm695, %v556, 0
      %746 = vmatprep.subr.bf16.mxu0 0
      %747 = vmatpush1.bf16.msra.mxu0 %v744
      %748 = vmatprep.subr.bf16.mxu0 0
      %749 = vmatpush1.bf16.msra.mxu0 0
      %750 = vmatprep.subr.bf16.mxu0 0
      %751 = vmatpush1.bf16.msra.mxu0 0
      %752 = vmatprep.subr.bf16.mxu0 0
      %753 = vmatpush1.bf16.msra.mxu0 0
      %754 = vmatprep.subr.bf16.mxu0 0
      %755 = vmatpush1.bf16.msra.mxu0 0
      %756 = vmatprep.subr.bf16.mxu0 0
      %757 = vmatpush1.bf16.msra.mxu0 0
      %758 = vmatprep.subr.bf16.mxu0 0
      %759 = vmatpush1.bf16.msra.mxu0 0
      %760 = vmatprep.subr.bf16.mxu0 0
      %761 = vmatpush1.bf16.msra.mxu0 0
      %762 = vmatprep.subr.bf16.mxu0 0
      %763 = vmatpush1.bf16.msra.mxu0 0
      %764 = vmatprep.subr.bf16.mxu0 0
      %765 = vmatpush1.bf16.msra.mxu0 0
      %766 = vmatprep.subr.bf16.mxu0 0
      %767 = vmatpush1.bf16.msra.mxu0 0
      %768 = vmatprep.subr.bf16.mxu0 0
      %769 = vmatpush1.bf16.msra.mxu0 0
      %770 = vmatprep.subr.bf16.mxu0 0
      %771 = vmatpush1.bf16.msra.mxu0 0
      %772 = vmatprep.subr.bf16.mxu0 0
      %773 = vmatpush1.bf16.msra.mxu0 0
      %774 = vmatprep.subr.bf16.mxu0 0
      %775 = vmatpush1.bf16.msra.mxu0 0
      %776 = vmatprep.subr.bf16.mxu0 0
      %777 = vmatpush1.bf16.msra.mxu0 0
      %778 = vmatprep.mubr.bf16.mxu0 0
      %779 = vmatmul.mubr.bf16.gmra.mrb[0].mxu0 %v741
      %v780 = vpop.f32.mrb[0].mxu0
      %v781 = vadd.f32 %v734, %v780
      %v782 = vpop.f32.mrb[0].mxu0
      %v783 = vpop.f32.mrb[0].mxu0
      %v784 = vadd.f32 %v737, %v783
      %v785 = vpop.f32.mrb[0].mxu0
      %786 = vdwg.mxu0
      %s787 = scalar_lea.vmem %s383, 32
      %v788 = vld [vmem:[%s787] sm:$0xff]
      %v789 = vld [vmem:[%s787 + $0x8] sm:$0xff]
      %v790 = vpack.c.bf16 %v789, %v788
      %s791 = scalar_lea.vmem %s388, 32
      %v792 = vld [vmem:[%s791] sm:$0xff]
      %v793 = vld [vmem:[%s791 + $0x8] sm:$0xff]
      %v794 = vpack.c.bf16 %v793, %v792
      %s795 = scalar_lea.vmem %s393, 32
      %v796 = vld [vmem:[%s795] sm:$0xff]
      %v797 = vld [vmem:[%s795 + $0x8] sm:$0xff]
      %v798 = vpack.c.bf16 %v797, %v796
      %v800 = vsel %vm427, %v790, 0
      %v803 = vsel %vm427, %v794, 0
      %805 = vmatprep.subr.bf16.mxu0 0
      %806 = vmatpush1.bf16.xpose.msra.mxu0 %v803
      %807 = vmatprep.subr.bf16.mxu0 0
      %808 = vmatpush1.bf16.xpose.msra.mxu0 0
      %809 = vmatprep.subr.bf16.mxu0 0
      %810 = vmatpush1.bf16.xpose.msra.mxu0 0
      %811 = vmatprep.subr.bf16.mxu0 0
      %812 = vmatpush1.bf16.xpose.msra.mxu0 0
      %813 = vmatprep.subr.bf16.mxu0 0
      %814 = vmatpush1.bf16.xpose.msra.mxu0 0
      %815 = vmatprep.subr.bf16.mxu0 0
      %816 = vmatpush1.bf16.xpose.msra.mxu0 0
      %817 = vmatprep.subr.bf16.mxu0 0
      %818 = vmatpush1.bf16.xpose.msra.mxu0 0
      %819 = vmatprep.subr.bf16.mxu0 0
      %820 = vmatpush1.bf16.xpose.msra.mxu0 0
      %821 = vmatprep.subr.bf16.mxu0 0
      %822 = vmatpush1.bf16.xpose.msra.mxu0 0
      %823 = vmatprep.subr.bf16.mxu0 0
      %824 = vmatpush1.bf16.xpose.msra.mxu0 0
      %825 = vmatprep.subr.bf16.mxu0 0
      %826 = vmatpush1.bf16.xpose.msra.mxu0 0
      %827 = vmatprep.subr.bf16.mxu0 0
      %828 = vmatpush1.bf16.xpose.msra.mxu0 0
      %829 = vmatprep.subr.bf16.mxu0 0
      %830 = vmatpush1.bf16.xpose.msra.mxu0 0
      %831 = vmatprep.subr.bf16.mxu0 0
      %832 = vmatpush1.bf16.xpose.msra.mxu0 0
      %833 = vmatprep.subr.bf16.mxu0 0
      %834 = vmatpush1.bf16.xpose.msra.mxu0 0
      %835 = vmatprep.subr.bf16.mxu0 0
      %836 = vmatpush1.bf16.xpose.msra.mxu0 0
      %837 = vmatprep.mubr.bf16.mxu0 0
      %838 = vmatmul.mubr.bf16.gmra.mrb[0].mxu0 %v800
      %v839 = vpop.f32.mrb[0].mxu0
      %v840 = vadd.f32 0.0, %v839
      %v841 = vpop.f32.mrb[0].mxu0
      %v842 = vpop.f32.mrb[0].mxu0
      %v843 = vadd.f32 0.0, %v842
      %v844 = vpop.f32.mrb[0].mxu0
      %845 = vdwg.mxu0
      %v846 = vmul.f32 %v840, 0.35355338
      %v847 = vmul.f32 %v843, 0.35355338
      %v848 = vadd.f32 %v846, %v415
      %v849 = vadd.f32 %v847, %v416
      %v850 = vadd.f32 %v848, %v483
      %v851 = vadd.f32 %v849, %v483
      %v852 = vsel %vm487, %v850, -inf
      %853 = vmax.xlane.f32.xlu0 %v852
      %v854 = vpop.xlane.xlu0 %853
      %v855 = vsel %vm487, %v851, -inf
      %856 = vmax.xlane.f32.xlu0 %v855
      %v857 = vpop.xlane.xlu0 %856
      %v858 = vsub.f32 %v850, %v854
      %v859 = vsub.f32 %v851, %v857
      %v860 = vmul.f32 %v858, 1.442695
      %v861 = vpow.pop %v860
      %v862 = vmul.f32 %v859, 1.442695
      %v863 = vpow.pop %v862
      %v864 = vsel %vm487, %v861, 0.0
      %865 = vadd.xlane.f32.xlu0 %v864
      %v866 = vpop.xlane.xlu0 %865
      %v867 = vsel %vm487, %v863, 0.0
      %868 = vadd.xlane.f32.xlu0 %v867
      %v869 = vpop.xlane.xlu0 %868
      %v870 = vrcp.pop %v866
      %v871 = vrcp.pop %v869
      %v872 = vmul.f32 %v861, %v870
      %v873 = vmul.f32 %v863, %v871
      %v874 = vpack.c.bf16 %v873, %v872
      %v876 = vsel %vm487, %v874, 0
      %878 = vmatprep.subr.bf16.mxu0 0
      %879 = vmatpush1.bf16.msra.mxu0 %v798
      %880 = vmatprep.subr.bf16.mxu0 0
      %881 = vmatpush1.bf16.msra.mxu0 0
      %882 = vmatprep.subr.bf16.mxu0 0
      %883 = vmatpush1.bf16.msra.mxu0 0
      %884 = vmatprep.subr.bf16.mxu0 0
      %885 = vmatpush1.bf16.msra.mxu0 0
      %886 = vmatprep.subr.bf16.mxu0 0
      %887 = vmatpush1.bf16.msra.mxu0 0
      %888 = vmatprep.subr.bf16.mxu0 0
      %889 = vmatpush1.bf16.msra.mxu0 0
      %890 = vmatprep.subr.bf16.mxu0 0
      %891 = vmatpush1.bf16.msra.mxu0 0
      %892 = vmatprep.subr.bf16.mxu0 0
      %893 = vmatpush1.bf16.msra.mxu0 0
      %894 = vmatprep.subr.bf16.mxu0 0
      %895 = vmatpush1.bf16.msra.mxu0 0
      %896 = vmatprep.subr.bf16.mxu0 0
      %897 = vmatpush1.bf16.msra.mxu0 0
      %898 = vmatprep.subr.bf16.mxu0 0
      %899 = vmatpush1.bf16.msra.mxu0 0
      %900 = vmatprep.subr.bf16.mxu0 0
      %901 = vmatpush1.bf16.msra.mxu0 0
      %902 = vmatprep.subr.bf16.mxu0 0
      %903 = vmatpush1.bf16.msra.mxu0 0
      %904 = vmatprep.subr.bf16.mxu0 0
      %905 = vmatpush1.bf16.msra.mxu0 0
      %906 = vmatprep.subr.bf16.mxu0 0
      %907 = vmatpush1.bf16.msra.mxu0 0
      %908 = vmatprep.subr.bf16.mxu0 0
      %909 = vmatpush1.bf16.msra.mxu0 0
      %910 = vmatprep.mubr.bf16.mxu0 0
      %911 = vmatmul.mubr.bf16.gmra.mrb[0].mxu0 %v876
      %v912 = vpop.f32.mrb[0].mxu0
      %v913 = vadd.f32 0.0, %v912
      %v914 = vpop.f32.mrb[0].mxu0
      %v915 = vpop.f32.mrb[0].mxu0
      %v916 = vadd.f32 0.0, %v915
      %v917 = vpop.f32.mrb[0].mxu0
      %918 = vdwg.mxu0
      %v919 = vpack.c.bf16 %v916, %v913
      %s920 = scalar_lea.vmem %s4, 8
      %v921 = vld [vmem:[%s920] sm:$0xf]
      %v923 = vsel %vm427, %v919, 0
      %v926 = vsel %vm695, %v921, 0
      %928 = vmatprep.subr.bf16.mxu0 0
      %929 = vmatpush1.bf16.msra.mxu0 %v926
      %930 = vmatprep.subr.bf16.mxu0 0
      %931 = vmatpush1.bf16.msra.mxu0 0
      %932 = vmatprep.subr.bf16.mxu0 0
      %933 = vmatpush1.bf16.msra.mxu0 0
      %934 = vmatprep.subr.bf16.mxu0 0
      %935 = vmatpush1.bf16.msra.mxu0 0
      %936 = vmatprep.subr.bf16.mxu0 0
      %937 = vmatpush1.bf16.msra.mxu0 0
      %938 = vmatprep.subr.bf16.mxu0 0
      %939 = vmatpush1.bf16.msra.mxu0 0
      %940 = vmatprep.subr.bf16.mxu0 0
      %941 = vmatpush1.bf16.msra.mxu0 0
      %942 = vmatprep.subr.bf16.mxu0 0
      %943 = vmatpush1.bf16.msra.mxu0 0
      %944 = vmatprep.subr.bf16.mxu0 0
      %945 = vmatpush1.bf16.msra.mxu0 0
      %946 = vmatprep.subr.bf16.mxu0 0
      %947 = vmatpush1.bf16.msra.mxu0 0
      %948 = vmatprep.subr.bf16.mxu0 0
      %949 = vmatpush1.bf16.msra.mxu0 0
      %950 = vmatprep.subr.bf16.mxu0 0
      %951 = vmatpush1.bf16.msra.mxu0 0
      %952 = vmatprep.subr.bf16.mxu0 0
      %953 = vmatpush1.bf16.msra.mxu0 0
      %954 = vmatprep.subr.bf16.mxu0 0
      %955 = vmatpush1.bf16.msra.mxu0 0
      %956 = vmatprep.subr.bf16.mxu0 0
      %957 = vmatpush1.bf16.msra.mxu0 0
      %958 = vmatprep.subr.bf16.mxu0 0
      %959 = vmatpush1.bf16.msra.mxu0 0
      %960 = vmatprep.mubr.bf16.mxu0 0
      %961 = vmatmul.mubr.bf16.gmra.mrb[0].mxu0 %v923
      %v962 = vpop.f32.mrb[0].mxu0
      %v963 = vadd.f32 0.0, %v962
      %v964 = vpop.f32.mrb[0].mxu0
      %v965 = vpop.f32.mrb[0].mxu0
      %v966 = vadd.f32 0.0, %v965
      %v967 = vpop.f32.mrb[0].mxu0
      %968 = vdwg.mxu0
      %v969 = vadd.f32 %v781, %v963
      %v970 = vadd.f32 %v784, %v966
      %s971 = scalar_lea.vmem %s383, 48
      %v972 = vld [vmem:[%s971] sm:$0xff]
      %v973 = vld [vmem:[%s971 + $0x8] sm:$0xff]
      %v974 = vpack.c.bf16 %v973, %v972
      %s975 = scalar_lea.vmem %s388, 48
      %v976 = vld [vmem:[%s975] sm:$0xff]
      %v977 = vld [vmem:[%s975 + $0x8] sm:$0xff]
      %v978 = vpack.c.bf16 %v977, %v976
      %s979 = scalar_lea.vmem %s393, 48
      %v980 = vld [vmem:[%s979] sm:$0xff]
      %v981 = vld [vmem:[%s979 + $0x8] sm:$0xff]
      %v982 = vpack.c.bf16 %v981, %v980
      %v984 = vsel %vm427, %v974, 0
      %v987 = vsel %vm427, %v978, 0
      %989 = vmatprep.subr.bf16.mxu0 0
      %990 = vmatpush1.bf16.xpose.msra.mxu0 %v987
      %991 = vmatprep.subr.bf16.mxu0 0
      %992 = vmatpush1.bf16.xpose.msra.mxu0 0
      %993 = vmatprep.subr.bf16.mxu0 0
      %994 = vmatpush1.bf16.xpose.msra.mxu0 0
      %995 = vmatprep.subr.bf16.mxu0 0
      %996 = vmatpush1.bf16.xpose.msra.mxu0 0
      %997 = vmatprep.subr.bf16.mxu0 0
      %998 = vmatpush1.bf16.xpose.msra.mxu0 0
      %999 = vmatprep.subr.bf16.mxu0 0
      %1000 = vmatpush1.bf16.xpose.msra.mxu0 0
      %1001 = vmatprep.subr.bf16.mxu0 0
      %1002 = vmatpush1.bf16.xpose.msra.mxu0 0
      %1003 = vmatprep.subr.bf16.mxu0 0
      %1004 = vmatpush1.bf16.xpose.msra.mxu0 0
      %1005 = vmatprep.subr.bf16.mxu0 0
      %1006 = vmatpush1.bf16.xpose.msra.mxu0 0
      %1007 = vmatprep.subr.bf16.mxu0 0
      %1008 = vmatpush1.bf16.xpose.msra.mxu0 0
      %1009 = vmatprep.subr.bf16.mxu0 0
      %1010 = vmatpush1.bf16.xpose.msra.mxu0 0
      %1011 = vmatprep.subr.bf16.mxu0 0
      %1012 = vmatpush1.bf16.xpose.msra.mxu0 0
      %1013 = vmatprep.subr.bf16.mxu0 0
      %1014 = vmatpush1.bf16.xpose.msra.mxu0 0
      %1015 = vmatprep.subr.bf16.mxu0 0
      %1016 = vmatpush1.bf16.xpose.msra.mxu0 0
      %1017 = vmatprep.subr.bf16.mxu0 0
      %1018 = vmatpush1.bf16.xpose.msra.mxu0 0
      %1019 = vmatprep.subr.bf16.mxu0 0
      %1020 = vmatpush1.bf16.xpose.msra.mxu0 0
      %1021 = vmatprep.mubr.bf16.mxu0 0
      %1022 = vmatmul.mubr.bf16.gmra.mrb[0].mxu0 %v984
      %v1023 = vpop.f32.mrb[0].mxu0
      %v1024 = vadd.f32 0.0, %v1023
      %v1025 = vpop.f32.mrb[0].mxu0
      %v1026 = vpop.f32.mrb[0].mxu0
      %v1027 = vadd.f32 0.0, %v1026
      %v1028 = vpop.f32.mrb[0].mxu0
      %1029 = vdwg.mxu0
      %v1030 = vmul.f32 %v1024, 0.35355338
      %v1031 = vmul.f32 %v1027, 0.35355338
      %v1032 = vadd.f32 %v1030, %v415
      %v1033 = vadd.f32 %v1031, %v416
      %v1034 = vadd.f32 %v1032, %v483
      %v1035 = vadd.f32 %v1033, %v483
      %v1036 = vsel %vm487, %v1034, -inf
      %1037 = vmax.xlane.f32.xlu0 %v1036
      %v1038 = vpop.xlane.xlu0 %1037
      %v1039 = vsel %vm487, %v1035, -inf
      %1040 = vmax.xlane.f32.xlu0 %v1039
      %v1041 = vpop.xlane.xlu0 %1040
      %v1042 = vsub.f32 %v1034, %v1038
      %v1043 = vsub.f32 %v1035, %v1041
      %v1044 = vmul.f32 %v1042, 1.442695
      %v1045 = vpow.pop %v1044
      %v1046 = vmul.f32 %v1043, 1.442695
      %v1047 = vpow.pop %v1046
      %v1048 = vsel %vm487, %v1045, 0.0
      %1049 = vadd.xlane.f32.xlu0 %v1048
      %v1050 = vpop.xlane.xlu0 %1049
      %v1051 = vsel %vm487, %v1047, 0.0
      %1052 = vadd.xlane.f32.xlu0 %v1051
      %v1053 = vpop.xlane.xlu0 %1052
      %v1054 = vrcp.pop %v1050
      %v1055 = vrcp.pop %v1053
      %v1056 = vmul.f32 %v1045, %v1054
      %v1057 = vmul.f32 %v1047, %v1055
      %v1058 = vpack.c.bf16 %v1057, %v1056
      %v1060 = vsel %vm487, %v1058, 0
      %1062 = vmatprep.subr.bf16.mxu0 0
      %1063 = vmatpush1.bf16.msra.mxu0 %v982
      %1064 = vmatprep.subr.bf16.mxu0 0
      %1065 = vmatpush1.bf16.msra.mxu0 0
      %1066 = vmatprep.subr.bf16.mxu0 0
      %1067 = vmatpush1.bf16.msra.mxu0 0
      %1068 = vmatprep.subr.bf16.mxu0 0
      %1069 = vmatpush1.bf16.msra.mxu0 0
      %1070 = vmatprep.subr.bf16.mxu0 0
      %1071 = vmatpush1.bf16.msra.mxu0 0
      %1072 = vmatprep.subr.bf16.mxu0 0
      %1073 = vmatpush1.bf16.msra.mxu0 0
      %1074 = vmatprep.subr.bf16.mxu0 0
      %1075 = vmatpush1.bf16.msra.mxu0 0
      %1076 = vmatprep.subr.bf16.mxu0 0
      %1077 = vmatpush1.bf16.msra.mxu0 0
      %1078 = vmatprep.subr.bf16.mxu0 0
      %1079 = vmatpush1.bf16.msra.mxu0 0
      %1080 = vmatprep.subr.bf16.mxu0 0
      %1081 = vmatpush1.bf16.msra.mxu0 0
      %1082 = vmatprep.subr.bf16.mxu0 0
      %1083 = vmatpush1.bf16.msra.mxu0 0
      %1084 = vmatprep.subr.bf16.mxu0 0
      %1085 = vmatpush1.bf16.msra.mxu0 0
      %1086 = vmatprep.subr.bf16.mxu0 0
      %1087 = vmatpush1.bf16.msra.mxu0 0
      %1088 = vmatprep.subr.bf16.mxu0 0
      %1089 = vmatpush1.bf16.msra.mxu0 0
      %1090 = vmatprep.subr.bf16.mxu0 0
      %1091 = vmatpush1.bf16.msra.mxu0 0
      %1092 = vmatprep.subr.bf16.mxu0 0
      %1093 = vmatpush1.bf16.msra.mxu0 0
      %1094 = vmatprep.mubr.bf16.mxu0 0
      %1095 = vmatmul.mubr.bf16.gmra.mrb[0].mxu0 %v1060
      %v1096 = vpop.f32.mrb[0].mxu0
      %v1097 = vadd.f32 0.0, %v1096
      %v1098 = vpop.f32.mrb[0].mxu0
      %v1099 = vpop.f32.mrb[0].mxu0
      %v1100 = vadd.f32 0.0, %v1099
      %v1101 = vpop.f32.mrb[0].mxu0
      %1102 = vdwg.mxu0
      %v1103 = vpack.c.bf16 %v1100, %v1097
      %s1104 = scalar_lea.vmem %s4, 12
      %v1105 = vld [vmem:[%s1104] sm:$0xf]
      %v1107 = vsel %vm427, %v1103, 0
      %v1110 = vsel %vm695, %v1105, 0
      %1112 = vmatprep.subr.bf16.mxu0 0
      %1113 = vmatpush1.bf16.msra.mxu0 %v1110
      %1114 = vmatprep.subr.bf16.mxu0 0
      %1115 = vmatpush1.bf16.msra.mxu0 0
      %1116 = vmatprep.subr.bf16.mxu0 0
      %1117 = vmatpush1.bf16.msra.mxu0 0
      %1118 = vmatprep.subr.bf16.mxu0 0
      %1119 = vmatpush1.bf16.msra.mxu0 0
      %1120 = vmatprep.subr.bf16.mxu0 0
      %1121 = vmatpush1.bf16.msra.mxu0 0
      %1122 = vmatprep.subr.bf16.mxu0 0
      %1123 = vmatpush1.bf16.msra.mxu0 0
      %1124 = vmatprep.subr.bf16.mxu0 0
      %1125 = vmatpush1.bf16.msra.mxu0 0
      %1126 = vmatprep.subr.bf16.mxu0 0
      %1127 = vmatpush1.bf16.msra.mxu0 0
      %1128 = vmatprep.subr.bf16.mxu0 0
      %1129 = vmatpush1.bf16.msra.mxu0 0
      %1130 = vmatprep.subr.bf16.mxu0 0
      %1131 = vmatpush1.bf16.msra.mxu0 0
      %1132 = vmatprep.subr.bf16.mxu0 0
      %1133 = vmatpush1.bf16.msra.mxu0 0
      %1134 = vmatprep.subr.bf16.mxu0 0
      %1135 = vmatpush1.bf16.msra.mxu0 0
      %1136 = vmatprep.subr.bf16.mxu0 0
      %1137 = vmatpush1.bf16.msra.mxu0 0
      %1138 = vmatprep.subr.bf16.mxu0 0
      %1139 = vmatpush1.bf16.msra.mxu0 0
      %1140 = vmatprep.subr.bf16.mxu0 0
      %1141 = vmatpush1.bf16.msra.mxu0 0
      %1142 = vmatprep.subr.bf16.mxu0 0
      %1143 = vmatpush1.bf16.msra.mxu0 0
      %1144 = vmatprep.mubr.bf16.mxu0 0
      %1145 = vmatmul.mubr.bf16.gmra.mrb[0].mxu0 %v1107
      %v1146 = vpop.f32.mrb[0].mxu0
      %v1147 = vadd.f32 0.0, %v1146
      %v1148 = vpop.f32.mrb[0].mxu0
      %v1149 = vpop.f32.mrb[0].mxu0
      %v1150 = vadd.f32 0.0, %v1149
      %v1151 = vpop.f32.mrb[0].mxu0
      %1152 = vdwg.mxu0
      %v1153 = vadd.f32 %v969, %v1147
      %v1154 = vadd.f32 %v970, %v1150
      %v1155 = vld [vmem:[%s5] sm:$0x1]
      %v1157 = vlaneseq
      %v1158 = vshrl.u32 %v1157, 7
      %v1159 = vsub.s32 0, %v1158
      %v1160 = vrot.slane %v1155, %v1159
      %v1162 = vadd.f32 %v1153, %v1160
      %v1163 = vadd.f32 %v1154, %v1160
      %v1164 = vld [vmem:[%s401] sm:$0xff]
      %v1165 = vld [vmem:[%s401 + $0x8] sm:$0xff]
      %v1166 = vadd.f32 %v1162, %v1164
      %v1167 = vadd.f32 %v1163, %v1165
      %vm1168 = vcmask 261120
      %v1169 = vsel %vm1168, %v1166, 0.0
      %1170 = vadd.xlane.f32.xlu0 %v1169
      %v1171 = vpop.xlane.xlu0 %1170
      %v1172 = vsel %vm1168, %v1167, 0.0
      %1173 = vadd.xlane.f32.xlu0 %v1172
      %v1174 = vpop.xlane.xlu0 %1173
      %v1175 = vrcp.pop 32.0
      %v1176 = vmul.f32 %v1171, %v1175
      %v1177 = vmul.f32 %v1174, %v1175
      %v1178 = vsub.f32 %v1166, %v1176
      %v1179 = vsub.f32 %v1167, %v1177
      %v1180 = vmul.f32 %v1178, %v1178
      %v1181 = vmul.f32 %v1179, %v1179
      %v1182 = vsel %vm1168, %v1180, 0.0
      %1183 = vadd.xlane.f32.xlu0 %v1182
      %v1184 = vpop.xlane.xlu0 %1183
      %v1185 = vsel %vm1168, %v1181, 0.0
      %1186 = vadd.xlane.f32.xlu0 %v1185
      %v1187 = vpop.xlane.xlu0 %1186
      %v1188 = vmul.f32 %v1184, %v1175
      %v1189 = vmul.f32 %v1187, %v1175
      %v1190 = vadd.f32 %v1188, 1e-05
      %v1191 = vadd.f32 %v1189, 1e-05
      %v1192 = vrsqrt.pop %v1190
      %v1193 = vrsqrt.pop %v1191
      %v1194 = vmul.f32 %v1178, %v1192
      %v1195 = vmul.f32 %v1179, %v1193
      %v1196 = vld [vmem:[%s7] sm:$0x1]
      %v1198 = vlaneseq
      %v1199 = vshrl.u32 %v1198, 7
      %v1200 = vsub.s32 0, %v1199
      %v1201 = vrot.slane %v1196, %v1200
      %v1203 = vmul.f32 %v1194, %v1201
      %v1204 = vmul.f32 %v1195, %v1201
      %v1205 = vld [vmem:[%s8] sm:$0x1]
      %v1207 = vlaneseq
      %v1208 = vshrl.u32 %v1207, 7
      %v1209 = vsub.s32 0, %v1208
      %v1210 = vrot.slane %v1205, %v1209
      %v1212 = vadd.f32 %v1203, %v1210
      %v1213 = vadd.f32 %v1204, %v1210
      %1214 = vst.msk [vmem:[%s406] sm:$0xff] %vm1168, %v1212
      %1215 = vst.msk [vmem:[%s406 + $0x8] sm:$0xff] %vm1168, %v1213
      %p1216 = scmp.lt.s32.totalorder %s20, 1
      %s1217 = scalar_select %p1216, %s20, 1
      %s1218 = smul.addr %s1217, 2
      %s1219 = smul.addr %s1218, 8
      %s1220 = scalar_lea.vmem %s9, %s1219
      // Predicated region
      $region57: #{decoder_forward.16} parent=55 // pred_check
        %p1221 = pneg %p252
      $region58: #{decoder_forward.16} parent=55 // pred_check_branch
        %1223 = sbr.rel (%p1221) target = $region60
      $region59: #{decoder_forward.16} parent=55 // pred_region
        _
      $region60: #{decoder_forward.16} parent=55 // pred_fallthru
        _
    $region56: #{decoder_forward.16} parent=5 // pred_fallthru
      _
    %p1224 = scmp.le.s32.totalorder 2, %s15
    // Predicated region
    $region61: #{decoder_forward.16} parent=5 // pred_check
      %p1225 = pneg %p1224
    $region62: #{decoder_forward.16} parent=5 // pred_check_branch
      %1227 = sbr.rel (%p1225) target = $region64
    $region63: #{decoder_forward.16} parent=5 // pred_region
      %s1228 = ssub.s32 %s15, 2
      // Predicated region
      $region65: #{decoder_forward.16} parent=63 // pred_check
        %p1229 = pneg %p258
      $region66: #{decoder_forward.16} parent=63 // pred_check_branch
        %1231 = sbr.rel (%p1229) target = $region68
      $region67: #{decoder_forward.16} parent=63 // pred_region
        %p1232 = scmp.lt.s32.totalorder %s21, 1
        %s1233 = scalar_select %p1232, %s21, 1
        %s1234 = smul.addr %s1233, 2
        %s1235 = smul.addr %s1234, 8
        %s1236 = scalar_lea.vmem %s9, %s1235
      $region68: #{decoder_forward.16} parent=63 // pred_fallthru
        _
    $region64: #{decoder_forward.16} parent=5 // pred_fallthru
      _
  $region6: #{decoder_forward.16} parent=0 // loop_footer
    %s19 = sadd.s32 1, %s15
  $region7: #{decoder_forward.16} parent=0 // loop_footer_branch
    %14 = sbr.rel target = $region3
  $region8: #{decoder_forward.16} parent=0 // loop_exit
    _

// kernel: decoder_forward.20
$region0: #{decoder_forward.20}
  #allocation0 [shape = 'u32[]', space=smem, size = 0x4, offset = 0x4, fixed_abs, tag = 'smem constant byte address 0x4 - core index']
  #allocation1 [shape = 'u32[144,128]{1,0:T(1,128)}', space=vmem, size = 0x12000, scoped, tag = 'internal scratch']
  %s0 = inlined_call_operand.vmem [shape: f32[32,32], index: 0, kind: input, shape index: {}]
  %s1 = inlined_call_operand.vmem [shape: bf16[32,2048], index: 1, kind: input, shape index: {}]
  %s2 = inlined_call_operand.vmem [shape: f32[1,2048], index: 2, kind: input, shape index: {}]
  %s3 = inlined_call_operand.vmem [shape: f32[32,2048], index: 3, kind: output, shape index: {}]
  %s4 = sld [smem:[#allocation0]]
  $region87: #{decoder_forward.20} parent=0
    _
  %s6 = ssub.s32 1, %s4
  %s7 = scalar_select 0, %s6, %s4
  $region1: #{decoder_forward.20} parent=0
    #allocation2 [shape = 'u8[65536]{0}', space=vmem, size = 0x10000, scoped, tag = 'input window, operand 1']
    #allocation3 [shape = 'u8[131072]{0}', space=vmem, size = 0x20000, scoped, tag = 'output window, operand 0']
    loop: start=0, step=1, limit=6
    $region2: #{decoder_forward.20} parent=1 // loop_pre_header
      _
    $region3: #{decoder_forward.20} parent=1 // loop_header
      %s9 = sphi 0, %s13
      %p10 = scmp.ge.s32.totalorder %s9, 6
      %s16 = sphi 0, %s28
      %s17 = sphi 0, %s24
      %s18 = sphi 0, %s16
      %s19 = sphi 0, %s17
      %s20 = sphi 0, %s18
      %s21 = sphi 0, %s19
      %s31 = sphi 0, %s33
      %s34 = sphi 0, %s31
      %s35 = sphi 0, %s34
      %s51 = sphi 0, %s35
      %s57 = sphi 0, %s59
      %s60 = sphi 0, %s57
      %s61 = sphi 0, %s60
      %s77 = sphi 0, %s61
      %s83 = sphi 0, %s85
      %s86 = sphi 0, %s83
      %s87 = sphi 0, %s86
      %s103 = sphi 0, %s87
      %s111 = sphi 0, %s113
      %s114 = sphi 0, %s111
      %s115 = sphi 0, %s114
      %s131 = sphi 0, %s115
    $region4: #{decoder_forward.20} parent=1 // loop_header_branch
      %12 = sbr.rel (%p10) target = $region8
    $region5: #{decoder_forward.20} parent=1 // loop_body
      %s14 = ssub.s32 %s9, 1
      %s15 = ssub.s32 %s9, 2
      %s22 = sadd.s32 1, %s17
      %p23 = scmp.ge.s32.totalorder %s22, 4
      %s24 = scalar_select %p23, 0, %s22
      %s25 = sadd.s32 1, %s16
      %s26 = scalar_select %p23, %s25, %s16
      %p27 = scmp.ge.s32.totalorder %s26, 1
      %s28 = scalar_select %p27, 0, %s26
      %s29 = ssub.s32 %s16, %s28
      %p30 = scmp.eq.s32.totalorder %s29, 0
      %s32 = sadd.s32 %s31, 1
      %s33 = scalar_select %p30, %s31, %s32
      %p36 = pneg %p30
      %p37 = scmp.eq.s32.totalorder %s9, 3
      %p38 = por %p36, %p37
      %p39 = scmp.ne.s32.totalorder %s31, %s34
      %p40 = scmp.eq.s32.totalorder %s9, 0
      %p41 = por %p39, %p40
      %p42 = scmp.ne.s32.totalorder %s31, %s34
      %p43 = scmp.eq.s32.totalorder %s14, 3
      %p44 = por %p42, %p43
      %p45 = scmp.ne.s32.totalorder %s34, %s35
      %p46 = scmp.eq.s32.totalorder %s14, 0
      %p47 = por %p45, %p46
      %p48 = scmp.ne.s32.totalorder %s34, %s35
      %p49 = scmp.eq.s32.totalorder %s15, 3
      %p50 = por %p48, %p49
      %p52 = scmp.ne.s32.totalorder %s35, %s51
      %p53 = scmp.eq.s32.totalorder %s15, 0
      %p54 = por %p52, %p53
      %s55 = ssub.s32 %s17, %s24
      %p56 = scmp.eq.s32.totalorder %s55, 0
      %s58 = sadd.s32 %s57, 1
      %s59 = scalar_select %p56, %s57, %s58
      %p62 = pneg %p56
      %p63 = scmp.eq.s32.totalorder %s9, 3
      %p64 = por %p62, %p63
      %p65 = scmp.ne.s32.totalorder %s57, %s60
      %p66 = scmp.eq.s32.totalorder %s9, 0
      %p67 = por %p65, %p66
      %p68 = scmp.ne.s32.totalorder %s57, %s60
      %p69 = scmp.eq.s32.totalorder %s14, 3
      %p70 = por %p68, %p69
      %p71 = scmp.ne.s32.totalorder %s60, %s61
      %p72 = scmp.eq.s32.totalorder %s14, 0
      %p73 = por %p71, %p72
      %p74 = scmp.ne.s32.totalorder %s60, %s61
      %p75 = scmp.eq.s32.totalorder %s15, 3
      %p76 = por %p74, %p75
      %p78 = scmp.ne.s32.totalorder %s61, %s77
      %p79 = scmp.eq.s32.totalorder %s15, 0
      %p80 = por %p78, %p79
      %s81 = ssub.s32 %s17, %s24
      %p82 = scmp.eq.s32.totalorder %s81, 0
      %s84 = sadd.s32 %s83, 1
      %s85 = scalar_select %p82, %s83, %s84
      %p88 = pneg %p82
      %p89 = scmp.eq.s32.totalorder %s9, 3
      %p90 = por %p88, %p89
      %p91 = scmp.ne.s32.totalorder %s83, %s86
      %p92 = scmp.eq.s32.totalorder %s9, 0
      %p93 = por %p91, %p92
      %p94 = scmp.ne.s32.totalorder %s83, %s86
      %p95 = scmp.eq.s32.totalorder %s14, 3
      %p96 = por %p94, %p95
      %p97 = scmp.ne.s32.totalorder %s86, %s87
      %p98 = scmp.eq.s32.totalorder %s14, 0
      %p99 = por %p97, %p98
      %p100 = scmp.ne.s32.totalorder %s86, %s87
      %p101 = scmp.eq.s32.totalorder %s15, 3
      %p102 = por %p100, %p101
      %p104 = scmp.ne.s32.totalorder %s87, %s103
      %p105 = scmp.eq.s32.totalorder %s15, 0
      %p106 = por %p104, %p105
      %s107 = ssub.s32 %s16, %s28
      %s108 = ssub.s32 %s17, %s24
      %s109 = sor.u32 %s107, %s108
      %p110 = scmp.eq.s32.totalorder %s109, 0
      %s112 = sadd.s32 %s111, 1
      %s113 = scalar_select %p110, %s111, %s112
      %p116 = pneg %p110
      %p117 = scmp.eq.s32.totalorder %s9, 3
      %p118 = por %p116, %p117
      %p119 = scmp.ne.s32.totalorder %s111, %s114
      %p120 = scmp.eq.s32.totalorder %s9, 0
      %p121 = por %p119, %p120
      %p122 = scmp.ne.s32.totalorder %s111, %s114
      %p123 = scmp.eq.s32.totalorder %s14, 3
      %p124 = por %p122, %p123
      %p125 = scmp.ne.s32.totalorder %s114, %s115
      %p126 = scmp.eq.s32.totalorder %s14, 0
      %p127 = por %p125, %p126
      %p128 = scmp.ne.s32.totalorder %s114, %s115
      %p129 = scmp.eq.s32.totalorder %s15, 3
      %p130 = por %p128, %p129
      %p132 = scmp.ne.s32.totalorder %s115, %s131
      %p133 = scmp.eq.s32.totalorder %s15, 0
      %p134 = por %p132, %p133
      %p135 = scmp.le.s32.totalorder 1, %s9
      %p136 = scmp.lt.s32.totalorder %s9, 5
      %p137 = pnand %p135, %p136
      %p138 = pneg %p137
      // Predicated region
      $region9: #{decoder_forward.20} parent=5 // pred_check
        _
      $region10: #{decoder_forward.20} parent=5 // pred_check_branch
        %140 = sbr.rel (%p137) target = $region12
      $region11: #{decoder_forward.20} parent=5 // pred_region
        %s141 = ssub.s32 %s9, 1
        // Predicated region
        $region13: #{decoder_forward.20} parent=11 // pred_check
          %p142 = pneg %p47
        $region14: #{decoder_forward.20} parent=11 // pred_check_branch
          %144 = sbr.rel (%p142) target = $region16
        $region15: #{decoder_forward.20} parent=11 // pred_region
          %s145 = smul.u32 4, %s18
          %p146 = scmp.lt.s32.totalorder %s145, 3
          %s147 = scalar_select %p146, %s145, 3
          %s148 = smul.addr %s147, 8
          %s149 = scalar_lea.vmem %s0, %s148
          %s150 = smul.u32 4, %s18
        $region16: #{decoder_forward.20} parent=11 // pred_fallthru
          _
      $region12: #{decoder_forward.20} parent=5 // pred_fallthru
        _
      %p151 = scmp.lt.s32.totalorder %s9, 4
      // Predicated region
      $region17: #{decoder_forward.20} parent=5 // pred_check
        %p152 = pneg %p151
      $region18: #{decoder_forward.20} parent=5 // pred_check_branch
        %154 = sbr.rel (%p152) target = $region20
      $region19: #{decoder_forward.20} parent=5 // pred_region
        // Predicated region
        $region21: #{decoder_forward.20} parent=19 // pred_check
          %p155 = pneg %p67
        $region22: #{decoder_forward.20} parent=19 // pred_check_branch
          %157 = sbr.rel (%p155) target = $region24
        $region23: #{decoder_forward.20} parent=19 // pred_region
          %s158 = sand.u32 %s57, 1
          %s159 = sand.u32 %s57, 1
          %s160 = smul.addr %s159, 64
          %s161 = scalar_lea.vmem [#allocation2], %s160
          %s162 = smul.u32 4, %s17
          %s163 = smul.addr %s162, 4
          %s164 = scalar_lea.vmem %s1, %s163
          // Predicated region
          $region25: #{decoder_forward.20} parent=23 // pred_check
            _
          $region26: #{decoder_forward.20} parent=23 // pred_check_branch
            %166 = sbr.rel (0) target = $region28
          $region27: #{decoder_forward.20} parent=23 // pred_region
            // Predicated region
            $region29: #{decoder_forward.20} parent=27 // pred_check
              _
            $region30: #{decoder_forward.20} parent=27 // pred_check_branch
              %168 = sbr.rel (0) target = $region32
            $region31: #{decoder_forward.20} parent=27 // pred_region
              loop: start=0, step=1, limit=1
              $region33: #{decoder_forward.20} parent=31 // loop_pre_header
                _
              $region34: #{decoder_forward.20} parent=31 // loop_header
                %s170 = sphi 0, %s174
                %p171 = scmp.ge.s32.totalorder %s170, 1
                %s175 = sphi %s164, %s164
                %s176 = sphi %s161, %s161
              $region35: #{decoder_forward.20} parent=31 // loop_header_branch
                %173 = sbr.rel (%p171) target = $region39
              $region36: #{decoder_forward.20} parent=31 // loop_body
                %v177 = vld [vmem:[%s175] sm:$0xff]
                %178 = vst [vmem:[%s176] sm:$0xff] %v177
                %v179 = vld [vmem:[%s175 + $0x8] sm:$0xff]
                %180 = vst [vmem:[%s176 + $0x8] sm:$0xff] %v179
                %v181 = vld [vmem:[%s175 + $0x40] sm:$0xff]
                %182 = vst [vmem:[%s176 + $0x10] sm:$0xff] %v181
                %v183 = vld [vmem:[%s175 + $0x48] sm:$0xff]
                %184 = vst [vmem:[%s176 + $0x18] sm:$0xff] %v183
                %v185 = vld [vmem:[%s175 + $0x80] sm:$0xff]
                %186 = vst [vmem:[%s176 + $0x20] sm:$0xff] %v185
                %v187 = vld [vmem:[%s175 + $0x88] sm:$0xff]
                %188 = vst [vmem:[%s176 + $0x28] sm:$0xff] %v187
                %v189 = vld [vmem:[%s175 + $0xc0] sm:$0xff]
                %190 = vst [vmem:[%s176 + $0x30] sm:$0xff] %v189
                %v191 = vld [vmem:[%s175 + $0xc8] sm:$0xff]
                %192 = vst [vmem:[%s176 + $0x38] sm:$0xff] %v191
              $region37: #{decoder_forward.20} parent=31 // loop_footer
                %s174 = sadd.s32 1, %s170
              $region38: #{decoder_forward.20} parent=31 // loop_footer_branch
                %169 = sbr.rel target = $region34
              $region39: #{decoder_forward.20} parent=31 // loop_exit
                _
            $region32: #{decoder_forward.20} parent=27 // pred_fallthru
              _
            // Predicated region
            $region40: #{decoder_forward.20} parent=27 // pred_check
              _
            $region41: #{decoder_forward.20} parent=27 // pred_check_branch
              %194 = sbr.rel target = $region43
            $region42: #{decoder_forward.20} parent=27 // pred_region
              _
            $region43: #{decoder_forward.20} parent=27 // pred_fallthru
              _
          $region28: #{decoder_forward.20} parent=23 // pred_fallthru
            _
          %195 = vnop
        $region24: #{decoder_forward.20} parent=19 // pred_fallthru
          _
        // Predicated region
        $region44: #{decoder_forward.20} parent=19 // pred_check
          %p196 = pneg %p93
        $region45: #{decoder_forward.20} parent=19 // pred_check_branch
          %198 = sbr.rel (%p196) target = $region47
        $region46: #{decoder_forward.20} parent=19 // pred_region
          %s199 = smul.u32 4, %s17
          %p200 = scmp.lt.s32.totalorder %s199, 15
          %s201 = scalar_select %p200, %s199, 15
          %s202 = scalar_lea.vmem %s2, %s201
          %s203 = smul.u32 4, %s17
        $region47: #{decoder_forward.20} parent=19 // pred_fallthru
          _
      $region20: #{decoder_forward.20} parent=5 // pred_fallthru
        _
      %p204 = scmp.le.s32.totalorder 1, %s9
      %p205 = scmp.lt.s32.totalorder %s9, 5
      %p206 = pnand %p204, %p205
      %p207 = pneg %p206
      // Predicated region
      $region48: #{decoder_forward.20} parent=5 // pred_check
        _
      $region49: #{decoder_forward.20} parent=5 // pred_check_branch
        %209 = sbr.rel (%p206) target = $region51
      $region50: #{decoder_forward.20} parent=5 // pred_region
        %s210 = ssub.s32 %s9, 1
        %s211 = sand.u32 %s60, 1
        %s212 = sand.u32 %s60, 1
        %s213 = smul.addr %s212, 64
        %s214 = scalar_lea.vmem [#allocation2], %s213
        // Predicated region
        $region52: #{decoder_forward.20} parent=50 // pred_check
          %p215 = pneg %p73
        $region53: #{decoder_forward.20} parent=50 // pred_check_branch
          %217 = sbr.rel (%p215) target = $region55
        $region54: #{decoder_forward.20} parent=50 // pred_region
          _
        $region55: #{decoder_forward.20} parent=50 // pred_fallthru
          _
        %s218 = smul.u32 4, %s18
        %p219 = scmp.lt.s32.totalorder %s218, 3
        %s220 = scalar_select %p219, %s218, 3
        %s221 = smul.addr %s220, 8
        %s222 = scalar_lea.vmem %s0, %s221
        %p223 = pneg %p47
        %p224 = pneg %p44
        %s225 = sand.u32 %s60, 1
        %s226 = sand.u32 %s60, 1
        %s227 = smul.addr %s226, 64
        %s228 = scalar_lea.vmem [#allocation2], %s227
        %p229 = pneg %p73
        %p230 = pneg %p70
        %s231 = smul.u32 4, %s19
        %p232 = scmp.lt.s32.totalorder %s231, 15
        %s233 = scalar_select %p232, %s231, 15
        %s234 = scalar_lea.vmem %s2, %s233
        %p235 = pneg %p99
        %p236 = pneg %p96
        %p237 = pneg %p127
        %p238 = pneg %p124
        %s239 = sand.u32 %s114, 1
        %s240 = sand.u32 %s114, 1
        %s241 = smul.addr %s240, 128
        %s242 = scalar_lea.vmem [#allocation3], %s241
        %s243 = smul.u32 4, %s18
        %p244 = scmp.lt.s32.totalorder %s243, 3
        %s245 = scalar_select %p244, %s243, 3
        %s246 = smul.addr %s245, 8
        %s247 = scalar_lea.vmem %s0, %s246
        %s248 = smul.u32 4, %s18
        %s249 = smul.u32 4, %s19
        %s250 = smul.u32 4, %s19
        %p251 = scmp.lt.s32.totalorder %s250, 15
        %s252 = scalar_select %p251, %s250, 15
        %s253 = scalar_lea.vmem %s2, %s252
        %s254 = smul.u32 4, %s19
        %s255 = smul.u32 4, %s18
        %s256 = smul.u32 4, %s19
        %v258 = vld [vmem:[%s247] sm:$0xff]
        %v259 = vld [vmem:[%s247 + $0x8] sm:$0xff]
        %v260 = vld [vmem:[%s247 + $0x10] sm:$0xff]
        %v261 = vld [vmem:[%s247 + $0x18] sm:$0xff]
        %v262 = vpack.c.bf16 %v259, %v258
        %v263 = vpack.c.bf16 %v261, %v260
        %v264 = vld [vmem:[%s214] sm:$0xff]
        %v265 = vld [vmem:[%s214 + $0x8] sm:$0xff]
        %v266 = vld [vmem:[%s214 + $0x10] sm:$0xff]
        %v267 = vld [vmem:[%s214 + $0x18] sm:$0xff]
        %v268 = vld [vmem:[%s214 + $0x20] sm:$0xff]
        %v269 = vld [vmem:[%s214 + $0x28] sm:$0xff]
        %v270 = vld [vmem:[%s214 + $0x30] sm:$0xff]
        %v271 = vld [vmem:[%s214 + $0x38] sm:$0xff]
        %v272 = vld [vmem:[%s253] sm:$0xf]
        %v274 = vlaneseq
        %v275 = vshrl.u32 %v274, 7
        %v276 = vsub.s32 0, %v275
        %v277 = vrot.slane %v272, %v276
        %v278 = vlaneseq
        %v279 = vshrl.u32 %v278, 7
        %v280 = vsub.s32 1, %v279
        %v281 = vrot.slane %v272, %v280
        %v282 = vlaneseq
        %v283 = vshrl.u32 %v282, 7
        %v284 = vsub.s32 2, %v283
        %v285 = vrot.slane %v272, %v284
        %v286 = vlaneseq
        %v287 = vshrl.u32 %v286, 7
        %v288 = vsub.s32 3, %v287
        %v289 = vrot.slane %v272, %v288
        %v302 = vunpack.c.l.b16 %v264
        %v303 = vunpack.c.h.b16 %v264
        %v304 = vunpack.c.l.b16 %v265
        %v305 = vunpack.c.h.b16 %v265
        %v306 = vunpack.c.l.b16 %v266
        %v307 = vunpack.c.h.b16 %v266
        %v308 = vunpack.c.l.b16 %v267
        %v309 = vunpack.c.h.b16 %v267
        %v310 = vunpack.c.l.b16 %v268
        %v311 = vunpack.c.h.b16 %v268
        %v312 = vunpack.c.l.b16 %v269
        %v313 = vunpack.c.h.b16 %v269
        %v314 = vunpack.c.l.b16 %v270
        %v315 = vunpack.c.h.b16 %v270
        %v316 = vunpack.c.l.b16 %v271
        %v317 = vunpack.c.h.b16 %v271
        %v318 = vpack.c.b16 %v306, %v302
        %v319 = vpack.c.b16 %v307, %v303
        %v320 = vpack.c.b16 %v308, %v304
        %v321 = vpack.c.b16 %v309, %v305
        %v322 = vpack.c.b16 %v314, %v310
        %v323 = vpack.c.b16 %v315, %v311
        %v324 = vpack.c.b16 %v316, %v312
        %v325 = vpack.c.b16 %v317, %v313
        %vm334 = vcmask 261120
        %v336 = vsel %vm334, %v262, 0
        %v339 = vsel %vm334, %v263, 0
        %341 = vmatprep.subr.bf16.mxu0 %v319
        %342 = vmatpush1.bf16.msra.mxu0 %v318
        %343 = vmatprep.subr.bf16.mxu0 %v323
        %344 = vmatpush1.bf16.msra.mxu0 %v322
        %345 = vmatprep.subr.bf16.mxu0 0
        %346 = vmatpush1.bf16.msra.mxu0 0
        %347 = vmatprep.subr.bf16.mxu0 0
        %348 = vmatpush1.bf16.msra.mxu0 0
        %349 = vmatprep.subr.bf16.mxu0 0
        %350 = vmatpush1.bf16.msra.mxu0 0
        %351 = vmatprep.subr.bf16.mxu0 0
        %352 = vmatpush1.bf16.msra.mxu0 0
        %353 = vmatprep.subr.bf16.mxu0 0
        %354 = vmatpush1.bf16.msra.mxu0 0
        %355 = vmatprep.subr.bf16.mxu0 0
        %356 = vmatpush1.bf16.msra.mxu0 0
        %357 = vmatprep.subr.bf16.mxu0 0
        %358 = vmatpush1.bf16.msra.mxu0 0
        %359 = vmatprep.subr.bf16.mxu0 0
        %360 = vmatpush1.bf16.msra.mxu0 0
        %361 = vmatprep.subr.bf16.mxu0 0
        %362 = vmatpush1.bf16.msra.mxu0 0
        %363 = vmatprep.subr.bf16.mxu0 0
        %364 = vmatpush1.bf16.msra.mxu0 0
        %365 = vmatprep.subr.bf16.mxu0 0
        %366 = vmatpush1.bf16.msra.mxu0 0
        %367 = vmatprep.subr.bf16.mxu0 0
        %368 = vmatpush1.bf16.msra.mxu0 0
        %369 = vmatprep.subr.bf16.mxu0 0
        %370 = vmatpush1.bf16.msra.mxu0 0
        %371 = vmatprep.subr.bf16.mxu0 0
        %372 = vmatpush1.bf16.msra.mxu0 0
        %373 = vmatprep.mubr.bf16.mxu0 0
        %374 = vmatmul.mubr.bf16.gmra.mrb[0].mxu0 %v336
        %v375 = vpop.f32.mrb[0].mxu0
        %v376 = vadd.f32 %v277, %v375
        %v377 = vpop.f32.mrb[0].mxu0
        %v378 = vadd.f32 %v281, %v377
        %v379 = vpop.f32.mrb[0].mxu0
        %v380 = vadd.f32 %v277, %v379
        %v381 = vpop.f32.mrb[0].mxu0
        %v382 = vadd.f32 %v281, %v381
        %383 = vmatprep.mubr.bf16.mxu0 0
        %384 = vmatmul.mubr.bf16.gmra.mrb[0].mxu0 %v339
        %v385 = vpop.f32.mrb[0].mxu0
        %v386 = vadd.f32 %v277, %v385
        %v387 = vpop.f32.mrb[0].mxu0
        %v388 = vadd.f32 %v281, %v387
        %v389 = vpop.f32.mrb[0].mxu0
        %v390 = vadd.f32 %v277, %v389
        %v391 = vpop.f32.mrb[0].mxu0
        %v392 = vadd.f32 %v281, %v391
        %393 = vdwg.mxu0
        %394 = vmatprep.subr.bf16.mxu0 %v321
        %395 = vmatpush1.bf16.msra.mxu0 %v320
        %396 = vmatprep.subr.bf16.mxu0 %v325
        %397 = vmatpush1.bf16.msra.mxu0 %v324
        %398 = vmatprep.subr.bf16.mxu0 0
        %399 = vmatpush1.bf16.msra.mxu0 0
        %400 = vmatprep.subr.bf16.mxu0 0
        %401 = vmatpush1.bf16.msra.mxu0 0
        %402 = vmatprep.subr.bf16.mxu0 0
        %403 = vmatpush1.bf16.msra.mxu0 0
        %404 = vmatprep.subr.bf16.mxu0 0
        %405 = vmatpush1.bf16.msra.mxu0 0
        %406 = vmatprep.subr.bf16.mxu0 0
        %407 = vmatpush1.bf16.msra.mxu0 0
        %408 = vmatprep.subr.bf16.mxu0 0
        %409 = vmatpush1.bf16.msra.mxu0 0
        %410 = vmatprep.subr.bf16.mxu0 0
        %411 = vmatpush1.bf16.msra.mxu0 0
        %412 = vmatprep.subr.bf16.mxu0 0
        %413 = vmatpush1.bf16.msra.mxu0 0
        %414 = vmatprep.subr.bf16.mxu0 0
        %415 = vmatpush1.bf16.msra.mxu0 0
        %416 = vmatprep.subr.bf16.mxu0 0
        %417 = vmatpush1.bf16.msra.mxu0 0
        %418 = vmatprep.subr.bf16.mxu0 0
        %419 = vmatpush1.bf16.msra.mxu0 0
        %420 = vmatprep.subr.bf16.mxu0 0
        %421 = vmatpush1.bf16.msra.mxu0 0
        %422 = vmatprep.subr.bf16.mxu0 0
        %423 = vmatpush1.bf16.msra.mxu0 0
        %424 = vmatprep.subr.bf16.mxu0 0
        %425 = vmatpush1.bf16.msra.mxu0 0
        %426 = vmatprep.mubr.bf16.mxu0 0
        %427 = vmatmul.mubr.bf16.gmra.mrb[0].mxu0 %v336
        %v428 = vpop.f32.mrb[0].mxu0
        %v429 = vadd.f32 %v285, %v428
        %v430 = vpop.f32.mrb[0].mxu0
        %v431 = vadd.f32 %v289, %v430
        %v432 = vpop.f32.mrb[0].mxu0
        %v433 = vadd.f32 %v285, %v432
        %v434 = vpop.f32.mrb[0].mxu0
        %v435 = vadd.f32 %v289, %v434
        %436 = vmatprep.mubr.bf16.mxu0 0
        %437 = vmatmul.mubr.bf16.gmra.mrb[0].mxu0 %v339
        %v438 = vpop.f32.mrb[0].mxu0
        %v439 = vadd.f32 %v285, %v438
        %v440 = vpop.f32.mrb[0].mxu0
        %v441 = vadd.f32 %v289, %v440
        %v442 = vpop.f32.mrb[0].mxu0
        %v443 = vadd.f32 %v285, %v442
        %v444 = vpop.f32.mrb[0].mxu0
        %v445 = vadd.f32 %v289, %v444
        %446 = vdwg.mxu0
        %v447 = vmax.f32 %v376, 0.0
        %v448 = vmax.f32 %v378, 0.0
        %v449 = vmax.f32 %v429, 0.0
        %v450 = vmax.f32 %v431, 0.0
        %v451 = vmax.f32 %v380, 0.0
        %v452 = vmax.f32 %v382, 0.0
        %v453 = vmax.f32 %v433, 0.0
        %v454 = vmax.f32 %v435, 0.0
        %v455 = vmax.f32 %v386, 0.0
        %v456 = vmax.f32 %v388, 0.0
        %v457 = vmax.f32 %v439, 0.0
        %v458 = vmax.f32 %v441, 0.0
        %v459 = vmax.f32 %v390, 0.0
        %v460 = vmax.f32 %v392, 0.0
        %v461 = vmax.f32 %v443, 0.0
        %v462 = vmax.f32 %v445, 0.0
        %463 = vst [vmem:[%s242] sm:$0xff] %v447
        %464 = vst [vmem:[%s242 + $0x8] sm:$0xff] %v448
        %465 = vst [vmem:[%s242 + $0x10] sm:$0xff] %v449
        %466 = vst [vmem:[%s242 + $0x18] sm:$0xff] %v450
        %467 = vst [vmem:[%s242 + $0x20] sm:$0xff] %v451
        %468 = vst [vmem:[%s242 + $0x28] sm:$0xff] %v452
        %469 = vst [vmem:[%s242 + $0x30] sm:$0xff] %v453
        %470 = vst [vmem:[%s242 + $0x38] sm:$0xff] %v454
        %471 = vst [vmem:[%s242 + $0x40] sm:$0xff] %v455
        %472 = vst [vmem:[%s242 + $0x48] sm:$0xff] %v456
        %473 = vst [vmem:[%s242 + $0x50] sm:$0xff] %v457
        %474 = vst [vmem:[%s242 + $0x58] sm:$0xff] %v458
        %475 = vst [vmem:[%s242 + $0x60] sm:$0xff] %v459
        %476 = vst [vmem:[%s242 + $0x68] sm:$0xff] %v460
        %477 = vst [vmem:[%s242 + $0x70] sm:$0xff] %v461
        %478 = vst [vmem:[%s242 + $0x78] sm:$0xff] %v462
        %s479 = sand.u32 %s114, 1
        %s480 = sand.u32 %s114, 1
        %s481 = smul.addr %s480, 128
        %s482 = scalar_lea.vmem [#allocation3], %s481
        // Predicated region
        $region56: #{decoder_forward.20} parent=50 // pred_check
          %p483 = pneg %p124
        $region57: #{decoder_forward.20} parent=50 // pred_check_branch
          %485 = sbr.rel (%p483) target = $region59
        $region58: #{decoder_forward.20} parent=50 // pred_region
          %s486 = smul.u32 4, %s18
          %s487 = smul.u32 4, %s19
          %s488 = smul.addr %s486, 16
          %s489 = sadd.s32 %s487, %s488
          %s490 = smul.addr %s489, 8
          %s491 = scalar_lea.vmem %s3, %s490
          // Predicated region
          $region60: #{decoder_forward.20} parent=58 // pred_check
            _
          $region61: #{decoder_forward.20} parent=58 // pred_check_branch
            %493 = sbr.rel (0) target = $region63
          $region62: #{decoder_forward.20} parent=58 // pred_region
            // Predicated region
            $region64: #{decoder_forward.20} parent=62 // pred_check
              _
            $region65: #{decoder_forward.20} parent=62 // pred_check_branch
              %495 = sbr.rel (0) target = $region67
            $region66: #{decoder_forward.20} parent=62 // pred_region
              loop: start=0, step=1, limit=1
              $region68: #{decoder_forward.20} parent=66 // loop_pre_header
                _
              $region69: #{decoder_forward.20} parent=66 // loop_header
                %s497 = sphi 0, %s501
                %p498 = scmp.ge.s32.totalorder %s497, 1
                %s502 = sphi %s482, %s482
                %s503 = sphi %s491, %s491
              $region70: #{decoder_forward.20} parent=66 // loop_header_branch
                %500 = sbr.rel (%p498) target = $region74
              $region71: #{decoder_forward.20} parent=66 // loop_body
                %v504 = vld [vmem:[%s502] sm:$0xff]
                %505 = vst [vmem:[%s503] sm:$0xff] %v504
                %v506 = vld [vmem:[%s502 + $0x8] sm:$0xff]
                %507 = vst [vmem:[%s503 + $0x8] sm:$0xff] %v506
                %v508 = vld [vmem:[%s502 + $0x10] sm:$0xff]
                %509 = vst [vmem:[%s503 + $0x10] sm:$0xff] %v508
                %v510 = vld [vmem:[%s502 + $0x18] sm:$0xff]
                %511 = vst [vmem:[%s503 + $0x18] sm:$0xff] %v510
                %v512 = vld [vmem:[%s502 + $0x20] sm:$0xff]
                %513 = vst [vmem:[%s503 + $0x80] sm:$0xff] %v512
                %v514 = vld [vmem:[%s502 + $0x28] sm:$0xff]
                %515 = vst [vmem:[%s503 + $0x88] sm:$0xff] %v514
                %v516 = vld [vmem:[%s502 + $0x30] sm:$0xff]
                %517 = vst [vmem:[%s503 + $0x90] sm:$0xff] %v516
                %v518 = vld [vmem:[%s502 + $0x38] sm:$0xff]
                %519 = vst [vmem:[%s503 + $0x98] sm:$0xff] %v518
                %v520 = vld [vmem:[%s502 + $0x40] sm:$0xff]
                %521 = vst [vmem:[%s503 + $0x100] sm:$0xff] %v520
                %v522 = vld [vmem:[%s502 + $0x48] sm:$0xff]
                %523 = vst [vmem:[%s503 + $0x108] sm:$0xff] %v522
                %v524 = vld [vmem:[%s502 + $0x50] sm:$0xff]
                %525 = vst [vmem:[%s503 + $0x110] sm:$0xff] %v524
                %v526 = vld [vmem:[%s502 + $0x58] sm:$0xff]
                %527 = vst [vmem:[%s503 + $0x118] sm:$0xff] %v526
                %v528 = vld [vmem:[%s502 + $0x60] sm:$0xff]
                %529 = vst [vmem:[%s503 + $0x180] sm:$0xff] %v528
                %v530 = vld [vmem:[%s502 + $0x68] sm:$0xff]
                %531 = vst [vmem:[%s503 + $0x188] sm:$0xff] %v530
                %v532 = vld [vmem:[%s502 + $0x70] sm:$0xff]
                %533 = vst [vmem:[%s503 + $0x190] sm:$0xff] %v532
                %v534 = vld [vmem:[%s502 + $0x78] sm:$0xff]
                %535 = vst [vmem:[%s503 + $0x198] sm:$0xff] %v534
              $region72: #{decoder_forward.20} parent=66 // loop_footer
                %s501 = sadd.s32 1, %s497
              $region73: #{decoder_forward.20} parent=66 // loop_footer_branch
                %496 = sbr.rel target = $region69
              $region74: #{decoder_forward.20} parent=66 // loop_exit
                _
            $region67: #{decoder_forward.20} parent=62 // pred_fallthru
              _
            // Predicated region
            $region75: #{decoder_forward.20} parent=62 // pred_check
              _
            $region76: #{decoder_forward.20} parent=62 // pred_check_branch
              %537 = sbr.rel target = $region78
            $region77: #{decoder_forward.20} parent=62 // pred_region
              _
            $region78: #{decoder_forward.20} parent=62 // pred_fallthru
              _
          $region63: #{decoder_forward.20} parent=58 // pred_fallthru
            _
          %538 = vnop
        $region59: #{decoder_forward.20} parent=50 // pred_fallthru
          _
      $region51: #{decoder_forward.20} parent=5 // pred_fallthru
        _
      %p539 = scmp.le.s32.totalorder 2, %s9
      // Predicated region
      $region79: #{decoder_forward.20} parent=5 // pred_check
        %p540 = pneg %p539
      $region80: #{decoder_forward.20} parent=5 // pred_check_branch
        %542 = sbr.rel (%p540) target = $region82
      $region81: #{decoder_forward.20} parent=5 // pred_region
        %s543 = ssub.s32 %s9, 2
        // Predicated region
        $region83: #{decoder_forward.20} parent=81 // pred_check
          %p544 = pneg %p130
        $region84: #{decoder_forward.20} parent=81 // pred_check_branch
          %546 = sbr.rel (%p544) target = $region86
        $region85: #{decoder_forward.20} parent=81 // pred_region
          %s547 = sand.u32 %s115, 1
          %s548 = sand.u32 %s115, 1
          %s549 = smul.addr %s548, 128
          %s550 = scalar_lea.vmem [#allocation3], %s549
        $region86: #{decoder_forward.20} parent=81 // pred_fallthru
          _
      $region82: #{decoder_forward.20} parent=5 // pred_fallthru
        _
    $region6: #{decoder_forward.20} parent=1 // loop_footer
      %s13 = sadd.s32 1, %s9
    $region7: #{decoder_forward.20} parent=1 // loop_footer_branch
      %8 = sbr.rel target = $region3
    $region8: #{decoder_forward.20} parent=1 // loop_exit
      _

// kernel: decoder_forward.29
$region0: #{decoder_forward.29}
  #allocation0 [shape = 'u32[]', space=smem, size = 0x4, offset = 0x4, fixed_abs, tag = 'smem constant byte address 0x4 - core index']
  #allocation1 [shape = 'u32[144,128]{1,0:T(1,128)}', space=vmem, size = 0x12000, scoped, tag = 'internal scratch']
  %s0 = inlined_call_operand.vmem [shape: f32[32,32], index: 0, kind: input, shape index: {}]
  %s1 = inlined_call_operand.vmem [shape: bf16[32,40], index: 1, kind: input, shape index: {}]
  %s2 = inlined_call_operand.vmem [shape: f32[1,40], index: 2, kind: input, shape index: {}]
  %s3 = inlined_call_operand.hbm [shape: f32[32,40], index: 3, kind: output, shape index: {}]
  %s4 = sld [smem:[#allocation0]]
  $region22: #{decoder_forward.29} parent=0
    _
  %s6 = ssub.s32 1, %s4
  %s7 = scalar_select 0, %s6, %s4
  $region1: #{decoder_forward.29} parent=0
    #allocation2 [shape = 'u8[16384]{0}', space=vmem, size = 0x4000, scoped, tag = 'output window, operand 0, single buffered']
    #allocation3 [shape = 's32[1]{0}', space=sflag, size = 0x4, scoped, tag = 'scoped memory for decoder_forward.29']
    %8 = vsyncpa [#allocation3], 0
    // Predicated region
    $region2: #{decoder_forward.29} parent=1 // pred_check
      _
    $region3: #{decoder_forward.29} parent=1 // pred_check_branch
      %10 = sbr.rel (0) target = $region5
    $region4: #{decoder_forward.29} parent=1 // pred_region
      _
    $region5: #{decoder_forward.29} parent=1 // pred_fallthru
      _
    // Predicated region
    $region6: #{decoder_forward.29} parent=1 // pred_check
      _
    $region7: #{decoder_forward.29} parent=1 // pred_check_branch
      %12 = sbr.rel (0) target = $region9
    $region8: #{decoder_forward.29} parent=1 // pred_region
      _
    $region9: #{decoder_forward.29} parent=1 // pred_fallthru
      _
    // Predicated region
    $region10: #{decoder_forward.29} parent=1 // pred_check
      _
    $region11: #{decoder_forward.29} parent=1 // pred_check_branch
      %14 = sbr.rel (0) target = $region13
    $region12: #{decoder_forward.29} parent=1 // pred_region
      _
    $region13: #{decoder_forward.29} parent=1 // pred_fallthru
      _
    %v16 = vld [vmem:[%s0] sm:$0xff]
    %v17 = vld [vmem:[%s0 + $0x8] sm:$0xff]
    %v18 = vld [vmem:[%s0 + $0x10] sm:$0xff]
    %v19 = vld [vmem:[%s0 + $0x18] sm:$0xff]
    %v20 = vpack.c.bf16 %v17, %v16
    %v21 = vpack.c.bf16 %v19, %v18
    %v22 = vld [vmem:[%s1] sm:$0xf]
    %v23 = vld [vmem:[%s1 + $0x4] sm:$0xf]
    %v24 = vld [vmem:[%s1 + $0x8] sm:$0xf]
    %v25 = vld [vmem:[%s1 + $0xc] sm:$0xf]
    %v26 = vld [vmem:[%s2] sm:$0x1]
    %v28 = vlaneseq
    %v29 = vshrl.u32 %v28, 7
    %v30 = vsub.s32 0, %v29
    %v31 = vrot.slane %v26, %v30
    %v37 = vunpack.c.l.b16 %v22
    %v38 = vunpack.c.l.b16 %v23
    %v39 = vunpack.c.l.b16 %v24
    %v40 = vunpack.c.l.b16 %v25
    %v41 = vpack.c.b16 %v38, %v37
    %v42 = vpack.c.b16 %v40, %v39
    %vm45 = vcmask 261120
    %v47 = vsel %vm45, %v20, 0
    %v50 = vsel %vm45, %v21, 0
    %52 = vmatprep.subr.bf16.mxu0 0
    %53 = vmatpush1.bf16.msra.mxu0 %v41
    %54 = vmatprep.subr.bf16.mxu0 0
    %55 = vmatpush1.bf16.msra.mxu0 %v42
    %56 = vmatprep.subr.bf16.mxu0 0
    %57 = vmatpush1.bf16.msra.mxu0 0
    %58 = vmatprep.subr.bf16.mxu0 0
    %59 = vmatpush1.bf16.msra.mxu0 0
    %60 = vmatprep.subr.bf16.mxu0 0
    %61 = vmatpush1.bf16.msra.mxu0 0
    %62 = vmatprep.subr.bf16.mxu0 0
    %63 = vmatpush1.bf16.msra.mxu0 0
    %64 = vmatprep.subr.bf16.mxu0 0
    %65 = vmatpush1.bf16.msra.mxu0 0
    %66 = vmatprep.subr.bf16.mxu0 0
    %67 = vmatpush1.bf16.msra.mxu0 0
    %68 = vmatprep.subr.bf16.mxu0 0
    %69 = vmatpush1.bf16.msra.mxu0 0
    %70 = vmatprep.subr.bf16.mxu0 0
    %71 = vmatpush1.bf16.msra.mxu0 0
    %72 = vmatprep.subr.bf16.mxu0 0
    %73 = vmatpush1.bf16.msra.mxu0 0
    %74 = vmatprep.subr.bf16.mxu0 0
    %75 = vmatpush1.bf16.msra.mxu0 0
    %76 = vmatprep.subr.bf16.mxu0 0
    %77 = vmatpush1.bf16.msra.mxu0 0
    %78 = vmatprep.subr.bf16.mxu0 0
    %79 = vmatpush1.bf16.msra.mxu0 0
    %80 = vmatprep.subr.bf16.mxu0 0
    %81 = vmatpush1.bf16.msra.mxu0 0
    %82 = vmatprep.subr.bf16.mxu0 0
    %83 = vmatpush1.bf16.msra.mxu0 0
    %84 = vmatprep.mubr.bf16.mxu0 0
    %85 = vmatmul.mubr.bf16.gmra.mrb[0].mxu0 %v47
    %v86 = vpop.f32.mrb[0].mxu0
    %v87 = vadd.f32 %v31, %v86
    %v88 = vpop.f32.mrb[0].mxu0
    %v89 = vpop.f32.mrb[0].mxu0
    %v90 = vadd.f32 %v31, %v89
    %v91 = vpop.f32.mrb[0].mxu0
    %92 = vmatprep.mubr.bf16.mxu0 0
    %93 = vmatmul.mubr.bf16.gmra.mrb[0].mxu0 %v50
    %v94 = vpop.f32.mrb[0].mxu0
    %v95 = vadd.f32 %v31, %v94
    %v96 = vpop.f32.mrb[0].mxu0
    %v97 = vpop.f32.mrb[0].mxu0
    %v98 = vadd.f32 %v31, %v97
    %v99 = vpop.f32.mrb[0].mxu0
    %100 = vdwg.mxu0
    %vm101 = vcmask 326656
    %102 = vst.msk [vmem:[#allocation2] sm:$0xff] %vm101, %v87
    %103 = vst.msk [vmem:[#allocation2 + $0x8] sm:$0xff] %vm101, %v90
    %104 = vst.msk [vmem:[#allocation2 + $0x10] sm:$0xff] %vm101, %v95
    %105 = vst.msk [vmem:[#allocation2 + $0x18] sm:$0xff] %vm101, %v98
    // Predicated region
    $region14: #{decoder_forward.29} parent=1 // pred_check
      _
    $region15: #{decoder_forward.29} parent=1 // pred_check_branch
      %107 = sbr.rel (0) target = $region17
    $region16: #{decoder_forward.29} parent=1 // pred_region
      %s109 = ssub.s32 512, 512
      %110 = vsyncadd [#allocation3], %s109
      %s111 = sshll.u32 [#allocation2], 4
      %s112 = int_to_ptr.vmem [resolvable:$true] %s111
      %117 = dma.vmem_to_hbm [thread:$0]  %s112, 512, %s3, [#allocation3], 128, 128, 8
    $region17: #{decoder_forward.29} parent=1 // pred_fallthru
      _
    // Predicated region
    $region18: #{decoder_forward.29} parent=1 // pred_check
      _
    $region19: #{decoder_forward.29} parent=1 // pred_check_branch
      %119 = sbr.rel (0) target = $region21
    $region20: #{decoder_forward.29} parent=1 // pred_region
      %120 = dma.done [#allocation3], 512
    $region21: #{decoder_forward.29} parent=1 // pred_fallthru
      _
    %121 = vsyncpa [#allocation3], 1

// kernel: decoder_forward.19
$region0: #{decoder_forward.19}
  #allocation0 [shape = 'u32[]', space=smem, size = 0x4, offset = 0x4, fixed_abs, tag = 'smem constant byte address 0x4 - core index']
  #allocation1 [shape = 'u32[144,128]{1,0:T(1,128)}', space=vmem, size = 0x12000, scoped, tag = 'internal scratch']
  %s0 = inlined_call_operand.vmem [shape: f32[2,4,16,8], index: 0, kind: input, shape index: {}]
  %s1 = inlined_call_operand.vmem [shape: f32[2,4,10,8], index: 1, kind: input, shape index: {}]
  %s2 = inlined_call_operand.vmem [shape: f32[2,4,10,8], index: 2, kind: input, shape index: {}]
  %s3 = inlined_call_operand.vmem [shape: bf16[4,8,32], index: 3, kind: input, shape index: {}]
  %s4 = inlined_call_operand.vmem [shape: f32[1,32], index: 4, kind: input, shape index: {}]
  %s5 = inlined_call_operand.vmem [shape: f32[2,16,32], index: 5, kind: input, shape index: {}]
  %s6 = inlined_call_operand.vmem [shape: f32[1,32], index: 6, kind: input, shape index: {}]
  %s7 = inlined_call_operand.vmem [shape: f32[1,32], index: 7, kind: input, shape index: {}]
  %s8 = inlined_call_operand.vmem [shape: f32[2,16,32], index: 8, kind: output, shape index: {}]
  %s9 = sld [smem:[#allocation0]]
  $region65: #{decoder_forward.19} parent=0
    _
  %s11 = ssub.s32 1, %s9
  %s12 = scalar_select 0, %s11, %s9
  loop: start=0, step=1, limit=4
  $region2: #{decoder_forward.19} parent=0 // loop_pre_header
    _
  $region3: #{decoder_forward.19} parent=0 // loop_header
    %s14 = sphi 0, %s18
    %p15 = scmp.ge.s32.totalorder %s14, 4
    %s24 = sphi 0, %s26
    %s27 = sphi 0, %s24
    %s28 = sphi 0, %s27
    %s44 = sphi 0, %s28
    %s50 = sphi 0, %s52
    %s53 = sphi 0, %s50
    %s54 = sphi 0, %s53
    %s70 = sphi 0, %s54
    %s76 = sphi 0, %s78
    %s79 = sphi 0, %s76
    %s80 = sphi 0, %s79
    %s96 = sphi 0, %s80
    %s100 = sphi 0, %s100
    %s102 = sphi 0, %s100
    %s103 = sphi 0, %s102
    %s117 = sphi 0, %s103
    %s121 = sphi 0, %s121
    %s123 = sphi 0, %s121
    %s124 = sphi 0, %s123
    %s138 = sphi 0, %s124
    %s144 = sphi 0, %s146
    %s147 = sphi 0, %s144
    %s148 = sphi 0, %s147
    %s164 = sphi 0, %s148
    %s168 = sphi 0, %s168
    %s170 = sphi 0, %s168
    %s171 = sphi 0, %s170
    %s185 = sphi 0, %s171
    %s189 = sphi 0, %s189
    %s191 = sphi 0, %s189
    %s192 = sphi 0, %s191
    %s206 = sphi 0, %s192
    %s212 = sphi 0, %s214
    %s215 = sphi 0, %s212
    %s216 = sphi 0, %s215
    %s232 = sphi 0, %s216
  $region4: #{decoder_forward.19} parent=0 // loop_header_branch
    %17 = sbr.rel (%p15) target = $region8
  $region5: #{decoder_forward.19} parent=0 // loop_body
    %s19 = ssub.s32 %s14, 1
    %s20 = ssub.s32 %s14, 2
    %s21 = sadd.s32 %s14, 1
    %s22 = ssub.s32 %s14, %s21
    %p23 = scmp.eq.s32.totalorder %s22, 0
    %s25 = sadd.s32 %s24, 1
    %s26 = scalar_select %p23, %s24, %s25
    %p29 = pneg %p23
    %p30 = scmp.eq.s32.totalorder %s14, 1
    %p31 = por %p29, %p30
    %p32 = scmp.ne.s32.totalorder %s24, %s27
    %p33 = scmp.eq.s32.totalorder %s14, 0
    %p34 = por %p32, %p33
    %p35 = scmp.ne.s32.totalorder %s24, %s27
    %p36 = scmp.eq.s32.totalorder %s19, 1
    %p37 = por %p35, %p36
    %p38 = scmp.ne.s32.totalorder %s27, %s28
    %p39 = scmp.eq.s32.totalorder %s19, 0
    %p40 = por %p38, %p39
    %p41 = scmp.ne.s32.totalorder %s27, %s28
    %p42 = scmp.eq.s32.totalorder %s20, 1
    %p43 = por %p41, %p42
    %p45 = scmp.ne.s32.totalorder %s28, %s44
    %p46 = scmp.eq.s32.totalorder %s20, 0
    %p47 = por %p45, %p46
    %s48 = ssub.s32 %s14, %s21
    %p49 = scmp.eq.s32.totalorder %s48, 0
    %s51 = sadd.s32 %s50, 1
    %s52 = scalar_select %p49, %s50, %s51
    %p55 = pneg %p49
    %p56 = scmp.eq.s32.totalorder %s14, 1
    %p57 = por %p55, %p56
    %p58 = scmp.ne.s32.totalorder %s50, %s53
    %p59 = scmp.eq.s32.totalorder %s14, 0
    %p60 = por %p58, %p59
    %p61 = scmp.ne.s32.totalorder %s50, %s53
    %p62 = scmp.eq.s32.totalorder %s19, 1
    %p63 = por %p61, %p62
    %p64 = scmp.ne.s32.totalorder %s53, %s54
    %p65 = scmp.eq.s32.totalorder %s19, 0
    %p66 = por %p64, %p65
    %p67 = scmp.ne.s32.totalorder %s53, %s54
    %p68 = scmp.eq.s32.totalorder %s20, 1
    %p69 = por %p67, %p68
    %p71 = scmp.ne.s32.totalorder %s54, %s70
    %p72 = scmp.eq.s32.totalorder %s20, 0
    %p73 = por %p71, %p72
    %s74 = ssub.s32 %s14, %s21
    %p75 = scmp.eq.s32.totalorder %s74, 0
    %s77 = sadd.s32 %s76, 1
    %s78 = scalar_select %p75, %s76, %s77
    %p81 = pneg %p75
    %p82 = scmp.eq.s32.totalorder %s14, 1
    %p83 = por %p81, %p82
    %p84 = scmp.ne.s32.totalorder %s76, %s79
    %p85 = scmp.eq.s32.totalorder %s14, 0
    %p86 = por %p84, %p85
    %p87 = scmp.ne.s32.totalorder %s76, %s79
    %p88 = scmp.eq.s32.totalorder %s19, 1
    %p89 = por %p87, %p88
    %p90 = scmp.ne.s32.totalorder %s79, %s80
    %p91 = scmp.eq.s32.totalorder %s19, 0
    %p92 = por %p90, %p91
    %p93 = scmp.ne.s32.totalorder %s79, %s80
    %p94 = scmp.eq.s32.totalorder %s20, 1
    %p95 = por %p93, %p94
    %p97 = scmp.ne.s32.totalorder %s80, %s96
    %p98 = scmp.eq.s32.totalorder %s20, 0
    %p99 = por %p97, %p98
    %s101 = sadd.s32 %s100, 1
    %p104 = scmp.eq.s32.totalorder %s14, 1
    %p105 = scmp.ne.s32.totalorder %s100, %s102
    %p106 = scmp.eq.s32.totalorder %s14, 0
    %p107 = por %p105, %p106
    %p108 = scmp.ne.s32.totalorder %s100, %s102
    %p109 = scmp.eq.s32.totalorder %s19, 1
    %p110 = por %p108, %p109
    %p111 = scmp.ne.s32.totalorder %s102, %s103
    %p112 = scmp.eq.s32.totalorder %s19, 0
    %p113 = por %p111, %p112
    %p114 = scmp.ne.s32.totalorder %s102, %s103
    %p115 = scmp.eq.s32.totalorder %s20, 1
    %p116 = por %p114, %p115
    %p118 = scmp.ne.s32.totalorder %s103, %s117
    %p119 = scmp.eq.s32.totalorder %s20, 0
    %p120 = por %p118, %p119
    %s122 = sadd.s32 %s121, 1
    %p125 = scmp.eq.s32.totalorder %s14, 1
    %p126 = scmp.ne.s32.totalorder %s121, %s123
    %p127 = scmp.eq.s32.totalorder %s14, 0
    %p128 = por %p126, %p127
    %p129 = scmp.ne.s32.totalorder %s121, %s123
    %p130 = scmp.eq.s32.totalorder %s19, 1
    %p131 = por %p129, %p130
    %p132 = scmp.ne.s32.totalorder %s123, %s124
    %p133 = scmp.eq.s32.totalorder %s19, 0
    %p134 = por %p132, %p133
    %p135 = scmp.ne.s32.totalorder %s123, %s124
    %p136 = scmp.eq.s32.totalorder %s20, 1
    %p137 = por %p135, %p136
    %p139 = scmp.ne.s32.totalorder %s124, %s138
    %p140 = scmp.eq.s32.totalorder %s20, 0
    %p141 = por %p139, %p140
    %s142 = ssub.s32 %s14, %s21
    %p143 = scmp.eq.s32.totalorder %s142, 0
    %s145 = sadd.s32 %s144, 1
    %s146 = scalar_select %p143, %s144, %s145
    %p149 = pneg %p143
    %p150 = scmp.eq.s32.totalorder %s14, 1
    %p151 = por %p149, %p150
    %p152 = scmp.ne.s32.totalorder %s144, %s147
    %p153 = scmp.eq.s32.totalorder %s14, 0
    %p154 = por %p152, %p153
    %p155 = scmp.ne.s32.totalorder %s144, %s147
    %p156 = scmp.eq.s32.totalorder %s19, 1
    %p157 = por %p155, %p156
    %p158 = scmp.ne.s32.totalorder %s147, %s148
    %p159 = scmp.eq.s32.totalorder %s19, 0
    %p160 = por %p158, %p159
    %p161 = scmp.ne.s32.totalorder %s147, %s148
    %p162 = scmp.eq.s32.totalorder %s20, 1
    %p163 = por %p161, %p162
    %p165 = scmp.ne.s32.totalorder %s148, %s164
    %p166 = scmp.eq.s32.totalorder %s20, 0
    %p167 = por %p165, %p166
    %s169 = sadd.s32 %s168, 1
    %p172 = scmp.eq.s32.totalorder %s14, 1
    %p173 = scmp.ne.s32.totalorder %s168, %s170
    %p174 = scmp.eq.s32.totalorder %s14, 0
    %p175 = por %p173, %p174
    %p176 = scmp.ne.s32.totalorder %s168, %s170
    %p177 = scmp.eq.s32.totalorder %s19, 1
    %p178 = por %p176, %p177
    %p179 = scmp.ne.s32.totalorder %s170, %s171
    %p180 = scmp.eq.s32.totalorder %s19, 0
    %p181 = por %p179, %p180
    %p182 = scmp.ne.s32.totalorder %s170, %s171
    %p183 = scmp.eq.s32.totalorder %s20, 1
    %p184 = por %p182, %p183
    %p186 = scmp.ne.s32.totalorder %s171, %s185
    %p187 = scmp.eq.s32.totalorder %s20, 0
    %p188 = por %p186, %p187
    %s190 = sadd.s32 %s189, 1
    %p193 = scmp.eq.s32.totalorder %s14, 1
    %p194 = scmp.ne.s32.totalorder %s189, %s191
    %p195 = scmp.eq.s32.totalorder %s14, 0
    %p196 = por %p194, %p195
    %p197 = scmp.ne.s32.totalorder %s189, %s191
    %p198 = scmp.eq.s32.totalorder %s19, 1
    %p199 = por %p197, %p198
    %p200 = scmp.ne.s32.totalorder %s191, %s192
    %p201 = scmp.eq.s32.totalorder %s19, 0
    %p202 = por %p200, %p201
    %p203 = scmp.ne.s32.totalorder %s191, %s192
    %p204 = scmp.eq.s32.totalorder %s20, 1
    %p205 = por %p203, %p204
    %p207 = scmp.ne.s32.totalorder %s192, %s206
    %p208 = scmp.eq.s32.totalorder %s20, 0
    %p209 = por %p207, %p208
    %s210 = ssub.s32 %s14, %s21
    %p211 = scmp.eq.s32.totalorder %s210, 0
    %s213 = sadd.s32 %s212, 1
    %s214 = scalar_select %p211, %s212, %s213
    %p217 = pneg %p211
    %p218 = scmp.eq.s32.totalorder %s14, 1
    %p219 = por %p217, %p218
    %p220 = scmp.ne.s32.totalorder %s212, %s215
    %p221 = scmp.eq.s32.totalorder %s14, 0
    %p222 = por %p220, %p221
    %p223 = scmp.ne.s32.totalorder %s212, %s215
    %p224 = scmp.eq.s32.totalorder %s19, 1
    %p225 = por %p223, %p224
    %p226 = scmp.ne.s32.totalorder %s215, %s216
    %p227 = scmp.eq.s32.totalorder %s19, 0
    %p228 = por %p226, %p227
    %p229 = scmp.ne.s32.totalorder %s215, %s216
    %p230 = scmp.eq.s32.totalorder %s20, 1
    %p231 = por %p229, %p230
    %p233 = scmp.ne.s32.totalorder %s216, %s232
    %p234 = scmp.eq.s32.totalorder %s20, 0
    %p235 = por %p233, %p234
    %p236 = scmp.le.s32.totalorder 1, %s14
    %p237 = scmp.lt.s32.totalorder %s14, 3
    %p238 = pnand %p236, %p237
    %p239 = pneg %p238
    // Predicated region
    $region9: #{decoder_forward.19} parent=5 // pred_check
      _
    $region10: #{decoder_forward.19} parent=5 // pred_check_branch
      %241 = sbr.rel (%p238) target = $region12
    $region11: #{decoder_forward.19} parent=5 // pred_region
      %s242 = ssub.s32 %s14, 1
      // Predicated region
      $region13: #{decoder_forward.19} parent=11 // pred_check
        %p243 = pneg %p113
      $region14: #{decoder_forward.19} parent=11 // pred_check_branch
        %245 = sbr.rel (%p243) target = $region16
      $region15: #{decoder_forward.19} parent=11 // pred_region
        _
      $region16: #{decoder_forward.19} parent=11 // pred_fallthru
        _
      // Predicated region
      $region17: #{decoder_forward.19} parent=11 // pred_check
        %p246 = pneg %p134
      $region18: #{decoder_forward.19} parent=11 // pred_check_branch
        %248 = sbr.rel (%p246) target = $region20
      $region19: #{decoder_forward.19} parent=11 // pred_region
        _
      $region20: #{decoder_forward.19} parent=11 // pred_fallthru
        _
      // Predicated region
      $region21: #{decoder_forward.19} parent=11 // pred_check
        %p249 = pneg %p181
      $region22: #{decoder_forward.19} parent=11 // pred_check_branch
        %251 = sbr.rel (%p249) target = $region24
      $region23: #{decoder_forward.19} parent=11 // pred_region
        _
      $region24: #{decoder_forward.19} parent=11 // pred_fallthru
        _
      // Predicated region
      $region25: #{decoder_forward.19} parent=11 // pred_check
        %p252 = pneg %p202
      $region26: #{decoder_forward.19} parent=11 // pred_check_branch
        %254 = sbr.rel (%p252) target = $region28
      $region27: #{decoder_forward.19} parent=11 // pred_region
        _
      $region28: #{decoder_forward.19} parent=11 // pred_fallthru
        _
    $region12: #{decoder_forward.19} parent=5 // pred_fallthru
      _
    %p255 = scmp.lt.s32.totalorder %s14, 2
    // Predicated region
    $region29: #{decoder_forward.19} parent=5 // pred_check
      %p256 = pneg %p255
    $region30: #{decoder_forward.19} parent=5 // pred_check_branch
      %258 = sbr.rel (%p256) target = $region32
    $region31: #{decoder_forward.19} parent=5 // pred_region
      // Predicated region
      $region33: #{decoder_forward.19} parent=31 // pred_check
        %p259 = pneg %p34
      $region34: #{decoder_forward.19} parent=31 // pred_check_branch
        %261 = sbr.rel (%p259) target = $region36
      $region35: #{decoder_forward.19} parent=31 // pred_region
        %p262 = scmp.lt.s32.totalorder %s14, 1
        %s263 = scalar_select %p262, %s14, 1
        %s264 = smul.addr %s263, 8
        %s265 = smul.addr %s264, 8
        %s266 = scalar_lea.vmem %s0, %s265
      $region36: #{decoder_forward.19} parent=31 // pred_fallthru
        _
      // Predicated region
      $region37: #{decoder_forward.19} parent=31 // pred_check
        %p267 = pneg %p60
      $region38: #{decoder_forward.19} parent=31 // pred_check_branch
        %269 = sbr.rel (%p267) target = $region40
      $region39: #{decoder_forward.19} parent=31 // pred_region
        %p270 = scmp.lt.s32.totalorder %s14, 1
        %s271 = scalar_select %p270, %s14, 1
        %s272 = smul.addr %s271, 8
        %s273 = smul.addr %s272, 8
        %s274 = scalar_lea.vmem %s1, %s273
      $region40: #{decoder_forward.19} parent=31 // pred_fallthru
        _
      // Predicated region
      $region41: #{decoder_forward.19} parent=31 // pred_check
        %p275 = pneg %p86
      $region42: #{decoder_forward.19} parent=31 // pred_check_branch
        %277 = sbr.rel (%p275) target = $region44
      $region43: #{decoder_forward.19} parent=31 // pred_region
        %p278 = scmp.lt.s32.totalorder %s14, 1
        %s279 = scalar_select %p278, %s14, 1
        %s280 = smul.addr %s279, 8
        %s281 = smul.addr %s280, 8
        %s282 = scalar_lea.vmem %s2, %s281
      $region44: #{decoder_forward.19} parent=31 // pred_fallthru
        _
      // Predicated region
      $region45: #{decoder_forward.19} parent=31 // pred_check
        %p283 = pneg %p154
      $region46: #{decoder_forward.19} parent=31 // pred_check_branch
        %285 = sbr.rel (%p283) target = $region48
      $region47: #{decoder_forward.19} parent=31 // pred_region
        %p286 = scmp.lt.s32.totalorder %s14, 1
        %s287 = scalar_select %p286, %s14, 1
        %s288 = smul.addr %s287, 2
        %s289 = smul.addr %s288, 8
        %s290 = scalar_lea.vmem %s5, %s289
      $region48: #{decoder_forward.19} parent=31 // pred_fallthru
        _
    $region32: #{decoder_forward.19} parent=5 // pred_fallthru
      _
    %p291 = scmp.le.s32.totalorder 1, %s14
    %p292 = scmp.lt.s32.totalorder %s14, 3
    %p293 = pnand %p291, %p292
    %p294 = pneg %p293
    // Predicated region
    $region49: #{decoder_forward.19} parent=5 // pred_check
      _
    $region50: #{decoder_forward.19} parent=5 // pred_check_branch
      %296 = sbr.rel (%p293) target = $region52
    $region51: #{decoder_forward.19} parent=5 // pred_region
      %s297 = ssub.s32 %s14, 1
      %p298 = scmp.lt.s32.totalorder %s19, 1
      %s299 = scalar_select %p298, %s19, 1
      %s300 = smul.addr %s299, 8
      %s301 = smul.addr %s300, 8
      %s302 = scalar_lea.vmem %s0, %s301
      %p303 = pneg %p40
      %p304 = pneg %p37
      %p305 = scmp.lt.s32.totalorder %s19, 1
      %s306 = scalar_select %p305, %s19, 1
      %s307 = smul.addr %s306, 8
      %s308 = smul.addr %s307, 8
      %s309 = scalar_lea.vmem %s1, %s308
      %p310 = pneg %p66
      %p311 = pneg %p63
      %p312 = scmp.lt.s32.totalorder %s19, 1
      %s313 = scalar_select %p312, %s19, 1
      %s314 = smul.addr %s313, 8
      %s315 = smul.addr %s314, 8
      %s316 = scalar_lea.vmem %s2, %s315
      %p317 = pneg %p92
      %p318 = pneg %p89
      %p319 = pneg %p113
      %p320 = pneg %p110
      %p321 = pneg %p134
      %p322 = pneg %p131
      %p323 = scmp.lt.s32.totalorder %s19, 1
      %s324 = scalar_select %p323, %s19, 1
      %s325 = smul.addr %s324, 2
      %s326 = smul.addr %s325, 8
      %s327 = scalar_lea.vmem %s5, %s326
      %p328 = pneg %p160
      %p329 = pneg %p157
      %p330 = pneg %p181
      %p331 = pneg %p178
      %p332 = pneg %p202
      %p333 = pneg %p199
      %p334 = pneg %p228
      %p335 = pneg %p225
      %p336 = scmp.lt.s32.totalorder %s19, 1
      %s337 = scalar_select %p336, %s19, 1
      %s338 = smul.addr %s337, 2
      %s339 = smul.addr %s338, 8
      %s340 = scalar_lea.vmem %s8, %s339
      %p341 = scmp.lt.s32.totalorder %s19, 1
      %s342 = scalar_select %p341, %s19, 1
      %s343 = smul.addr %s342, 8
      %s344 = smul.addr %s343, 8
      %s345 = scalar_lea.vmem %s0, %s344
      %p346 = scmp.lt.s32.totalorder %s19, 1
      %s347 = scalar_select %p346, %s19, 1
      %s348 = smul.addr %s347, 8
      %s349 = smul.addr %s348, 8
      %s350 = scalar_lea.vmem %s1, %s349
      %p351 = scmp.lt.s32.totalorder %s19, 1
      %s352 = scalar_select %p351, %s19, 1
      %s353 = smul.addr %s352, 8
      %s354 = smul.addr %s353, 8
      %s355 = scalar_lea.vmem %s2, %s354
      %p356 = scmp.lt.s32.totalorder %s19, 1
      %s357 = scalar_select %p356, %s19, 1
      %s358 = smul.addr %s357, 2
      %s359 = smul.addr %s358, 8
      %s360 = scalar_lea.vmem %s5, %s359
      %p361 = scmp.lt.s32.totalorder %s19, 1
      %s362 = scalar_select %p361, %s19, 1
      %s363 = smul.addr %s362, 2
      %s364 = smul.addr %s363, 8
      %s365 = scalar_lea.vmem %s8, %s364
      %v367 = vld [vmem:[%s345] sm:$0xff]
      %v368 = vld [vmem:[%s345 + $0x8] sm:$0xff]
      %v369 = vpack.c.bf16 %v368, %v367
      %v370 = vld [vmem:[%s350] sm:$0xff]
      %v371 = vld [vmem:[%s350 + $0x8] sm:$0x3]
      %v372 = vpack.c.bf16 %v371, %v370
      %v373 = vld [vmem:[%s355] sm:$0xff]
      %v374 = vld [vmem:[%s355 + $0x8] sm:$0x3]
      %v375 = vpack.c.bf16 %v374, %v373
      %vm376 = vcmask 64512
      %v378 = vsel %vm376, %v369, 0
      %v381 = vsel %vm376, %v372, 0
      %383 = vmatprep.subr.bf16.mxu0 0
      %384 = vmatpush1.bf16.xpose.msra.mxu0 %v381
      %385 = vmatprep.subr.bf16.mxu0 0
      %386 = vmatpush1.bf16.xpose.msra.mxu0 0
      %387 = vmatprep.subr.bf16.mxu0 0
      %388 = vmatpush1.bf16.xpose.msra.mxu0 0
      %389 = vmatprep.subr.bf16.mxu0 0
      %390 = vmatpush1.bf16.xpose.msra.mxu0 0
      %391 = vmatprep.subr.bf16.mxu0 0
      %392 = vmatpush1.bf16.xpose.msra.mxu0 0
      %393 = vmatprep.subr.bf16.mxu0 0
      %394 = vmatpush1.bf16.xpose.msra.mxu0 0
      %395 = vmatprep.subr.bf16.mxu0 0
      %396 = vmatpush1.bf16.xpose.msra.mxu0 0
      %397 = vmatprep.subr.bf16.mxu0 0
      %398 = vmatpush1.bf16.xpose.msra.mxu0 0
      %399 = vmatprep.subr.bf16.mxu0 0
      %400 = vmatpush1.bf16.xpose.msra.mxu0 0
      %401 = vmatprep.subr.bf16.mxu0 0
      %402 = vmatpush1.bf16.xpose.msra.mxu0 0
      %403 = vmatprep.subr.bf16.mxu0 0
      %404 = vmatpush1.bf16.xpose.msra.mxu0 0
      %405 = vmatprep.subr.bf16.mxu0 0
      %406 = vmatpush1.bf16.xpose.msra.mxu0 0
      %407 = vmatprep.subr.bf16.mxu0 0
      %408 = vmatpush1.bf16.xpose.msra.mxu0 0
      %409 = vmatprep.subr.bf16.mxu0 0
      %410 = vmatpush1.bf16.xpose.msra.mxu0 0
      %411 = vmatprep.subr.bf16.mxu0 0
      %412 = vmatpush1.bf16.xpose.msra.mxu0 0
      %413 = vmatprep.subr.bf16.mxu0 0
      %414 = vmatpush1.bf16.xpose.msra.mxu0 0
      %415 = vmatprep.mubr.bf16.mxu0 0
      %416 = vmatmul.mubr.bf16.gmra.mrb[0].mxu0 %v378
      %v417 = vpop.f32.mrb[0].mxu0
      %v418 = vadd.f32 0.0, %v417
      %v419 = vpop.f32.mrb[0].mxu0
      %v420 = vpop.f32.mrb[0].mxu0
      %v421 = vadd.f32 0.0, %v420
      %v422 = vpop.f32.mrb[0].mxu0
      %423 = vdwg.mxu0
      %v424 = vmul.f32 %v418, 0.35355338
      %v425 = vmul.f32 %v421, 0.35355338
      %vm426 = vcmask 80896
      %v427 = vsel %vm426, %v424, -inf
      %428 = vmax.xlane.f32.xlu0 %v427
      %v429 = vpop.xlane.xlu0 %428
      %v430 = vsel %vm426, %v425, -inf
      %431 = vmax.xlane.f32.xlu0 %v430
      %v432 = vpop.xlane.xlu0 %431
      %v433 = vsub.f32 %v424, %v429
      %v434 = vsub.f32 %v425, %v432
      %v435 = vmul.f32 %v433, 1.442695
      %v436 = vpow.pop %v435
      %v437 = vmul.f32 %v434, 1.442695
      %v438 = vpow.pop %v437
      %v439 = vsel %vm426, %v436, 0.0
      %440 = vadd.xlane.f32.xlu0 %v439
      %v441 = vpop.xlane.xlu0 %440
      %v442 = vsel %vm426, %v438, 0.0
      %443 = vadd.xlane.f32.xlu0 %v442
      %v444 = vpop.xlane.xlu0 %443
      %v445 = vrcp.pop %v441
      %v446 = vrcp.pop %v444
      %v447 = vmul.f32 %v436, %v445
      %v448 = vmul.f32 %v438, %v446
      %v449 = vpack.c.bf16 %v448, %v447
      %v451 = vsel %vm426, %v449, 0
      %vm453 = vcmask 1044480
      %v455 = vsel %vm453, %v375, 0
      %457 = vmatprep.subr.bf16.mxu0 0
      %458 = vmatpush1.bf16.msra.mxu0 %v455
      %459 = vmatprep.subr.bf16.mxu0 0
      %460 = vmatpush1.bf16.msra.mxu0 0
      %461 = vmatprep.subr.bf16.mxu0 0
      %462 = vmatpush1.bf16.msra.mxu0 0
      %463 = vmatprep.subr.bf16.mxu0 0
      %464 = vmatpush1.bf16.msra.mxu0 0
      %465 = vmatprep.subr.bf16.mxu0 0
      %466 = vmatpush1.bf16.msra.mxu0 0
      %467 = vmatprep.subr.bf16.mxu0 0
      %468 = vmatpush1.bf16.msra.mxu0 0
      %469 = vmatprep.subr.bf16.mxu0 0
      %470 = vmatpush1.bf16.msra.mxu0 0
      %471 = vmatprep.subr.bf16.mxu0 0
      %472 = vmatpush1.bf16.msra.mxu0 0
      %473 = vmatprep.subr.bf16.mxu0 0
      %474 = vmatpush1.bf16.msra.mxu0 0
      %475 = vmatprep.subr.bf16.mxu0 0
      %476 = vmatpush1.bf16.msra.mxu0 0
      %477 = vmatprep.subr.bf16.mxu0 0
      %478 = vmatpush1.bf16.msra.mxu0 0
      %479 = vmatprep.subr.bf16.mxu0 0
      %480 = vmatpush1.bf16.msra.mxu0 0
      %481 = vmatprep.subr.bf16.mxu0 0
      %482 = vmatpush1.bf16.msra.mxu0 0
      %483 = vmatprep.subr.bf16.mxu0 0
      %484 = vmatpush1.bf16.msra.mxu0 0
      %485 = vmatprep.subr.bf16.mxu0 0
      %486 = vmatpush1.bf16.msra.mxu0 0
      %487 = vmatprep.subr.bf16.mxu0 0
      %488 = vmatpush1.bf16.msra.mxu0 0
      %489 = vmatprep.mubr.bf16.mxu0 0
      %490 = vmatmul.mubr.bf16.gmra.mrb[0].mxu0 %v451
      %v491 = vpop.f32.mrb[0].mxu0
      %v492 = vadd.f32 0.0, %v491
      %v493 = vpop.f32.mrb[0].mxu0
      %v494 = vpop.f32.mrb[0].mxu0
      %v495 = vadd.f32 0.0, %v494
      %v496 = vpop.f32.mrb[0].mxu0
      %497 = vdwg.mxu0
      %v498 = vpack.c.bf16 %v495, %v492
      %v499 = vld [vmem:[%s3] sm:$0xf]
      %s500 = scalar_lea.vmem %s345, 16
      %v501 = vld [vmem:[%s500] sm:$0xff]
      %v502 = vld [vmem:[%s500 + $0x8] sm:$0xff]
      %v503 = vpack.c.bf16 %v502, %v501
      %s504 = scalar_lea.vmem %s350, 16
      %v505 = vld [vmem:[%s504] sm:$0xff]
      %v506 = vld [vmem:[%s504 + $0x8] sm:$0x3]
      %v507 = vpack.c.bf16 %v506, %v505
      %s508 = scalar_lea.vmem %s355, 16
      %v509 = vld [vmem:[%s508] sm:$0xff]
      %v510 = vld [vmem:[%s508 + $0x8] sm:$0x3]
      %v511 = vpack.c.bf16 %v510, %v509
      %v513 = vsel %vm376, %v503, 0
      %v516 = vsel %vm376, %v507, 0
      %518 = vmatprep.subr.bf16.mxu0 0
      %519 = vmatpush1.bf16.xpose.msra.mxu0 %v516
      %520 = vmatprep.subr.bf16.mxu0 0
      %521 = vmatpush1.bf16.xpose.msra.mxu0 0
      %522 = vmatprep.subr.bf16.mxu0 0
      %523 = vmatpush1.bf16.xpose.msra.mxu0 0
      %524 = vmatprep.subr.bf16.mxu0 0
      %525 = vmatpush1.bf16.xpose.msra.mxu0 0
      %526 = vmatprep.subr.bf16.mxu0 0
      %527 = vmatpush1.bf16.xpose.msra.mxu0 0
      %528 = vmatprep.subr.bf16.mxu0 0
      %529 = vmatpush1.bf16.xpose.msra.mxu0 0
      %530 = vmatprep.subr.bf16.mxu0 0
      %531 = vmatpush1.bf16.xpose.msra.mxu0 0
      %532 = vmatprep.subr.bf16.mxu0 0
      %533 = vmatpush1.bf16.xpose.msra.mxu0 0
      %534 = vmatprep.subr.bf16.mxu0 0
      %535 = vmatpush1.bf16.xpose.msra.mxu0 0
      %536 = vmatprep.subr.bf16.mxu0 0
      %537 = vmatpush1.bf16.xpose.msra.mxu0 0
      %538 = vmatprep.subr.bf16.mxu0 0
      %539 = vmatpush1.bf16.xpose.msra.mxu0 0
      %540 = vmatprep.subr.bf16.mxu0 0
      %541 = vmatpush1.bf16.xpose.msra.mxu0 0
      %542 = vmatprep.subr.bf16.mxu0 0
      %543 = vmatpush1.bf16.xpose.msra.mxu0 0
      %544 = vmatprep.subr.bf16.mxu0 0
      %545 = vmatpush1.bf16.xpose.msra.mxu0 0
      %546 = vmatprep.subr.bf16.mxu0 0
      %547 = vmatpush1.bf16.xpose.msra.mxu0 0
      %548 = vmatprep.subr.bf16.mxu0 0
      %549 = vmatpush1.bf16.xpose.msra.mxu0 0
      %550 = vmatprep.mubr.bf16.mxu0 0
      %551 = vmatmul.mubr.bf16.gmra.mrb[0].mxu0 %v513
      %v552 = vpop.f32.mrb[0].mxu0
      %v553 = vadd.f32 0.0, %v552
      %v554 = vpop.f32.mrb[0].mxu0
      %v555 = vpop.f32.mrb[0].mxu0
      %v556 = vadd.f32 0.0, %v555
      %v557 = vpop.f32.mrb[0].mxu0
      %558 = vdwg.mxu0
      %v559 = vmul.f32 %v553, 0.35355338
      %v560 = vmul.f32 %v556, 0.35355338
      %v561 = vsel %vm426, %v559, -inf
      %562 = vmax.xlane.f32.xlu0 %v561
      %v563 = vpop.xlane.xlu0 %562
      %v564 = vsel %vm426, %v560, -inf
      %565 = vmax.xlane.f32.xlu0 %v564
      %v566 = vpop.xlane.xlu0 %565
      %v567 = vsub.f32 %v559, %v563
      %v568 = vsub.f32 %v560, %v566
      %v569 = vmul.f32 %v567, 1.442695
      %v570 = vpow.pop %v569
      %v571 = vmul.f32 %v568, 1.442695
      %v572 = vpow.pop %v571
      %v573 = vsel %vm426, %v570, 0.0
      %574 = vadd.xlane.f32.xlu0 %v573
      %v575 = vpop.xlane.xlu0 %574
      %v576 = vsel %vm426, %v572, 0.0
      %577 = vadd.xlane.f32.xlu0 %v576
      %v578 = vpop.xlane.xlu0 %577
      %v579 = vrcp.pop %v575
      %v580 = vrcp.pop %v578
      %v581 = vmul.f32 %v570, %v579
      %v582 = vmul.f32 %v572, %v580
      %v583 = vpack.c.bf16 %v582, %v581
      %v585 = vsel %vm426, %v583, 0
      %v588 = vsel %vm453, %v511, 0
      %590 = vmatprep.subr.bf16.mxu0 0
      %591 = vmatpush1.bf16.msra.mxu0 %v588
      %592 = vmatprep.subr.bf16.mxu0 0
      %593 = vmatpush1.bf16.msra.mxu0 0
      %594 = vmatprep.subr.bf16.mxu0 0
      %595 = vmatpush1.bf16.msra.mxu0 0
      %596 = vmatprep.subr.bf16.mxu0 0
      %597 = vmatpush1.bf16.msra.mxu0 0
      %598 = vmatprep.subr.bf16.mxu0 0
      %599 = vmatpush1.bf16.msra.mxu0 0
      %600 = vmatprep.subr.bf16.mxu0 0
      %601 = vmatpush1.bf16.msra.mxu0 0
      %602 = vmatprep.subr.bf16.mxu0 0
      %603 = vmatpush1.bf16.msra.mxu0 0
      %604 = vmatprep.subr.bf16.mxu0 0
      %605 = vmatpush1.bf16.msra.mxu0 0
      %606 = vmatprep.subr.bf16.mxu0 0
      %607 = vmatpush1.bf16.msra.mxu0 0
      %608 = vmatprep.subr.bf16.mxu0 0
      %609 = vmatpush1.bf16.msra.mxu0 0
      %610 = vmatprep.subr.bf16.mxu0 0
      %611 = vmatpush1.bf16.msra.mxu0 0
      %612 = vmatprep.subr.bf16.mxu0 0
      %613 = vmatpush1.bf16.msra.mxu0 0
      %614 = vmatprep.subr.bf16.mxu0 0
      %615 = vmatpush1.bf16.msra.mxu0 0
      %616 = vmatprep.subr.bf16.mxu0 0
      %617 = vmatpush1.bf16.msra.mxu0 0
      %618 = vmatprep.subr.bf16.mxu0 0
      %619 = vmatpush1.bf16.msra.mxu0 0
      %620 = vmatprep.subr.bf16.mxu0 0
      %621 = vmatpush1.bf16.msra.mxu0 0
      %622 = vmatprep.mubr.bf16.mxu0 0
      %623 = vmatmul.mubr.bf16.gmra.mrb[0].mxu0 %v585
      %v624 = vpop.f32.mrb[0].mxu0
      %v625 = vadd.f32 0.0, %v624
      %v626 = vpop.f32.mrb[0].mxu0
      %v627 = vpop.f32.mrb[0].mxu0
      %v628 = vadd.f32 0.0, %v627
      %v629 = vpop.f32.mrb[0].mxu0
      %630 = vdwg.mxu0
      %v631 = vpack.c.bf16 %v628, %v625
      %s632 = scalar_lea.vmem %s3, 4
      %v633 = vld [vmem:[%s632] sm:$0xf]
      %v635 = vsel %vm376, %v631, 0
      %vm637 = vcmask 1043456
      %v639 = vsel %vm637, %v633, 0
      %641 = vmatprep.subr.bf16.mxu0 0
      %642 = vmatpush1.bf16.msra.mxu0 %v639
      %643 = vmatprep.subr.bf16.mxu0 0
      %644 = vmatpush1.bf16.msra.mxu0 0
      %645 = vmatprep.subr.bf16.mxu0 0
      %646 = vmatpush1.bf16.msra.mxu0 0
      %647 = vmatprep.subr.bf16.mxu0 0
      %648 = vmatpush1.bf16.msra.mxu0 0
      %649 = vmatprep.subr.bf16.mxu0 0
      %650 = vmatpush1.bf16.msra.mxu0 0
      %651 = vmatprep.subr.bf16.mxu0 0
      %652 = vmatpush1.bf16.msra.mxu0 0
      %653 = vmatprep.subr.bf16.mxu0 0
      %654 = vmatpush1.bf16.msra.mxu0 0
      %655 = vmatprep.subr.bf16.mxu0 0
      %656 = vmatpush1.bf16.msra.mxu0 0
      %657 = vmatprep.subr.bf16.mxu0 0
      %658 = vmatpush1.bf16.msra.mxu0 0
      %659 = vmatprep.subr.bf16.mxu0 0
      %660 = vmatpush1.bf16.msra.mxu0 0
      %661 = vmatprep.subr.bf16.mxu0 0
      %662 = vmatpush1.bf16.msra.mxu0 0
      %663 = vmatprep.subr.bf16.mxu0 0
      %664 = vmatpush1.bf16.msra.mxu0 0
      %665 = vmatprep.subr.bf16.mxu0 0
      %666 = vmatpush1.bf16.msra.mxu0 0
      %667 = vmatprep.subr.bf16.mxu0 0
      %668 = vmatpush1.bf16.msra.mxu0 0
      %669 = vmatprep.subr.bf16.mxu0 0
      %670 = vmatpush1.bf16.msra.mxu0 0
      %671 = vmatprep.subr.bf16.mxu0 0
      %672 = vmatpush1.bf16.msra.mxu0 0
      %673 = vmatprep.mubr.bf16.mxu0 0
      %674 = vmatmul.mubr.bf16.gmra.mrb[0].mxu0 %v635
      %v675 = vpop.f32.mrb[0].mxu0
      %v676 = vadd.f32 0.0, %v675
      %v677 = vpop.f32.mrb[0].mxu0
      %v678 = vpop.f32.mrb[0].mxu0
      %v679 = vadd.f32 0.0, %v678
      %v680 = vpop.f32.mrb[0].mxu0
      %681 = vdwg.mxu0
      %v683 = vsel %vm376, %v498, 0
      %v686 = vsel %vm637, %v499, 0
      %688 = vmatprep.subr.bf16.mxu0 0
      %689 = vmatpush1.bf16.msra.mxu0 %v686
      %690 = vmatprep.subr.bf16.mxu0 0
      %691 = vmatpush1.bf16.msra.mxu0 0
      %692 = vmatprep.subr.bf16.mxu0 0
      %693 = vmatpush1.bf16.msra.mxu0 0
      %694 = vmatprep.subr.bf16.mxu0 0
      %695 = vmatpush1.bf16.msra.mxu0 0
      %696 = vmatprep.subr.bf16.mxu0 0
      %697 = vmatpush1.bf16.msra.mxu0 0
      %698 = vmatprep.subr.bf16.mxu0 0
      %699 = vmatpush1.bf16.msra.mxu0 0
      %700 = vmatprep.subr.bf16.mxu0 0
      %701 = vmatpush1.bf16.msra.mxu0 0
      %702 = vmatprep.subr.bf16.mxu0 0
      %703 = vmatpush1.bf16.msra.mxu0 0
      %704 = vmatprep.subr.bf16.mxu0 0
      %705 = vmatpush1.bf16.msra.mxu0 0
      %706 = vmatprep.subr.bf16.mxu0 0
      %707 = vmatpush1.bf16.msra.mxu0 0
      %708 = vmatprep.subr.bf16.mxu0 0
      %709 = vmatpush1.bf16.msra.mxu0 0
      %710 = vmatprep.subr.bf16.mxu0 0
      %711 = vmatpush1.bf16.msra.mxu0 0
      %712 = vmatprep.subr.bf16.mxu0 0
      %713 = vmatpush1.bf16.msra.mxu0 0
      %714 = vmatprep.subr.bf16.mxu0 0
      %715 = vmatpush1.bf16.msra.mxu0 0
      %716 = vmatprep.subr.bf16.mxu0 0
      %717 = vmatpush1.bf16.msra.mxu0 0
      %718 = vmatprep.subr.bf16.mxu0 0
      %719 = vmatpush1.bf16.msra.mxu0 0
      %720 = vmatprep.mubr.bf16.mxu0 0
      %721 = vmatmul.mubr.bf16.gmra.mrb[0].mxu0 %v683
      %v722 = vpop.f32.mrb[0].mxu0
      %v723 = vadd.f32 %v676, %v722
      %v724 = vpop.f32.mrb[0].mxu0
      %v725 = vpop.f32.mrb[0].mxu0
      %v726 = vadd.f32 %v679, %v725
      %v727 = vpop.f32.mrb[0].mxu0
      %728 = vdwg.mxu0
      %s729 = scalar_lea.vmem %s345, 32
      %v730 = vld [vmem:[%s729] sm:$0xff]
      %v731 = vld [vmem:[%s729 + $0x8] sm:$0xff]
      %v732 = vpack.c.bf16 %v731, %v730
      %s733 = scalar_lea.vmem %s350, 32
      %v734 = vld [vmem:[%s733] sm:$0xff]
      %v735 = vld [vmem:[%s733 + $0x8] sm:$0x3]
      %v736 = vpack.c.bf16 %v735, %v734
      %s737 = scalar_lea.vmem %s355, 32
      %v738 = vld [vmem:[%s737] sm:$0xff]
      %v739 = vld [vmem:[%s737 + $0x8] sm:$0x3]
      %v740 = vpack.c.bf16 %v739, %v738
      %v742 = vsel %vm376, %v732, 0
      %v745 = vsel %vm376, %v736, 0
      %747 = vmatprep.subr.bf16.mxu0 0
      %748 = vmatpush1.bf16.xpose.msra.mxu0 %v745
      %749 = vmatprep.subr.bf16.mxu0 0
      %750 = vmatpush1.bf16.xpose.msra.mxu0 0
      %751 = vmatprep.subr.bf16.mxu0 0
      %752 = vmatpush1.bf16.xpose.msra.mxu0 0
      %753 = vmatprep.subr.bf16.mxu0 0
      %754 = vmatpush1.bf16.xpose.msra.mxu0 0
      %755 = vmatprep.subr.bf16.mxu0 0
      %756 = vmatpush1.bf16.xpose.msra.mxu0 0
      %757 = vmatprep.subr.bf16.mxu0 0
      %758 = vmatpush1.bf16.xpose.msra.mxu0 0
      %759 = vmatprep.subr.bf16.mxu0 0
      %760 = vmatpush1.bf16.xpose.msra.mxu0 0
      %761 = vmatprep.subr.bf16.mxu0 0
      %762 = vmatpush1.bf16.xpose.msra.mxu0 0
      %763 = vmatprep.subr.bf16.mxu0 0
      %764 = vmatpush1.bf16.xpose.msra.mxu0 0
      %765 = vmatprep.subr.bf16.mxu0 0
      %766 = vmatpush1.bf16.xpose.msra.mxu0 0
      %767 = vmatprep.subr.bf16.mxu0 0
      %768 = vmatpush1.bf16.xpose.msra.mxu0 0
      %769 = vmatprep.subr.bf16.mxu0 0
      %770 = vmatpush1.bf16.xpose.msra.mxu0 0
      %771 = vmatprep.subr.bf16.mxu0 0
      %772 = vmatpush1.bf16.xpose.msra.mxu0 0
      %773 = vmatprep.subr.bf16.mxu0 0
      %774 = vmatpush1.bf16.xpose.msra.mxu0 0
      %775 = vmatprep.subr.bf16.mxu0 0
      %776 = vmatpush1.bf16.xpose.msra.mxu0 0
      %777 = vmatprep.subr.bf16.mxu0 0
      %778 = vmatpush1.bf16.xpose.msra.mxu0 0
      %779 = vmatprep.mubr.bf16.mxu0 0
      %780 = vmatmul.mubr.bf16.gmra.mrb[0].mxu0 %v742
      %v781 = vpop.f32.mrb[0].mxu0
      %v782 = vadd.f32 0.0, %v781
      %v783 = vpop.f32.mrb[0].mxu0
      %v784 = vpop.f32.mrb[0].mxu0
      %v785 = vadd.f32 0.0, %v784
      %v786 = vpop.f32.mrb[0].mxu0
      %787 = vdwg.mxu0
      %v788 = vmul.f32 %v782, 0.35355338
      %v789 = vmul.f32 %v785, 0.35355338
      %v790 = vsel %vm426, %v788, -inf
      %791 = vmax.xlane.f32.xlu0 %v790
      %v792 = vpop.xlane.xlu0 %791
      %v793 = vsel %vm426, %v789, -inf
      %794 = vmax.xlane.f32.xlu0 %v793
      %v795 = vpop.xlane.xlu0 %794
      %v796 = vsub.f32 %v788, %v792
      %v797 = vsub.f32 %v789, %v795
      %v798 = vmul.f32 %v796, 1.442695
      %v799 = vpow.pop %v798
      %v800 = vmul.f32 %v797, 1.442695
      %v801 = vpow.pop %v800
      %v802 = vsel %vm426, %v799, 0.0
      %803 = vadd.xlane.f32.xlu0 %v802
      %v804 = vpop.xlane.xlu0 %803
      %v805 = vsel %vm426, %v801, 0.0
      %806 = vadd.xlane.f32.xlu0 %v805
      %v807 = vpop.xlane.xlu0 %806
      %v808 = vrcp.pop %v804
      %v809 = vrcp.pop %v807
      %v810 = vmul.f32 %v799, %v808
      %v811 = vmul.f32 %v801, %v809
      %v812 = vpack.c.bf16 %v811, %v810
      %v814 = vsel %vm426, %v812, 0
      %v817 = vsel %vm453, %v740, 0
      %819 = vmatprep.subr.bf16.mxu0 0
      %820 = vmatpush1.bf16.msra.mxu0 %v817
      %821 = vmatprep.subr.bf16.mxu0 0
      %822 = vmatpush1.bf16.msra.mxu0 0
      %823 = vmatprep.subr.bf16.mxu0 0
      %824 = vmatpush1.bf16.msra.mxu0 0
      %825 = vmatprep.subr.bf16.mxu0 0
      %826 = vmatpush1.bf16.msra.mxu0 0
      %827 = vmatprep.subr.bf16.mxu0 0
      %828 = vmatpush1.bf16.msra.mxu0 0
      %829 = vmatprep.subr.bf16.mxu0 0
      %830 = vmatpush1.bf16.msra.mxu0 0
      %831 = vmatprep.subr.bf16.mxu0 0
      %832 = vmatpush1.bf16.msra.mxu0 0
      %833 = vmatprep.subr.bf16.mxu0 0
      %834 = vmatpush1.bf16.msra.mxu0 0
      %835 = vmatprep.subr.bf16.mxu0 0
      %836 = vmatpush1.bf16.msra.mxu0 0
      %837 = vmatprep.subr.bf16.mxu0 0
      %838 = vmatpush1.bf16.msra.mxu0 0
      %839 = vmatprep.subr.bf16.mxu0 0
      %840 = vmatpush1.bf16.msra.mxu0 0
      %841 = vmatprep.subr.bf16.mxu0 0
      %842 = vmatpush1.bf16.msra.mxu0 0
      %843 = vmatprep.subr.bf16.mxu0 0
      %844 = vmatpush1.bf16.msra.mxu0 0
      %845 = vmatprep.subr.bf16.mxu0 0
      %846 = vmatpush1.bf16.msra.mxu0 0
      %847 = vmatprep.subr.bf16.mxu0 0
      %848 = vmatpush1.bf16.msra.mxu0 0
      %849 = vmatprep.subr.bf16.mxu0 0
      %850 = vmatpush1.bf16.msra.mxu0 0
      %851 = vmatprep.mubr.bf16.mxu0 0
      %852 = vmatmul.mubr.bf16.gmra.mrb[0].mxu0 %v814
      %v853 = vpop.f32.mrb[0].mxu0
      %v854 = vadd.f32 0.0, %v853
      %v855 = vpop.f32.mrb[0].mxu0
      %v856 = vpop.f32.mrb[0].mxu0
      %v857 = vadd.f32 0.0, %v856
      %v858 = vpop.f32.mrb[0].mxu0
      %859 = vdwg.mxu0
      %v860 = vpack.c.bf16 %v857, %v854
      %s861 = scalar_lea.vmem %s3, 8
      %v862 = vld [vmem:[%s861] sm:$0xf]
      %v864 = vsel %vm376, %v860, 0
      %v867 = vsel %vm637, %v862, 0
      %869 = vmatprep.subr.bf16.mxu0 0
      %870 = vmatpush1.bf16.msra.mxu0 %v867
      %871 = vmatprep.subr.bf16.mxu0 0
      %872 = vmatpush1.bf16.msra.mxu0 0
      %873 = vmatprep.subr.bf16.mxu0 0
      %874 = vmatpush1.bf16.msra.mxu0 0
      %875 = vmatprep.subr.bf16.mxu0 0
      %876 = vmatpush1.bf16.msra.mxu0 0
      %877 = vmatprep.subr.bf16.mxu0 0
      %878 = vmatpush1.bf16.msra.mxu0 0
      %879 = vmatprep.subr.bf16.mxu0 0
      %880 = vmatpush1.bf16.msra.mxu0 0
      %881 = vmatprep.subr.bf16.mxu0 0
      %882 = vmatpush1.bf16.msra.mxu0 0
      %883 = vmatprep.subr.bf16.mxu0 0
      %884 = vmatpush1.bf16.msra.mxu0 0
      %885 = vmatprep.subr.bf16.mxu0 0
      %886 = vmatpush1.bf16.msra.mxu0 0
      %887 = vmatprep.subr.bf16.mxu0 0
      %888 = vmatpush1.bf16.msra.mxu0 0
      %889 = vmatprep.subr.bf16.mxu0 0
      %890 = vmatpush1.bf16.msra.mxu0 0
      %891 = vmatprep.subr.bf16.mxu0 0
      %892 = vmatpush1.bf16.msra.mxu0 0
      %893 = vmatprep.subr.bf16.mxu0 0
      %894 = vmatpush1.bf16.msra.mxu0 0
      %895 = vmatprep.subr.bf16.mxu0 0
      %896 = vmatpush1.bf16.msra.mxu0 0
      %897 = vmatprep.subr.bf16.mxu0 0
      %898 = vmatpush1.bf16.msra.mxu0 0
      %899 = vmatprep.subr.bf16.mxu0 0
      %900 = vmatpush1.bf16.msra.mxu0 0
      %901 = vmatprep.mubr.bf16.mxu0 0
      %902 = vmatmul.mubr.bf16.gmra.mrb[0].mxu0 %v864
      %v903 = vpop.f32.mrb[0].mxu0
      %v904 = vadd.f32 0.0, %v903
      %v905 = vpop.f32.mrb[0].mxu0
      %v906 = vpop.f32.mrb[0].mxu0
      %v907 = vadd.f32 0.0, %v906
      %v908 = vpop.f32.mrb[0].mxu0
      %909 = vdwg.mxu0
      %v910 = vadd.f32 %v723, %v904
      %v911 = vadd.f32 %v726, %v907
      %s912 = scalar_lea.vmem %s345, 48
      %v913 = vld [vmem:[%s912] sm:$0xff]
      %v914 = vld [vmem:[%s912 + $0x8] sm:$0xff]
      %v915 = vpack.c.bf16 %v914, %v913
      %s916 = scalar_lea.vmem %s350, 48
      %v917 = vld [vmem:[%s916] sm:$0xff]
      %v918 = vld [vmem:[%s916 + $0x8] sm:$0x3]
      %v919 = vpack.c.bf16 %v918, %v917
      %s920 = scalar_lea.vmem %s355, 48
      %v921 = vld [vmem:[%s920] sm:$0xff]
      %v922 = vld [vmem:[%s920 + $0x8] sm:$0x3]
      %v923 = vpack.c.bf16 %v922, %v921
      %v925 = vsel %vm376, %v915, 0
      %v928 = vsel %vm376, %v919, 0
      %930 = vmatprep.subr.bf16.mxu0 0
      %931 = vmatpush1.bf16.xpose.msra.mxu0 %v928
      %932 = vmatprep.subr.bf16.mxu0 0
      %933 = vmatpush1.bf16.xpose.msra.mxu0 0
      %934 = vmatprep.subr.bf16.mxu0 0
      %935 = vmatpush1.bf16.xpose.msra.mxu0 0
      %936 = vmatprep.subr.bf16.mxu0 0
      %937 = vmatpush1.bf16.xpose.msra.mxu0 0
      %938 = vmatprep.subr.bf16.mxu0 0
      %939 = vmatpush1.bf16.xpose.msra.mxu0 0
      %940 = vmatprep.subr.bf16.mxu0 0
      %941 = vmatpush1.bf16.xpose.msra.mxu0 0
      %942 = vmatprep.subr.bf16.mxu0 0
      %943 = vmatpush1.bf16.xpose.msra.mxu0 0
      %944 = vmatprep.subr.bf16.mxu0 0
      %945 = vmatpush1.bf16.xpose.msra.mxu0 0
      %946 = vmatprep.subr.bf16.mxu0 0
      %947 = vmatpush1.bf16.xpose.msra.mxu0 0
      %948 = vmatprep.subr.bf16.mxu0 0
      %949 = vmatpush1.bf16.xpose.msra.mxu0 0
      %950 = vmatprep.subr.bf16.mxu0 0
      %951 = vmatpush1.bf16.xpose.msra.mxu0 0
      %952 = vmatprep.subr.bf16.mxu0 0
      %953 = vmatpush1.bf16.xpose.msra.mxu0 0
      %954 = vmatprep.subr.bf16.mxu0 0
      %955 = vmatpush1.bf16.xpose.msra.mxu0 0
      %956 = vmatprep.subr.bf16.mxu0 0
      %957 = vmatpush1.bf16.xpose.msra.mxu0 0
      %958 = vmatprep.subr.bf16.mxu0 0
      %959 = vmatpush1.bf16.xpose.msra.mxu0 0
      %960 = vmatprep.subr.bf16.mxu0 0
      %961 = vmatpush1.bf16.xpose.msra.mxu0 0
      %962 = vmatprep.mubr.bf16.mxu0 0
      %963 = vmatmul.mubr.bf16.gmra.mrb[0].mxu0 %v925
      %v964 = vpop.f32.mrb[0].mxu0
      %v965 = vadd.f32 0.0, %v964
      %v966 = vpop.f32.mrb[0].mxu0
      %v967 = vpop.f32.mrb[0].mxu0
      %v968 = vadd.f32 0.0, %v967
      %v969 = vpop.f32.mrb[0].mxu0
      %970 = vdwg.mxu0
      %v971 = vmul.f32 %v965, 0.35355338
      %v972 = vmul.f32 %v968, 0.35355338
      %v973 = vsel %vm426, %v971, -inf
      %974 = vmax.xlane.f32.xlu0 %v973
      %v975 = vpop.xlane.xlu0 %974
      %v976 = vsel %vm426, %v972, -inf
      %977 = vmax.xlane.f32.xlu0 %v976
      %v978 = vpop.xlane.xlu0 %977
      %v979 = vsub.f32 %v971, %v975
      %v980 = vsub.f32 %v972, %v978
      %v981 = vmul.f32 %v979, 1.442695
      %v982 = vpow.pop %v981
      %v983 = vmul.f32 %v980, 1.442695
      %v984 = vpow.pop %v983
      %v985 = vsel %vm426, %v982, 0.0
      %986 = vadd.xlane.f32.xlu0 %v985
      %v987 = vpop.xlane.xlu0 %986
      %v988 = vsel %vm426, %v984, 0.0
      %989 = vadd.xlane.f32.xlu0 %v988
      %v990 = vpop.xlane.xlu0 %989
      %v991 = vrcp.pop %v987
      %v992 = vrcp.pop %v990
      %v993 = vmul.f32 %v982, %v991
      %v994 = vmul.f32 %v984, %v992
      %v995 = vpack.c.bf16 %v994, %v993
      %v997 = vsel %vm426, %v995, 0
      %v1000 = vsel %vm453, %v923, 0
      %1002 = vmatprep.subr.bf16.mxu0 0
      %1003 = vmatpush1.bf16.msra.mxu0 %v1000
      %1004 = vmatprep.subr.bf16.mxu0 0
      %1005 = vmatpush1.bf16.msra.mxu0 0
      %1006 = vmatprep.subr.bf16.mxu0 0
      %1007 = vmatpush1.bf16.msra.mxu0 0
      %1008 = vmatprep.subr.bf16.mxu0 0
      %1009 = vmatpush1.bf16.msra.mxu0 0
      %1010 = vmatprep.subr.bf16.mxu0 0
      %1011 = vmatpush1.bf16.msra.mxu0 0
      %1012 = vmatprep.subr.bf16.mxu0 0
      %1013 = vmatpush1.bf16.msra.mxu0 0
      %1014 = vmatprep.subr.bf16.mxu0 0
      %1015 = vmatpush1.bf16.msra.mxu0 0
      %1016 = vmatprep.subr.bf16.mxu0 0
      %1017 = vmatpush1.bf16.msra.mxu0 0
      %1018 = vmatprep.subr.bf16.mxu0 0
      %1019 = vmatpush1.bf16.msra.mxu0 0
      %1020 = vmatprep.subr.bf16.mxu0 0
      %1021 = vmatpush1.bf16.msra.mxu0 0
      %1022 = vmatprep.subr.bf16.mxu0 0
      %1023 = vmatpush1.bf16.msra.mxu0 0
      %1024 = vmatprep.subr.bf16.mxu0 0
      %1025 = vmatpush1.bf16.msra.mxu0 0
      %1026 = vmatprep.subr.bf16.mxu0 0
      %1027 = vmatpush1.bf16.msra.mxu0 0
      %1028 = vmatprep.subr.bf16.mxu0 0
      %1029 = vmatpush1.bf16.msra.mxu0 0
      %1030 = vmatprep.subr.bf16.mxu0 0
      %1031 = vmatpush1.bf16.msra.mxu0 0
      %1032 = vmatprep.subr.bf16.mxu0 0
      %1033 = vmatpush1.bf16.msra.mxu0 0
      %1034 = vmatprep.mubr.bf16.mxu0 0
      %1035 = vmatmul.mubr.bf16.gmra.mrb[0].mxu0 %v997
      %v1036 = vpop.f32.mrb[0].mxu0
      %v1037 = vadd.f32 0.0, %v1036
      %v1038 = vpop.f32.mrb[0].mxu0
      %v1039 = vpop.f32.mrb[0].mxu0
      %v1040 = vadd.f32 0.0, %v1039
      %v1041 = vpop.f32.mrb[0].mxu0
      %1042 = vdwg.mxu0
      %v1043 = vpack.c.bf16 %v1040, %v1037
      %s1044 = scalar_lea.vmem %s3, 12
      %v1045 = vld [vmem:[%s1044] sm:$0xf]
      %v1047 = vsel %vm376, %v1043, 0
      %v1050 = vsel %vm637, %v1045, 0
      %1052 = vmatprep.subr.bf16.mxu0 0
      %1053 = vmatpush1.bf16.msra.mxu0 %v1050
      %1054 = vmatprep.subr.bf16.mxu0 0
      %1055 = vmatpush1.bf16.msra.mxu0 0
      %1056 = vmatprep.subr.bf16.mxu0 0
      %1057 = vmatpush1.bf16.msra.mxu0 0
      %1058 = vmatprep.subr.bf16.mxu0 0
      %1059 = vmatpush1.bf16.msra.mxu0 0
      %1060 = vmatprep.subr.bf16.mxu0 0
      %1061 = vmatpush1.bf16.msra.mxu0 0
      %1062 = vmatprep.subr.bf16.mxu0 0
      %1063 = vmatpush1.bf16.msra.mxu0 0
      %1064 = vmatprep.subr.bf16.mxu0 0
      %1065 = vmatpush1.bf16.msra.mxu0 0
      %1066 = vmatprep.subr.bf16.mxu0 0
      %1067 = vmatpush1.bf16.msra.mxu0 0
      %1068 = vmatprep.subr.bf16.mxu0 0
      %1069 = vmatpush1.bf16.msra.mxu0 0
      %1070 = vmatprep.subr.bf16.mxu0 0
      %1071 = vmatpush1.bf16.msra.mxu0 0
      %1072 = vmatprep.subr.bf16.mxu0 0
      %1073 = vmatpush1.bf16.msra.mxu0 0
      %1074 = vmatprep.subr.bf16.mxu0 0
      %1075 = vmatpush1.bf16.msra.mxu0 0
      %1076 = vmatprep.subr.bf16.mxu0 0
      %1077 = vmatpush1.bf16.msra.mxu0 0
      %1078 = vmatprep.subr.bf16.mxu0 0
      %1079 = vmatpush1.bf16.msra.mxu0 0
      %1080 = vmatprep.subr.bf16.mxu0 0
      %1081 = vmatpush1.bf16.msra.mxu0 0
      %1082 = vmatprep.subr.bf16.mxu0 0
      %1083 = vmatpush1.bf16.msra.mxu0 0
      %1084 = vmatprep.mubr.bf16.mxu0 0
      %1085 = vmatmul.mubr.bf16.gmra.mrb[0].mxu0 %v1047
      %v1086 = vpop.f32.mrb[0].mxu0
      %v1087 = vadd.f32 0.0, %v1086
      %v1088 = vpop.f32.mrb[0].mxu0
      %v1089 = vpop.f32.mrb[0].mxu0
      %v1090 = vadd.f32 0.0, %v1089
      %v1091 = vpop.f32.mrb[0].mxu0
      %1092 = vdwg.mxu0
      %v1093 = vadd.f32 %v910, %v1087
      %v1094 = vadd.f32 %v911, %v1090
      %v1095 = vld [vmem:[%s4] sm:$0x1]
      %v1097 = vlaneseq
      %v1098 = vshrl.u32 %v1097, 7
      %v1099 = vsub.s32 0, %v1098
      %v1100 = vrot.slane %v1095, %v1099
      %v1102 = vadd.f32 %v1093, %v1100
      %v1103 = vadd.f32 %v1094, %v1100
      %v1104 = vld [vmem:[%s360] sm:$0xff]
      %v1105 = vld [vmem:[%s360 + $0x8] sm:$0xff]
      %v1106 = vadd.f32 %v1102, %v1104
      %v1107 = vadd.f32 %v1103, %v1105
      %vm1108 = vcmask 261120
      %v1109 = vsel %vm1108, %v1106, 0.0
      %1110 = vadd.xlane.f32.xlu0 %v1109
      %v1111 = vpop.xlane.xlu0 %1110
      %v1112 = vsel %vm1108, %v1107, 0.0
      %1113 = vadd.xlane.f32.xlu0 %v1112
      %v1114 = vpop.xlane.xlu0 %1113
      %v1115 = vrcp.pop 32.0
      %v1116 = vmul.f32 %v1111, %v1115
      %v1117 = vmul.f32 %v1114, %v1115
      %v1118 = vsub.f32 %v1106, %v1116
      %v1119 = vsub.f32 %v1107, %v1117
      %v1120 = vmul.f32 %v1118, %v1118
      %v1121 = vmul.f32 %v1119, %v1119
      %v1122 = vsel %vm1108, %v1120, 0.0
      %1123 = vadd.xlane.f32.xlu0 %v1122
      %v1124 = vpop.xlane.xlu0 %1123
      %v1125 = vsel %vm1108, %v1121, 0.0
      %1126 = vadd.xlane.f32.xlu0 %v1125
      %v1127 = vpop.xlane.xlu0 %1126
      %v1128 = vmul.f32 %v1124, %v1115
      %v1129 = vmul.f32 %v1127, %v1115
      %v1130 = vadd.f32 %v1128, 1e-05
      %v1131 = vadd.f32 %v1129, 1e-05
      %v1132 = vrsqrt.pop %v1130
      %v1133 = vrsqrt.pop %v1131
      %v1134 = vmul.f32 %v1118, %v1132
      %v1135 = vmul.f32 %v1119, %v1133
      %v1136 = vld [vmem:[%s6] sm:$0x1]
      %v1138 = vlaneseq
      %v1139 = vshrl.u32 %v1138, 7
      %v1140 = vsub.s32 0, %v1139
      %v1141 = vrot.slane %v1136, %v1140
      %v1143 = vmul.f32 %v1134, %v1141
      %v1144 = vmul.f32 %v1135, %v1141
      %v1145 = vld [vmem:[%s7] sm:$0x1]
      %v1147 = vlaneseq
      %v1148 = vshrl.u32 %v1147, 7
      %v1149 = vsub.s32 0, %v1148
      %v1150 = vrot.slane %v1145, %v1149
      %v1152 = vadd.f32 %v1143, %v1150
      %v1153 = vadd.f32 %v1144, %v1150
      %1154 = vst.msk [vmem:[%s365] sm:$0xff] %vm1108, %v1152
      %1155 = vst.msk [vmem:[%s365 + $0x8] sm:$0xff] %vm1108, %v1153
      %p1156 = scmp.lt.s32.totalorder %s19, 1
      %s1157 = scalar_select %p1156, %s19, 1
      %s1158 = smul.addr %s1157, 2
      %s1159 = smul.addr %s1158, 8
      %s1160 = scalar_lea.vmem %s8, %s1159
      // Predicated region
      $region53: #{decoder_forward.19} parent=51 // pred_check
        %p1161 = pneg %p225
      $region54: #{decoder_forward.19} parent=51 // pred_check_branch
        %1163 = sbr.rel (%p1161) target = $region56
      $region55: #{decoder_forward.19} parent=51 // pred_region
        _
      $region56: #{decoder_forward.19} parent=51 // pred_fallthru
        _
    $region52: #{decoder_forward.19} parent=5 // pred_fallthru
      _
    %p1164 = scmp.le.s32.totalorder 2, %s14
    // Predicated region
    $region57: #{decoder_forward.19} parent=5 // pred_check
      %p1165 = pneg %p1164
    $region58: #{decoder_forward.19} parent=5 // pred_check_branch
      %1167 = sbr.rel (%p1165) target = $region60
    $region59: #{decoder_forward.19} parent=5 // pred_region
      %s1168 = ssub.s32 %s14, 2
      // Predicated region
      $region61: #{decoder_forward.19} parent=59 // pred_check
        %p1169 = pneg %p231
      $region62: #{decoder_forward.19} parent=59 // pred_check_branch
        %1171 = sbr.rel (%p1169) target = $region64
      $region63: #{decoder_forward.19} parent=59 // pred_region
        %p1172 = scmp.lt.s32.totalorder %s20, 1
        %s1173 = scalar_select %p1172, %s20, 1
        %s1174 = smul.addr %s1173, 2
        %s1175 = smul.addr %s1174, 8
        %s1176 = scalar_lea.vmem %s8, %s1175
      $region64: #{decoder_forward.19} parent=59 // pred_fallthru
        _
    $region60: #{decoder_forward.19} parent=5 // pred_fallthru
      _
  $region6: #{decoder_forward.19} parent=0 // loop_footer
    %s18 = sadd.s32 1, %s14
  $region7: #{decoder_forward.19} parent=0 // loop_footer_branch
    %13 = sbr.rel target = $region3
  $region8: #{decoder_forward.19} parent=0 // loop_exit
    _

// kernel: decoder_forward.21
$region0: #{decoder_forward.21}
  #allocation0 [shape = 'u32[]', space=smem, size = 0x4, offset = 0x4, fixed_abs, tag = 'smem constant byte address 0x4 - core index']
  #allocation1 [shape = 'u32[144,128]{1,0:T(1,128)}', space=vmem, size = 0x12000, scoped, tag = 'internal scratch']
  %s0 = inlined_call_operand.vmem [shape: f32[32,2048], index: 0, kind: input, shape index: {}]
  %s1 = inlined_call_operand.vmem [shape: bf16[2048,32], index: 1, kind: input, shape index: {}]
  %s2 = inlined_call_operand.vmem [shape: f32[1,32], index: 2, kind: input, shape index: {}]
  %s3 = inlined_call_operand.vmem [shape: f32[32,32], index: 3, kind: input, shape index: {}]
  %s4 = inlined_call_operand.vmem [shape: f32[1,32], index: 4, kind: input, shape index: {}]
  %s5 = inlined_call_operand.vmem [shape: f32[1,32], index: 5, kind: input, shape index: {}]
  %s6 = inlined_call_operand.vmem [shape: f32[32,32], index: 6, kind: output, shape index: {}]
  %s7 = sld [smem:[#allocation0]]
  $region34: #{decoder_forward.21} parent=0
    _
  %s9 = ssub.s32 1, %s7
  %s10 = scalar_select 0, %s9, %s7
  // Predicated region
  $region2: #{decoder_forward.21} parent=0 // pred_check
    _
  $region3: #{decoder_forward.21} parent=0 // pred_check_branch
    %12 = sbr.rel (0) target = $region5
  $region4: #{decoder_forward.21} parent=0 // pred_region
    _
  $region5: #{decoder_forward.21} parent=0 // pred_fallthru
    _
  // Predicated region
  $region6: #{decoder_forward.21} parent=0 // pred_check
    _
  $region7: #{decoder_forward.21} parent=0 // pred_check_branch
    %14 = sbr.rel (0) target = $region9
  $region8: #{decoder_forward.21} parent=0 // pred_region
    _
  $region9: #{decoder_forward.21} parent=0 // pred_fallthru
    _
  // Predicated region
  $region10: #{decoder_forward.21} parent=0 // pred_check
    _
  $region11: #{decoder_forward.21} parent=0 // pred_check_branch
    %16 = sbr.rel (0) target = $region13
  $region12: #{decoder_forward.21} parent=0 // pred_region
    _
  $region13: #{decoder_forward.21} parent=0 // pred_fallthru
    _
  // Predicated region
  $region14: #{decoder_forward.21} parent=0 // pred_check
    _
  $region15: #{decoder_forward.21} parent=0 // pred_check_branch
    %18 = sbr.rel (0) target = $region17
  $region16: #{decoder_forward.21} parent=0 // pred_region
    _
  $region17: #{decoder_forward.21} parent=0 // pred_fallthru
    _
  // Predicated region
  $region18: #{decoder_forward.21} parent=0 // pred_check
    _
  $region19: #{decoder_forward.21} parent=0 // pred_check_branch
    %20 = sbr.rel (0) target = $region21
  $region20: #{decoder_forward.21} parent=0 // pred_region
    _
  $region21: #{decoder_forward.21} parent=0 // pred_fallthru
    _
  // Predicated region
  $region22: #{decoder_forward.21} parent=0 // pred_check
    _
  $region23: #{decoder_forward.21} parent=0 // pred_check_branch
    %22 = sbr.rel (0) target = $region25
  $region24: #{decoder_forward.21} parent=0 // pred_region
    _
  $region25: #{decoder_forward.21} parent=0 // pred_fallthru
    _
  %v24 = vld [vmem:[%s0] sm:$0xff]
  %v25 = vld [vmem:[%s0 + $0x8] sm:$0xff]
  %v26 = vld [vmem:[%s0 + $0x10] sm:$0xff]
  %v27 = vld [vmem:[%s0 + $0x18] sm:$0xff]
  %v28 = vld [vmem:[%s0 + $0x20] sm:$0xff]
  %v29 = vld [vmem:[%s0 + $0x28] sm:$0xff]
  %v30 = vld [vmem:[%s0 + $0x30] sm:$0xff]
  %v31 = vld [vmem:[%s0 + $0x38] sm:$0xff]
  %v32 = vld [vmem:[%s0 + $0x40] sm:$0xff]
  %v33 = vld [vmem:[%s0 + $0x48] sm:$0xff]
  %v34 = vld [vmem:[%s0 + $0x50] sm:$0xff]
  %v35 = vld [vmem:[%s0 + $0x58] sm:$0xff]
  %v36 = vld [vmem:[%s0 + $0x60] sm:$0xff]
  %v37 = vld [vmem:[%s0 + $0x68] sm:$0xff]
  %v38 = vld [vmem:[%s0 + $0x70] sm:$0xff]
  %v39 = vld [vmem:[%s0 + $0x78] sm:$0xff]
  %v40 = vld [vmem:[%s0 + $0x80] sm:$0xff]
  %v41 = vld [vmem:[%s0 + $0x88] sm:$0xff]
  %v42 = vld [vmem:[%s0 + $0x90] sm:$0xff]
  %v43 = vld [vmem:[%s0 + $0x98] sm:$0xff]
  %v44 = vld [vmem:[%s0 + $0xa0] sm:$0xff]
  %v45 = vld [vmem:[%s0 + $0xa8] sm:$0xff]
  %v46 = vld [vmem:[%s0 + $0xb0] sm:$0xff]
  %v47 = vld [vmem:[%s0 + $0xb8] sm:$0xff]
  %v48 = vld [vmem:[%s0 + $0xc0] sm:$0xff]
  %v49 = vld [vmem:[%s0 + $0xc8] sm:$0xff]
  %v50 = vld [vmem:[%s0 + $0xd0] sm:$0xff]
  %v51 = vld [vmem:[%s0 + $0xd8] sm:$0xff]
  %v52 = vld [vmem:[%s0 + $0xe0] sm:$0xff]
  %v53 = vld [vmem:[%s0 + $0xe8] sm:$0xff]
  %v54 = vld [vmem:[%s0 + $0xf0] sm:$0xff]
  %v55 = vld [vmem:[%s0 + $0xf8] sm:$0xff]
  %v56 = vld [vmem:[%s0 + $0x100] sm:$0xff]
  %v57 = vld [vmem:[%s0 + $0x108] sm:$0xff]
  %v58 = vld [vmem:[%s0 + $0x110] sm:$0xff]
  %v59 = vld [vmem:[%s0 + $0x118] sm:$0xff]
  %v60 = vld [vmem:[%s0 + $0x120] sm:$0xff]
  %v61 = vld [vmem:[%s0 + $0x128] sm:$0xff]
  %v62 = vld [vmem:[%s0 + $0x130] sm:$0xff]
  %v63 = vld [vmem:[%s0 + $0x138] sm:$0xff]
  %v64 = vld [vmem:[%s0 + $0x140] sm:$0xff]
  %v65 = vld [vmem:[%s0 + $0x148] sm:$0xff]
  %v66 = vld [vmem:[%s0 + $0x150] sm:$0xff]
  %v67 = vld [vmem:[%s0 + $0x158] sm:$0xff]
  %v68 = vld [vmem:[%s0 + $0x160] sm:$0xff]
  %v69 = vld [vmem:[%s0 + $0x168] sm:$0xff]
  %v70 = vld [vmem:[%s0 + $0x170] sm:$0xff]
  %v71 = vld [vmem:[%s0 + $0x178] sm:$0xff]
  %v72 = vld [vmem:[%s0 + $0x180] sm:$0xff]
  %v73 = vld [vmem:[%s0 + $0x188] sm:$0xff]
  %v74 = vld [vmem:[%s0 + $0x190] sm:$0xff]
  %v75 = vld [vmem:[%s0 + $0x198] sm:$0xff]
  %v76 = vld [vmem:[%s0 + $0x1a0] sm:$0xff]
  %v77 = vld [vmem:[%s0 + $0x1a8] sm:$0xff]
  %v78 = vld [vmem:[%s0 + $0x1b0] sm:$0xff]
  %v79 = vld [vmem:[%s0 + $0x1b8] sm:$0xff]
  %v80 = vld [vmem:[%s0 + $0x1c0] sm:$0xff]
  %v81 = vld [vmem:[%s0 + $0x1c8] sm:$0xff]
  %v82 = vld [vmem:[%s0 + $0x1d0] sm:$0xff]
  %v83 = vld [vmem:[%s0 + $0x1d8] sm:$0xff]
  %v84 = vld [vmem:[%s0 + $0x1e0] sm:$0xff]
  %v85 = vld [vmem:[%s0 + $0x1e8] sm:$0xff]
  %v86 = vld [vmem:[%s0 + $0x1f0] sm:$0xff]
  %v87 = vld [vmem:[%s0 + $0x1f8] sm:$0xff]
  %v88 = vpack.c.bf16 %v40, %v24
  %v89 = vpack.c.bf16 %v41, %v25
  %v90 = vpack.c.bf16 %v42, %v26
  %v91 = vpack.c.bf16 %v43, %v27
  %v92 = vpack.c.bf16 %v44, %v28
  %v93 = vpack.c.bf16 %v45, %v29
  %v94 = vpack.c.bf16 %v46, %v30
  %v95 = vpack.c.bf16 %v47, %v31
  %v96 = vpack.c.bf16 %v48, %v32
  %v97 = vpack.c.bf16 %v49, %v33
  %v98 = vpack.c.bf16 %v50, %v34
  %v99 = vpack.c.bf16 %v51, %v35
  %v100 = vpack.c.bf16 %v52, %v36
  %v101 = vpack.c.bf16 %v53, %v37
  %v102 = vpack.c.bf16 %v54, %v38
  %v103 = vpack.c.bf16 %v55, %v39
  %v104 = vpack.c.bf16 %v72, %v56
  %v105 = vpack.c.bf16 %v73, %v57
  %v106 = vpack.c.bf16 %v74, %v58
  %v107 = vpack.c.bf16 %v75, %v59
  %v108 = vpack.c.bf16 %v76, %v60
  %v109 = vpack.c.bf16 %v77, %v61
  %v110 = vpack.c.bf16 %v78, %v62
  %v111 = vpack.c.bf16 %v79, %v63
  %v112 = vpack.c.bf16 %v80, %v64
  %v113 = vpack.c.bf16 %v81, %v65
  %v114 = vpack.c.bf16 %v82, %v66
  %v115 = vpack.c.bf16 %v83, %v67
  %v116 = vpack.c.bf16 %v84, %v68
  %v117 = vpack.c.bf16 %v85, %v69
  %v118 = vpack.c.bf16 %v86, %v70
  %v119 = vpack.c.bf16 %v87, %v71
  %v120 = vld [vmem:[%s1] sm:$0xf]
  %v121 = vld [vmem:[%s1 + $0x4] sm:$0xf]
  %v122 = vld [vmem:[%s1 + $0x8] sm:$0xf]
  %v123 = vld [vmem:[%s1 + $0xc] sm:$0xf]
  %v124 = vld [vmem:[%s1 + $0x10] sm:$0xf]
  %v125 = vld [vmem:[%s1 + $0x14] sm:$0xf]
  %v126 = vld [vmem:[%s1 + $0x18] sm:$0xf]
  %v127 = vld [vmem:[%s1 + $0x1c] sm:$0xf]
  %v128 = vld [vmem:[%s1 + $0x20] sm:$0xf]
  %v129 = vld [vmem:[%s1 + $0x24] sm:$0xf]
  %v130 = vld [vmem:[%s1 + $0x28] sm:$0xf]
  %v131 = vld [vmem:[%s1 + $0x2c] sm:$0xf]
  %v132 = vld [vmem:[%s1 + $0x30] sm:$0xf]
  %v133 = vld [vmem:[%s1 + $0x34] sm:$0xf]
  %v134 = vld [vmem:[%s1 + $0x38] sm:$0xf]
  %v135 = vld [vmem:[%s1 + $0x3c] sm:$0xf]
  %v136 = vld [vmem:[%s1 + $0x40] sm:$0xf]
  %v137 = vld [vmem:[%s1 + $0x44] sm:$0xf]
  %v138 = vld [vmem:[%s1 + $0x48] sm:$0xf]
  %v139 = vld [vmem:[%s1 + $0x4c] sm:$0xf]
  %v140 = vld [vmem:[%s1 + $0x50] sm:$0xf]
  %v141 = vld [vmem:[%s1 + $0x54] sm:$0xf]
  %v142 = vld [vmem:[%s1 + $0x58] sm:$0xf]
  %v143 = vld [vmem:[%s1 + $0x5c] sm:$0xf]
  %v144 = vld [vmem:[%s1 + $0x60] sm:$0xf]
  %v145 = vld [vmem:[%s1 + $0x64] sm:$0xf]
  %v146 = vld [vmem:[%s1 + $0x68] sm:$0xf]
  %v147 = vld [vmem:[%s1 + $0x6c] sm:$0xf]
  %v148 = vld [vmem:[%s1 + $0x70] sm:$0xf]
  %v149 = vld [vmem:[%s1 + $0x74] sm:$0xf]
  %v150 = vld [vmem:[%s1 + $0x78] sm:$0xf]
  %v151 = vld [vmem:[%s1 + $0x7c] sm:$0xf]
  %v152 = vld [vmem:[%s1 + $0x80] sm:$0xf]
  %v153 = vld [vmem:[%s1 + $0x84] sm:$0xf]
  %v154 = vld [vmem:[%s1 + $0x88] sm:$0xf]
  %v155 = vld [vmem:[%s1 + $0x8c] sm:$0xf]
  %v156 = vld [vmem:[%s1 + $0x90] sm:$0xf]
  %v157 = vld [vmem:[%s1 + $0x94] sm:$0xf]
  %v158 = vld [vmem:[%s1 + $0x98] sm:$0xf]
  %v159 = vld [vmem:[%s1 + $0x9c] sm:$0xf]
  %v160 = vld [vmem:[%s1 + $0xa0] sm:$0xf]
  %v161 = vld [vmem:[%s1 + $0xa4] sm:$0xf]
  %v162 = vld [vmem:[%s1 + $0xa8] sm:$0xf]
  %v163 = vld [vmem:[%s1 + $0xac] sm:$0xf]
  %v164 = vld [vmem:[%s1 + $0xb0] sm:$0xf]
  %v165 = vld [vmem:[%s1 + $0xb4] sm:$0xf]
  %v166 = vld [vmem:[%s1 + $0xb8] sm:$0xf]
  %v167 = vld [vmem:[%s1 + $0xbc] sm:$0xf]
  %v168 = vld [vmem:[%s1 + $0xc0] sm:$0xf]
  %v169 = vld [vmem:[%s1 + $0xc4] sm:$0xf]
  %v170 = vld [vmem:[%s1 + $0xc8] sm:$0xf]
  %v171 = vld [vmem:[%s1 + $0xcc] sm:$0xf]
  %v172 = vld [vmem:[%s1 + $0xd0] sm:$0xf]
  %v173 = vld [vmem:[%s1 + $0xd4] sm:$0xf]
  %v174 = vld [vmem:[%s1 + $0xd8] sm:$0xf]
  %v175 = vld [vmem:[%s1 + $0xdc] sm:$0xf]
  %v176 = vld [vmem:[%s1 + $0xe0] sm:$0xf]
  %v177 = vld [vmem:[%s1 + $0xe4] sm:$0xf]
  %v178 = vld [vmem:[%s1 + $0xe8] sm:$0xf]
  %v179 = vld [vmem:[%s1 + $0xec] sm:$0xf]
  %v180 = vld [vmem:[%s1 + $0xf0] sm:$0xf]
  %v181 = vld [vmem:[%s1 + $0xf4] sm:$0xf]
  %v182 = vld [vmem:[%s1 + $0xf8] sm:$0xf]
  %v183 = vld [vmem:[%s1 + $0xfc] sm:$0xf]
  %v184 = vld [vmem:[%s1 + $0x100] sm:$0xf]
  %v185 = vld [vmem:[%s1 + $0x104] sm:$0xf]
  %v186 = vld [vmem:[%s1 + $0x108] sm:$0xf]
  %v187 = vld [vmem:[%s1 + $0x10c] sm:$0xf]
  %v188 = vld [vmem:[%s1 + $0x110] sm:$0xf]
  %v189 = vld [vmem:[%s1 + $0x114] sm:$0xf]
  %v190 = vld [vmem:[%s1 + $0x118] sm:$0xf]
  %v191 = vld [vmem:[%s1 + $0x11c] sm:$0xf]
  %v192 = vld [vmem:[%s1 + $0x120] sm:$0xf]
  %v193 = vld [vmem:[%s1 + $0x124] sm:$0xf]
  %v194 = vld [vmem:[%s1 + $0x128] sm:$0xf]
  %v195 = vld [vmem:[%s1 + $0x12c] sm:$0xf]
  %v196 = vld [vmem:[%s1 + $0x130] sm:$0xf]
  %v197 = vld [vmem:[%s1 + $0x134] sm:$0xf]
  %v198 = vld [vmem:[%s1 + $0x138] sm:$0xf]
  %v199 = vld [vmem:[%s1 + $0x13c] sm:$0xf]
  %v200 = vld [vmem:[%s1 + $0x140] sm:$0xf]
  %v201 = vld [vmem:[%s1 + $0x144] sm:$0xf]
  %v202 = vld [vmem:[%s1 + $0x148] sm:$0xf]
  %v203 = vld [vmem:[%s1 + $0x14c] sm:$0xf]
  %v204 = vld [vmem:[%s1 + $0x150] sm:$0xf]
  %v205 = vld [vmem:[%s1 + $0x154] sm:$0xf]
  %v206 = vld [vmem:[%s1 + $0x158] sm:$0xf]
  %v207 = vld [vmem:[%s1 + $0x15c] sm:$0xf]
  %v208 = vld [vmem:[%s1 + $0x160] sm:$0xf]
  %v209 = vld [vmem:[%s1 + $0x164] sm:$0xf]
  %v210 = vld [vmem:[%s1 + $0x168] sm:$0xf]
  %v211 = vld [vmem:[%s1 + $0x16c] sm:$0xf]
  %v212 = vld [vmem:[%s1 + $0x170] sm:$0xf]
  %v213 = vld [vmem:[%s1 + $0x174] sm:$0xf]
  %v214 = vld [vmem:[%s1 + $0x178] sm:$0xf]
  %v215 = vld [vmem:[%s1 + $0x17c] sm:$0xf]
  %v216 = vld [vmem:[%s1 + $0x180] sm:$0xf]
  %v217 = vld [vmem:[%s1 + $0x184] sm:$0xf]
  %v218 = vld [vmem:[%s1 + $0x188] sm:$0xf]
  %v219 = vld [vmem:[%s1 + $0x18c] sm:$0xf]
  %v220 = vld [vmem:[%s1 + $0x190] sm:$0xf]
  %v221 = vld [vmem:[%s1 + $0x194] sm:$0xf]
  %v222 = vld [vmem:[%s1 + $0x198] sm:$0xf]
  %v223 = vld [vmem:[%s1 + $0x19c] sm:$0xf]
  %v224 = vld [vmem:[%s1 + $0x1a0] sm:$0xf]
  %v225 = vld [vmem:[%s1 + $0x1a4] sm:$0xf]
  %v226 = vld [vmem:[%s1 + $0x1a8] sm:$0xf]
  %v227 = vld [vmem:[%s1 + $0x1ac] sm:$0xf]
  %v228 = vld [vmem:[%s1 + $0x1b0] sm:$0xf]
  %v229 = vld [vmem:[%s1 + $0x1b4] sm:$0xf]
  %v230 = vld [vmem:[%s1 + $0x1b8] sm:$0xf]
  %v231 = vld [vmem:[%s1 + $0x1bc] sm:$0xf]
  %v232 = vld [vmem:[%s1 + $0x1c0] sm:$0xf]
  %v233 = vld [vmem:[%s1 + $0x1c4] sm:$0xf]
  %v234 = vld [vmem:[%s1 + $0x1c8] sm:$0xf]
  %v235 = vld [vmem:[%s1 + $0x1cc] sm:$0xf]
  %v236 = vld [vmem:[%s1 + $0x1d0] sm:$0xf]
  %v237 = vld [vmem:[%s1 + $0x1d4] sm:$0xf]
  %v238 = vld [vmem:[%s1 + $0x1d8] sm:$0xf]
  %v239 = vld [vmem:[%s1 + $0x1dc] sm:$0xf]
  %v240 = vld [vmem:[%s1 + $0x1e0] sm:$0xf]
  %v241 = vld [vmem:[%s1 + $0x1e4] sm:$0xf]
  %v242 = vld [vmem:[%s1 + $0x1e8] sm:$0xf]
  %v243 = vld [vmem:[%s1 + $0x1ec] sm:$0xf]
  %v244 = vld [vmem:[%s1 + $0x1f0] sm:$0xf]
  %v245 = vld [vmem:[%s1 + $0x1f4] sm:$0xf]
  %v246 = vld [vmem:[%s1 + $0x1f8] sm:$0xf]
  %v247 = vld [vmem:[%s1 + $0x1fc] sm:$0xf]
  %v248 = vld [vmem:[%s1 + $0x200] sm:$0xf]
  %v249 = vld [vmem:[%s1 + $0x204] sm:$0xf]
  %v250 = vld [vmem:[%s1 + $0x208] sm:$0xf]
  %v251 = vld [vmem:[%s1 + $0x20c] sm:$0xf]
  %v252 = vld [vmem:[%s1 + $0x210] sm:$0xf]
  %v253 = vld [vmem:[%s1 + $0x214] sm:$0xf]
  %v254 = vld [vmem:[%s1 + $0x218] sm:$0xf]
  %v255 = vld [vmem:[%s1 + $0x21c] sm:$0xf]
  %v256 = vld [vmem:[%s1 + $0x220] sm:$0xf]
  %v257 = vld [vmem:[%s1 + $0x224] sm:$0xf]
  %v258 = vld [vmem:[%s1 + $0x228] sm:$0xf]
  %v259 = vld [vmem:[%s1 + $0x22c] sm:$0xf]
  %v260 = vld [vmem:[%s1 + $0x230] sm:$0xf]
  %v261 = vld [vmem:[%s1 + $0x234] sm:$0xf]
  %v262 = vld [vmem:[%s1 + $0x238] sm:$0xf]
  %v263 = vld [vmem:[%s1 + $0x23c] sm:$0xf]
  %v264 = vld [vmem:[%s1 + $0x240] sm:$0xf]
  %v265 = vld [vmem:[%s1 + $0x244] sm:$0xf]
  %v266 = vld [vmem:[%s1 + $0x248] sm:$0xf]
  %v267 = vld [vmem:[%s1 + $0x24c] sm:$0xf]
  %v268 = vld [vmem:[%s1 + $0x250] sm:$0xf]
  %v269 = vld [vmem:[%s1 + $0x254] sm:$0xf]
  %v270 = vld [vmem:[%s1 + $0x258] sm:$0xf]
  %v271 = vld [vmem:[%s1 + $0x25c] sm:$0xf]
  %v272 = vld [vmem:[%s1 + $0x260] sm:$0xf]
  %v273 = vld [vmem:[%s1 + $0x264] sm:$0xf]
  %v274 = vld [vmem:[%s1 + $0x268] sm:$0xf]
  %v275 = vld [vmem:[%s1 + $0x26c] sm:$0xf]
  %v276 = vld [vmem:[%s1 + $0x270] sm:$0xf]
  %v277 = vld [vmem:[%s1 + $0x274] sm:$0xf]
  %v278 = vld [vmem:[%s1 + $0x278] sm:$0xf]
  %v279 = vld [vmem:[%s1 + $0x27c] sm:$0xf]
  %v280 = vld [vmem:[%s1 + $0x280] sm:$0xf]
  %v281 = vld [vmem:[%s1 + $0x284] sm:$0xf]
  %v282 = vld [vmem:[%s1 + $0x288] sm:$0xf]
  %v283 = vld [vmem:[%s1 + $0x28c] sm:$0xf]
  %v284 = vld [vmem:[%s1 + $0x290] sm:$0xf]
  %v285 = vld [vmem:[%s1 + $0x294] sm:$0xf]
  %v286 = vld [vmem:[%s1 + $0x298] sm:$0xf]
  %v287 = vld [vmem:[%s1 + $0x29c] sm:$0xf]
  %v288 = vld [vmem:[%s1 + $0x2a0] sm:$0xf]
  %v289 = vld [vmem:[%s1 + $0x2a4] sm:$0xf]
  %v290 = vld [vmem:[%s1 + $0x2a8] sm:$0xf]
  %v291 = vld [vmem:[%s1 + $0x2ac] sm:$0xf]
  %v292 = vld [vmem:[%s1 + $0x2b0] sm:$0xf]
  %v293 = vld [vmem:[%s1 + $0x2b4] sm:$0xf]
  %v294 = vld [vmem:[%s1 + $0x2b8] sm:$0xf]
  %v295 = vld [vmem:[%s1 + $0x2bc] sm:$0xf]
  %v296 = vld [vmem:[%s1 + $0x2c0] sm:$0xf]
  %v297 = vld [vmem:[%s1 + $0x2c4] sm:$0xf]
  %v298 = vld [vmem:[%s1 + $0x2c8] sm:$0xf]
  %v299 = vld [vmem:[%s1 + $0x2cc] sm:$0xf]
  %v300 = vld [vmem:[%s1 + $0x2d0] sm:$0xf]
  %v301 = vld [vmem:[%s1 + $0x2d4] sm:$0xf]
  %v302 = vld [vmem:[%s1 + $0x2d8] sm:$0xf]
  %v303 = vld [vmem:[%s1 + $0x2dc] sm:$0xf]
  %v304 = vld [vmem:[%s1 + $0x2e0] sm:$0xf]
  %v305 = vld [vmem:[%s1 + $0x2e4] sm:$0xf]
  %v306 = vld [vmem:[%s1 + $0x2e8] sm:$0xf]
  %v307 = vld [vmem:[%s1 + $0x2ec] sm:$0xf]
  %v308 = vld [vmem:[%s1 + $0x2f0] sm:$0xf]
  %v309 = vld [vmem:[%s1 + $0x2f4] sm:$0xf]
  %v310 = vld [vmem:[%s1 + $0x2f8] sm:$0xf]
  %v311 = vld [vmem:[%s1 + $0x2fc] sm:$0xf]
  %v312 = vld [vmem:[%s1 + $0x300] sm:$0xf]
  %v313 = vld [vmem:[%s1 + $0x304] sm:$0xf]
  %v314 = vld [vmem:[%s1 + $0x308] sm:$0xf]
  %v315 = vld [vmem:[%s1 + $0x30c] sm:$0xf]
  %v316 = vld [vmem:[%s1 + $0x310] sm:$0xf]
  %v317 = vld [vmem:[%s1 + $0x314] sm:$0xf]
  %v318 = vld [vmem:[%s1 + $0x318] sm:$0xf]
  %v319 = vld [vmem:[%s1 + $0x31c] sm:$0xf]
  %v320 = vld [vmem:[%s1 + $0x320] sm:$0xf]
  %v321 = vld [vmem:[%s1 + $0x324] sm:$0xf]
  %v322 = vld [vmem:[%s1 + $0x328] sm:$0xf]
  %v323 = vld [vmem:[%s1 + $0x32c] sm:$0xf]
  %v324 = vld [vmem:[%s1 + $0x330] sm:$0xf]
  %v325 = vld [vmem:[%s1 + $0x334] sm:$0xf]
  %v326 = vld [vmem:[%s1 + $0x338] sm:$0xf]
  %v327 = vld [vmem:[%s1 + $0x33c] sm:$0xf]
  %v328 = vld [vmem:[%s1 + $0x340] sm:$0xf]
  %v329 = vld [vmem:[%s1 + $0x344] sm:$0xf]
  %v330 = vld [vmem:[%s1 + $0x348] sm:$0xf]
  %v331 = vld [vmem:[%s1 + $0x34c] sm:$0xf]
  %v332 = vld [vmem:[%s1 + $0x350] sm:$0xf]
  %v333 = vld [vmem:[%s1 + $0x354] sm:$0xf]
  %v334 = vld [vmem:[%s1 + $0x358] sm:$0xf]
  %v335 = vld [vmem:[%s1 + $0x35c] sm:$0xf]
  %v336 = vld [vmem:[%s1 + $0x360] sm:$0xf]
  %v337 = vld [vmem:[%s1 + $0x364] sm:$0xf]
  %v338 = vld [vmem:[%s1 + $0x368] sm:$0xf]
  %v339 = vld [vmem:[%s1 + $0x36c] sm:$0xf]
  %v340 = vld [vmem:[%s1 + $0x370] sm:$0xf]
  %v341 = vld [vmem:[%s1 + $0x374] sm:$0xf]
  %v342 = vld [vmem:[%s1 + $0x378] sm:$0xf]
  %v343 = vld [vmem:[%s1 + $0x37c] sm:$0xf]
  %v344 = vld [vmem:[%s1 + $0x380] sm:$0xf]
  %v345 = vld [vmem:[%s1 + $0x384] sm:$0xf]
  %v346 = vld [vmem:[%s1 + $0x388] sm:$0xf]
  %v347 = vld [vmem:[%s1 + $0x38c] sm:$0xf]
  %v348 = vld [vmem:[%s1 + $0x390] sm:$0xf]
  %v349 = vld [vmem:[%s1 + $0x394] sm:$0xf]
  %v350 = vld [vmem:[%s1 + $0x398] sm:$0xf]
  %v351 = vld [vmem:[%s1 + $0x39c] sm:$0xf]
  %v352 = vld [vmem:[%s1 + $0x3a0] sm:$0xf]
  %v353 = vld [vmem:[%s1 + $0x3a4] sm:$0xf]
  %v354 = vld [vmem:[%s1 + $0x3a8] sm:$0xf]
  %v355 = vld [vmem:[%s1 + $0x3ac] sm:$0xf]
  %v356 = vld [vmem:[%s1 + $0x3b0] sm:$0xf]
  %v357 = vld [vmem:[%s1 + $0x3b4] sm:$0xf]
  %v358 = vld [vmem:[%s1 + $0x3b8] sm:$0xf]
  %v359 = vld [vmem:[%s1 + $0x3bc] sm:$0xf]
  %v360 = vld [vmem:[%s1 + $0x3c0] sm:$0xf]
  %v361 = vld [vmem:[%s1 + $0x3c4] sm:$0xf]
  %v362 = vld [vmem:[%s1 + $0x3c8] sm:$0xf]
  %v363 = vld [vmem:[%s1 + $0x3cc] sm:$0xf]
  %v364 = vld [vmem:[%s1 + $0x3d0] sm:$0xf]
  %v365 = vld [vmem:[%s1 + $0x3d4] sm:$0xf]
  %v366 = vld [vmem:[%s1 + $0x3d8] sm:$0xf]
  %v367 = vld [vmem:[%s1 + $0x3dc] sm:$0xf]
  %v368 = vld [vmem:[%s1 + $0x3e0] sm:$0xf]
  %v369 = vld [vmem:[%s1 + $0x3e4] sm:$0xf]
  %v370 = vld [vmem:[%s1 + $0x3e8] sm:$0xf]
  %v371 = vld [vmem:[%s1 + $0x3ec] sm:$0xf]
  %v372 = vld [vmem:[%s1 + $0x3f0] sm:$0xf]
  %v373 = vld [vmem:[%s1 + $0x3f4] sm:$0xf]
  %v374 = vld [vmem:[%s1 + $0x3f8] sm:$0xf]
  %v375 = vld [vmem:[%s1 + $0x3fc] sm:$0xf]
  %v376 = vld [vmem:[%s2] sm:$0x1]
  %v378 = vlaneseq
  %v379 = vshrl.u32 %v378, 7
  %v380 = vsub.s32 0, %v379
  %v381 = vrot.slane %v376, %v380
  %v639 = vunpack.c.l.b16 %v120
  %v640 = vunpack.c.l.b16 %v121
  %v641 = vunpack.c.l.b16 %v122
  %v642 = vunpack.c.l.b16 %v123
  %v643 = vunpack.c.l.b16 %v124
  %v644 = vunpack.c.l.b16 %v125
  %v645 = vunpack.c.l.b16 %v126
  %v646 = vunpack.c.l.b16 %v127
  %v647 = vunpack.c.l.b16 %v128
  %v648 = vunpack.c.l.b16 %v129
  %v649 = vunpack.c.l.b16 %v130
  %v650 = vunpack.c.l.b16 %v131
  %v651 = vunpack.c.l.b16 %v132
  %v652 = vunpack.c.l.b16 %v133
  %v653 = vunpack.c.l.b16 %v134
  %v654 = vunpack.c.l.b16 %v135
  %v655 = vunpack.c.l.b16 %v136
  %v656 = vunpack.c.l.b16 %v137
  %v657 = vunpack.c.l.b16 %v138
  %v658 = vunpack.c.l.b16 %v139
  %v659 = vunpack.c.l.b16 %v140
  %v660 = vunpack.c.l.b16 %v141
  %v661 = vunpack.c.l.b16 %v142
  %v662 = vunpack.c.l.b16 %v143
  %v663 = vunpack.c.l.b16 %v144
  %v664 = vunpack.c.l.b16 %v145
  %v665 = vunpack.c.l.b16 %v146
  %v666 = vunpack.c.l.b16 %v147
  %v667 = vunpack.c.l.b16 %v148
  %v668 = vunpack.c.l.b16 %v149
  %v669 = vunpack.c.l.b16 %v150
  %v670 = vunpack.c.l.b16 %v151
  %v671 = vunpack.c.l.b16 %v152
  %v672 = vunpack.c.l.b16 %v153
  %v673 = vunpack.c.l.b16 %v154
  %v674 = vunpack.c.l.b16 %v155
  %v675 = vunpack.c.l.b16 %v156
  %v676 = vunpack.c.l.b16 %v157
  %v677 = vunpack.c.l.b16 %v158
  %v678 = vunpack.c.l.b16 %v159
  %v679 = vunpack.c.l.b16 %v160
  %v680 = vunpack.c.l.b16 %v161
  %v681 = vunpack.c.l.b16 %v162
  %v682 = vunpack.c.l.b16 %v163
  %v683 = vunpack.c.l.b16 %v164
  %v684 = vunpack.c.l.b16 %v165
  %v685 = vunpack.c.l.b16 %v166
  %v686 = vunpack.c.l.b16 %v167
  %v687 = vunpack.c.l.b16 %v168
  %v688 = vunpack.c.l.b16 %v169
  %v689 = vunpack.c.l.b16 %v170
  %v690 = vunpack.c.l.b16 %v171
  %v691 = vunpack.c.l.b16 %v172
  %v692 = vunpack.c.l.b16 %v173
  %v693 = vunpack.c.l.b16 %v174
  %v694 = vunpack.c.l.b16 %v175
  %v695 = vunpack.c.l.b16 %v176
  %v696 = vunpack.c.l.b16 %v177
  %v697 = vunpack.c.l.b16 %v178
  %v698 = vunpack.c.l.b16 %v179
  %v699 = vunpack.c.l.b16 %v180
  %v700 = vunpack.c.l.b16 %v181
  %v701 = vunpack.c.l.b16 %v182
  %v702 = vunpack.c.l.b16 %v183
  %v703 = vunpack.c.l.b16 %v184
  %v704 = vunpack.c.l.b16 %v185
  %v705 = vunpack.c.l.b16 %v186
  %v706 = vunpack.c.l.b16 %v187
  %v707 = vunpack.c.l.b16 %v188
  %v708 = vunpack.c.l.b16 %v189
  %v709 = vunpack.c.l.b16 %v190
  %v710 = vunpack.c.l.b16 %v191
  %v711 = vunpack.c.l.b16 %v192
  %v712 = vunpack.c.l.b16 %v193
  %v713 = vunpack.c.l.b16 %v194
  %v714 = vunpack.c.l.b16 %v195
  %v715 = vunpack.c.l.b16 %v196
  %v716 = vunpack.c.l.b16 %v197
  %v717 = vunpack.c.l.b16 %v198
  %v718 = vunpack.c.l.b16 %v199
  %v719 = vunpack.c.l.b16 %v200
  %v720 = vunpack.c.l.b16 %v201
  %v721 = vunpack.c.l.b16 %v202
  %v722 = vunpack.c.l.b16 %v203
  %v723 = vunpack.c.l.b16 %v204
  %v724 = vunpack.c.l.b16 %v205
  %v725 = vunpack.c.l.b16 %v206
  %v726 = vunpack.c.l.b16 %v207
  %v727 = vunpack.c.l.b16 %v208
  %v728 = vunpack.c.l.b16 %v209
  %v729 = vunpack.c.l.b16 %v210
  %v730 = vunpack.c.l.b16 %v211
  %v731 = vunpack.c.l.b16 %v212
  %v732 = vunpack.c.l.b16 %v213
  %v733 = vunpack.c.l.b16 %v214
  %v734 = vunpack.c.l.b16 %v215
  %v735 = vunpack.c.l.b16 %v216
  %v736 = vunpack.c.l.b16 %v217
  %v737 = vunpack.c.l.b16 %v218
  %v738 = vunpack.c.l.b16 %v219
  %v739 = vunpack.c.l.b16 %v220
  %v740 = vunpack.c.l.b16 %v221
  %v741 = vunpack.c.l.b16 %v222
  %v742 = vunpack.c.l.b16 %v223
  %v743 = vunpack.c.l.b16 %v224
  %v744 = vunpack.c.l.b16 %v225
  %v745 = vunpack.c.l.b16 %v226
  %v746 = vunpack.c.l.b16 %v227
  %v747 = vunpack.c.l.b16 %v228
  %v748 = vunpack.c.l.b16 %v229
  %v749 = vunpack.c.l.b16 %v230
  %v750 = vunpack.c.l.b16 %v231
  %v751 = vunpack.c.l.b16 %v232
  %v752 = vunpack.c.l.b16 %v233
  %v753 = vunpack.c.l.b16 %v234
  %v754 = vunpack.c.l.b16 %v235
  %v755 = vunpack.c.l.b16 %v236
  %v756 = vunpack.c.l.b16 %v237
  %v757 = vunpack.c.l.b16 %v238
  %v758 = vunpack.c.l.b16 %v239
  %v759 = vunpack.c.l.b16 %v240
  %v760 = vunpack.c.l.b16 %v241
  %v761 = vunpack.c.l.b16 %v242
  %v762 = vunpack.c.l.b16 %v243
  %v763 = vunpack.c.l.b16 %v244
  %v764 = vunpack.c.l.b16 %v245
  %v765 = vunpack.c.l.b16 %v246
  %v766 = vunpack.c.l.b16 %v247
  %v767 = vunpack.c.l.b16 %v248
  %v768 = vunpack.c.l.b16 %v249
  %v769 = vunpack.c.l.b16 %v250
  %v770 = vunpack.c.l.b16 %v251
  %v771 = vunpack.c.l.b16 %v252
  %v772 = vunpack.c.l.b16 %v253
  %v773 = vunpack.c.l.b16 %v254
  %v774 = vunpack.c.l.b16 %v255
  %v775 = vunpack.c.l.b16 %v256
  %v776 = vunpack.c.l.b16 %v257
  %v777 = vunpack.c.l.b16 %v258
  %v778 = vunpack.c.l.b16 %v259
  %v779 = vunpack.c.l.b16 %v260
  %v780 = vunpack.c.l.b16 %v261
  %v781 = vunpack.c.l.b16 %v262
  %v782 = vunpack.c.l.b16 %v263
  %v783 = vunpack.c.l.b16 %v264
  %v784 = vunpack.c.l.b16 %v265
  %v785 = vunpack.c.l.b16 %v266
  %v786 = vunpack.c.l.b16 %v267
  %v787 = vunpack.c.l.b16 %v268
  %v788 = vunpack.c.l.b16 %v269
  %v789 = vunpack.c.l.b16 %v270
  %v790 = vunpack.c.l.b16 %v271
  %v791 = vunpack.c.l.b16 %v272
  %v792 = vunpack.c.l.b16 %v273
  %v793 = vunpack.c.l.b16 %v274
  %v794 = vunpack.c.l.b16 %v275
  %v795 = vunpack.c.l.b16 %v276
  %v796 = vunpack.c.l.b16 %v277
  %v797 = vunpack.c.l.b16 %v278
  %v798 = vunpack.c.l.b16 %v279
  %v799 = vunpack.c.l.b16 %v280
  %v800 = vunpack.c.l.b16 %v281
  %v801 = vunpack.c.l.b16 %v282
  %v802 = vunpack.c.l.b16 %v283
  %v803 = vunpack.c.l.b16 %v284
  %v804 = vunpack.c.l.b16 %v285
  %v805 = vunpack.c.l.b16 %v286
  %v806 = vunpack.c.l.b16 %v287
  %v807 = vunpack.c.l.b16 %v288
  %v808 = vunpack.c.l.b16 %v289
  %v809 = vunpack.c.l.b16 %v290
  %v810 = vunpack.c.l.b16 %v291
  %v811 = vunpack.c.l.b16 %v292
  %v812 = vunpack.c.l.b16 %v293
  %v813 = vunpack.c.l.b16 %v294
  %v814 = vunpack.c.l.b16 %v295
  %v815 = vunpack.c.l.b16 %v296
  %v816 = vunpack.c.l.b16 %v297
  %v817 = vunpack.c.l.b16 %v298
  %v818 = vunpack.c.l.b16 %v299
  %v819 = vunpack.c.l.b16 %v300
  %v820 = vunpack.c.l.b16 %v301
  %v821 = vunpack.c.l.b16 %v302
  %v822 = vunpack.c.l.b16 %v303
  %v823 = vunpack.c.l.b16 %v304
  %v824 = vunpack.c.l.b16 %v305
  %v825 = vunpack.c.l.b16 %v306
  %v826 = vunpack.c.l.b16 %v307
  %v827 = vunpack.c.l.b16 %v308
  %v828 = vunpack.c.l.b16 %v309
  %v829 = vunpack.c.l.b16 %v310
  %v830 = vunpack.c.l.b16 %v311
  %v831 = vunpack.c.l.b16 %v312
  %v832 = vunpack.c.l.b16 %v313
  %v833 = vunpack.c.l.b16 %v314
  %v834 = vunpack.c.l.b16 %v315
  %v835 = vunpack.c.l.b16 %v316
  %v836 = vunpack.c.l.b16 %v317
  %v837 = vunpack.c.l.b16 %v318
  %v838 = vunpack.c.l.b16 %v319
  %v839 = vunpack.c.l.b16 %v320
  %v840 = vunpack.c.l.b16 %v321
  %v841 = vunpack.c.l.b16 %v322
  %v842 = vunpack.c.l.b16 %v323
  %v843 = vunpack.c.l.b16 %v324
  %v844 = vunpack.c.l.b16 %v325
  %v845 = vunpack.c.l.b16 %v326
  %v846 = vunpack.c.l.b16 %v327
  %v847 = vunpack.c.l.b16 %v328
  %v848 = vunpack.c.l.b16 %v329
  %v849 = vunpack.c.l.b16 %v330
  %v850 = vunpack.c.l.b16 %v331
  %v851 = vunpack.c.l.b16 %v332
  %v852 = vunpack.c.l.b16 %v333
  %v853 = vunpack.c.l.b16 %v334
  %v854 = vunpack.c.l.b16 %v335
  %v855 = vunpack.c.l.b16 %v336
  %v856 = vunpack.c.l.b16 %v337
  %v857 = vunpack.c.l.b16 %v338
  %v858 = vunpack.c.l.b16 %v339
  %v859 = vunpack.c.l.b16 %v340
  %v860 = vunpack.c.l.b16 %v341
  %v861 = vunpack.c.l.b16 %v342
  %v862 = vunpack.c.l.b16 %v343
  %v863 = vunpack.c.l.b16 %v344
  %v864 = vunpack.c.l.b16 %v345
  %v865 = vunpack.c.l.b16 %v346
  %v866 = vunpack.c.l.b16 %v347
  %v867 = vunpack.c.l.b16 %v348
  %v868 = vunpack.c.l.b16 %v349
  %v869 = vunpack.c.l.b16 %v350
  %v870 = vunpack.c.l.b16 %v351
  %v871 = vunpack.c.l.b16 %v352
  %v872 = vunpack.c.l.b16 %v353
  %v873 = vunpack.c.l.b16 %v354
  %v874 = vunpack.c.l.b16 %v355
  %v875 = vunpack.c.l.b16 %v356
  %v876 = vunpack.c.l.b16 %v357
  %v877 = vunpack.c.l.b16 %v358
  %v878 = vunpack.c.l.b16 %v359
  %v879 = vunpack.c.l.b16 %v360
  %v880 = vunpack.c.l.b16 %v361
  %v881 = vunpack.c.l.b16 %v362
  %v882 = vunpack.c.l.b16 %v363
  %v883 = vunpack.c.l.b16 %v364
  %v884 = vunpack.c.l.b16 %v365
  %v885 = vunpack.c.l.b16 %v366
  %v886 = vunpack.c.l.b16 %v367
  %v887 = vunpack.c.l.b16 %v368
  %v888 = vunpack.c.l.b16 %v369
  %v889 = vunpack.c.l.b16 %v370
  %v890 = vunpack.c.l.b16 %v371
  %v891 = vunpack.c.l.b16 %v372
  %v892 = vunpack.c.l.b16 %v373
  %v893 = vunpack.c.l.b16 %v374
  %v894 = vunpack.c.l.b16 %v375
  %v895 = vpack.c.b16 %v640, %v639
  %v896 = vpack.c.b16 %v642, %v641
  %v897 = vpack.c.b16 %v644, %v643
  %v898 = vpack.c.b16 %v646, %v645
  %v899 = vpack.c.b16 %v648, %v647
  %v900 = vpack.c.b16 %v650, %v649
  %v901 = vpack.c.b16 %v652, %v651
  %v902 = vpack.c.b16 %v654, %v653
  %v903 = vpack.c.b16 %v656, %v655
  %v904 = vpack.c.b16 %v658, %v657
  %v905 = vpack.c.b16 %v660, %v659
  %v906 = vpack.c.b16 %v662, %v661
  %v907 = vpack.c.b16 %v664, %v663
  %v908 = vpack.c.b16 %v666, %v665
  %v909 = vpack.c.b16 %v668, %v667
  %v910 = vpack.c.b16 %v670, %v669
  %v911 = vpack.c.b16 %v672, %v671
  %v912 = vpack.c.b16 %v674, %v673
  %v913 = vpack.c.b16 %v676, %v675
  %v914 = vpack.c.b16 %v678, %v677
  %v915 = vpack.c.b16 %v680, %v679
  %v916 = vpack.c.b16 %v682, %v681
  %v917 = vpack.c.b16 %v684, %v683
  %v918 = vpack.c.b16 %v686, %v685
  %v919 = vpack.c.b16 %v688, %v687
  %v920 = vpack.c.b16 %v690, %v689
  %v921 = vpack.c.b16 %v692, %v691
  %v922 = vpack.c.b16 %v694, %v693
  %v923 = vpack.c.b16 %v696, %v695
  %v924 = vpack.c.b16 %v698, %v697
  %v925 = vpack.c.b16 %v700, %v699
  %v926 = vpack.c.b16 %v702, %v701
  %v927 = vpack.c.b16 %v704, %v703
  %v928 = vpack.c.b16 %v706, %v705
  %v929 = vpack.c.b16 %v708, %v707
  %v930 = vpack.c.b16 %v710, %v709
  %v931 = vpack.c.b16 %v712, %v711
  %v932 = vpack.c.b16 %v714, %v713
  %v933 = vpack.c.b16 %v716, %v715
  %v934 = vpack.c.b16 %v718, %v717
  %v935 = vpack.c.b16 %v720, %v719
  %v936 = vpack.c.b16 %v722, %v721
  %v937 = vpack.c.b16 %v724, %v723
  %v938 = vpack.c.b16 %v726, %v725
  %v939 = vpack.c.b16 %v728, %v727
  %v940 = vpack.c.b16 %v730, %v729
  %v941 = vpack.c.b16 %v732, %v731
  %v942 = vpack.c.b16 %v734, %v733
  %v943 = vpack.c.b16 %v736, %v735
  %v944 = vpack.c.b16 %v738, %v737
  %v945 = vpack.c.b16 %v740, %v739
  %v946 = vpack.c.b16 %v742, %v741
  %v947 = vpack.c.b16 %v744, %v743
  %v948 = vpack.c.b16 %v746, %v745
  %v949 = vpack.c.b16 %v748, %v747
  %v950 = vpack.c.b16 %v750, %v749
  %v951 = vpack.c.b16 %v752, %v751
  %v952 = vpack.c.b16 %v754, %v753
  %v953 = vpack.c.b16 %v756, %v755
  %v954 = vpack.c.b16 %v758, %v757
  %v955 = vpack.c.b16 %v760, %v759
  %v956 = vpack.c.b16 %v762, %v761
  %v957 = vpack.c.b16 %v764, %v763
  %v958 = vpack.c.b16 %v766, %v765
  %v959 = vpack.c.b16 %v768, %v767
  %v960 = vpack.c.b16 %v770, %v769
  %v961 = vpack.c.b16 %v772, %v771
  %v962 = vpack.c.b16 %v774, %v773
  %v963 = vpack.c.b16 %v776, %v775
  %v964 = vpack.c.b16 %v778, %v777
  %v965 = vpack.c.b16 %v780, %v779
  %v966 = vpack.c.b16 %v782, %v781
  %v967 = vpack.c.b16 %v784, %v783
  %v968 = vpack.c.b16 %v786, %v785
  %v969 = vpack.c.b16 %v788, %v787
  %v970 = vpack.c.b16 %v790, %v789
  %v971 = vpack.c.b16 %v792, %v791
  %v972 = vpack.c.b16 %v794, %v793
  %v973 = vpack.c.b16 %v796, %v795
  %v974 = vpack.c.b16 %v798, %v797
  %v975 = vpack.c.b16 %v800, %v799
  %v976 = vpack.c.b16 %v802, %v801
  %v977 = vpack.c.b16 %v804, %v803
  %v978 = vpack.c.b16 %v806, %v805
  %v979 = vpack.c.b16 %v808, %v807
  %v980 = vpack.c.b16 %v810, %v809
  %v981 = vpack.c.b16 %v812, %v811
  %v982 = vpack.c.b16 %v814, %v813
  %v983 = vpack.c.b16 %v816, %v815
  %v984 = vpack.c.b16 %v818, %v817
  %v985 = vpack.c.b16 %v820, %v819
  %v986 = vpack.c.b16 %v822, %v821
  %v987 = vpack.c.b16 %v824, %v823
  %v988 = vpack.c.b16 %v826, %v825
  %v989 = vpack.c.b16 %v828, %v827
  %v990 = vpack.c.b16 %v830, %v829
  %v991 = vpack.c.b16 %v832, %v831
  %v992 = vpack.c.b16 %v834, %v833
  %v993 = vpack.c.b16 %v836, %v835
  %v994 = vpack.c.b16 %v838, %v837
  %v995 = vpack.c.b16 %v840, %v839
  %v996 = vpack.c.b16 %v842, %v841
  %v997 = vpack.c.b16 %v844, %v843
  %v998 = vpack.c.b16 %v846, %v845
  %v999 = vpack.c.b16 %v848, %v847
  %v1000 = vpack.c.b16 %v850, %v849
  %v1001 = vpack.c.b16 %v852, %v851
  %v1002 = vpack.c.b16 %v854, %v853
  %v1003 = vpack.c.b16 %v856, %v855
  %v1004 = vpack.c.b16 %v858, %v857
  %v1005 = vpack.c.b16 %v860, %v859
  %v1006 = vpack.c.b16 %v862, %v861
  %v1007 = vpack.c.b16 %v864, %v863
  %v1008 = vpack.c.b16 %v866, %v865
  %v1009 = vpack.c.b16 %v868, %v867
  %v1010 = vpack.c.b16 %v870, %v869
  %v1011 = vpack.c.b16 %v872, %v871
  %v1012 = vpack.c.b16 %v874, %v873
  %v1013 = vpack.c.b16 %v876, %v875
  %v1014 = vpack.c.b16 %v878, %v877
  %v1015 = vpack.c.b16 %v880, %v879
  %v1016 = vpack.c.b16 %v882, %v881
  %v1017 = vpack.c.b16 %v884, %v883
  %v1018 = vpack.c.b16 %v886, %v885
  %v1019 = vpack.c.b16 %v888, %v887
  %v1020 = vpack.c.b16 %v890, %v889
  %v1021 = vpack.c.b16 %v892, %v891
  %v1022 = vpack.c.b16 %v894, %v893
  %1151 = vmatprep.subr.bf16.mxu0 0
  %1152 = vmatpush1.bf16.msra.mxu0 %v895
  %1153 = vmatprep.subr.bf16.mxu0 0
  %1154 = vmatpush1.bf16.msra.mxu0 %v896
  %1155 = vmatprep.subr.bf16.mxu0 0
  %1156 = vmatpush1.bf16.msra.mxu0 %v897
  %1157 = vmatprep.subr.bf16.mxu0 0
  %1158 = vmatpush1.bf16.msra.mxu0 %v898
  %1159 = vmatprep.subr.bf16.mxu0 0
  %1160 = vmatpush1.bf16.msra.mxu0 %v899
  %1161 = vmatprep.subr.bf16.mxu0 0
  %1162 = vmatpush1.bf16.msra.mxu0 %v900
  %1163 = vmatprep.subr.bf16.mxu0 0
  %1164 = vmatpush1.bf16.msra.mxu0 %v901
  %1165 = vmatprep.subr.bf16.mxu0 0
  %1166 = vmatpush1.bf16.msra.mxu0 %v902
  %1167 = vmatprep.subr.bf16.mxu0 0
  %1168 = vmatpush1.bf16.msra.mxu0 %v903
  %1169 = vmatprep.subr.bf16.mxu0 0
  %1170 = vmatpush1.bf16.msra.mxu0 %v904
  %1171 = vmatprep.subr.bf16.mxu0 0
  %1172 = vmatpush1.bf16.msra.mxu0 %v905
  %1173 = vmatprep.subr.bf16.mxu0 0
  %1174 = vmatpush1.bf16.msra.mxu0 %v906
  %1175 = vmatprep.subr.bf16.mxu0 0
  %1176 = vmatpush1.bf16.msra.mxu0 %v907
  %1177 = vmatprep.subr.bf16.mxu0 0
  %1178 = vmatpush1.bf16.msra.mxu0 %v908
  %1179 = vmatprep.subr.bf16.mxu0 0
  %1180 = vmatpush1.bf16.msra.mxu0 %v909
  %1181 = vmatprep.subr.bf16.mxu0 0
  %1182 = vmatpush1.bf16.msra.mxu0 %v910
  %1183 = vmatprep.mubr.bf16.mxu0 %v89
  %1184 = vmatmul.mubr.bf16.gmra.mrb[0].mxu0 %v88
  %v1185 = vpop.f32.mrb[0].mxu0
  %v1186 = vadd.f32 %v381, %v1185
  %v1187 = vpop.f32.mrb[0].mxu0
  %v1188 = vpop.f32.mrb[0].mxu0
  %v1189 = vadd.f32 %v381, %v1188
  %v1190 = vpop.f32.mrb[0].mxu0
  %1191 = vmatprep.mubr.bf16.mxu0 %v105
  %1192 = vmatmul.mubr.bf16.gmra.mrb[0].mxu0 %v104
  %v1193 = vpop.f32.mrb[0].mxu0
  %v1194 = vadd.f32 %v381, %v1193
  %v1195 = vpop.f32.mrb[0].mxu0
  %v1196 = vpop.f32.mrb[0].mxu0
  %v1197 = vadd.f32 %v381, %v1196
  %v1198 = vpop.f32.mrb[0].mxu0
  %1199 = vdwg.mxu0
  %1200 = vmatprep.subr.bf16.mxu0 0
  %1201 = vmatpush1.bf16.msra.mxu0 %v911
  %1202 = vmatprep.subr.bf16.mxu0 0
  %1203 = vmatpush1.bf16.msra.mxu0 %v912
  %1204 = vmatprep.subr.bf16.mxu0 0
  %1205 = vmatpush1.bf16.msra.mxu0 %v913
  %1206 = vmatprep.subr.bf16.mxu0 0
  %1207 = vmatpush1.bf16.msra.mxu0 %v914
  %1208 = vmatprep.subr.bf16.mxu0 0
  %1209 = vmatpush1.bf16.msra.mxu0 %v915
  %1210 = vmatprep.subr.bf16.mxu0 0
  %1211 = vmatpush1.bf16.msra.mxu0 %v916
  %1212 = vmatprep.subr.bf16.mxu0 0
  %1213 = vmatpush1.bf16.msra.mxu0 %v917
  %1214 = vmatprep.subr.bf16.mxu0 0
  %1215 = vmatpush1.bf16.msra.mxu0 %v918
  %1216 = vmatprep.subr.bf16.mxu0 0
  %1217 = vmatpush1.bf16.msra.mxu0 %v919
  %1218 = vmatprep.subr.bf16.mxu0 0
  %1219 = vmatpush1.bf16.msra.mxu0 %v920
  %1220 = vmatprep.subr.bf16.mxu0 0
  %1221 = vmatpush1.bf16.msra.mxu0 %v921
  %1222 = vmatprep.subr.bf16.mxu0 0
  %1223 = vmatpush1.bf16.msra.mxu0 %v922
  %1224 = vmatprep.subr.bf16.mxu0 0
  %1225 = vmatpush1.bf16.msra.mxu0 %v923
  %1226 = vmatprep.subr.bf16.mxu0 0
  %1227 = vmatpush1.bf16.msra.mxu0 %v924
  %1228 = vmatprep.subr.bf16.mxu0 0
  %1229 = vmatpush1.bf16.msra.mxu0 %v925
  %1230 = vmatprep.subr.bf16.mxu0 0
  %1231 = vmatpush1.bf16.msra.mxu0 %v926
  %1232 = vmatprep.mubr.bf16.mxu0 %v91
  %1233 = vmatmul.mubr.bf16.gmra.mrb[0].mxu0 %v90
  %v1234 = vpop.f32.mrb[0].mxu0
  %v1235 = vadd.f32 %v1186, %v1234
  %v1236 = vpop.f32.mrb[0].mxu0
  %v1237 = vpop.f32.mrb[0].mxu0
  %v1238 = vadd.f32 %v1189, %v1237
  %v1239 = vpop.f32.mrb[0].mxu0
  %1240 = vmatprep.mubr.bf16.mxu0 %v107
  %1241 = vmatmul.mubr.bf16.gmra.mrb[0].mxu0 %v106
  %v1242 = vpop.f32.mrb[0].mxu0
  %v1243 = vadd.f32 %v1194, %v1242
  %v1244 = vpop.f32.mrb[0].mxu0
  %v1245 = vpop.f32.mrb[0].mxu0
  %v1246 = vadd.f32 %v1197, %v1245
  %v1247 = vpop.f32.mrb[0].mxu0
  %1248 = vdwg.mxu0
  %1249 = vmatprep.subr.bf16.mxu0 0
  %1250 = vmatpush1.bf16.msra.mxu0 %v927
  %1251 = vmatprep.subr.bf16.mxu0 0
  %1252 = vmatpush1.bf16.msra.mxu0 %v928
  %1253 = vmatprep.subr.bf16.mxu0 0
  %1254 = vmatpush1.bf16.msra.mxu0 %v929
  %1255 = vmatprep.subr.bf16.mxu0 0
  %1256 = vmatpush1.bf16.msra.mxu0 %v930
  %1257 = vmatprep.subr.bf16.mxu0 0
  %1258 = vmatpush1.bf16.msra.mxu0 %v931
  %1259 = vmatprep.subr.bf16.mxu0 0
  %1260 = vmatpush1.bf16.msra.mxu0 %v932
  %1261 = vmatprep.subr.bf16.mxu0 0
  %1262 = vmatpush1.bf16.msra.mxu0 %v933
  %1263 = vmatprep.subr.bf16.mxu0 0
  %1264 = vmatpush1.bf16.msra.mxu0 %v934
  %1265 = vmatprep.subr.bf16.mxu0 0
  %1266 = vmatpush1.bf16.msra.mxu0 %v935
  %1267 = vmatprep.subr.bf16.mxu0 0
  %1268 = vmatpush1.bf16.msra.mxu0 %v936
  %1269 = vmatprep.subr.bf16.mxu0 0
  %1270 = vmatpush1.bf16.msra.mxu0 %v937
  %1271 = vmatprep.subr.bf16.mxu0 0
  %1272 = vmatpush1.bf16.msra.mxu0 %v938
  %1273 = vmatprep.subr.bf16.mxu0 0
  %1274 = vmatpush1.bf16.msra.mxu0 %v939
  %1275 = vmatprep.subr.bf16.mxu0 0
  %1276 = vmatpush1.bf16.msra.mxu0 %v940
  %1277 = vmatprep.subr.bf16.mxu0 0
  %1278 = vmatpush1.bf16.msra.mxu0 %v941
  %1279 = vmatprep.subr.bf16.mxu0 0
  %1280 = vmatpush1.bf16.msra.mxu0 %v942
  %1281 = vmatprep.mubr.bf16.mxu0 %v93
  %1282 = vmatmul.mubr.bf16.gmra.mrb[0].mxu0 %v92
  %v1283 = vpop.f32.mrb[0].mxu0
  %v1284 = vadd.f32 %v1235, %v1283
  %v1285 = vpop.f32.mrb[0].mxu0
  %v1286 = vpop.f32.mrb[0].mxu0
  %v1287 = vadd.f32 %v1238, %v1286
  %v1288 = vpop.f32.mrb[0].mxu0
  %1289 = vmatprep.mubr.bf16.mxu0 %v109
  %1290 = vmatmul.mubr.bf16.gmra.mrb[0].mxu0 %v108
  %v1291 = vpop.f32.mrb[0].mxu0
  %v1292 = vadd.f32 %v1243, %v1291
  %v1293 = vpop.f32.mrb[0].mxu0
  %v1294 = vpop.f32.mrb[0].mxu0
  %v1295 = vadd.f32 %v1246, %v1294
  %v1296 = vpop.f32.mrb[0].mxu0
  %1297 = vdwg.mxu0
  %1298 = vmatprep.subr.bf16.mxu0 0
  %1299 = vmatpush1.bf16.msra.mxu0 %v943
  %1300 = vmatprep.subr.bf16.mxu0 0
  %1301 = vmatpush1.bf16.msra.mxu0 %v944
  %1302 = vmatprep.subr.bf16.mxu0 0
  %1303 = vmatpush1.bf16.msra.mxu0 %v945
  %1304 = vmatprep.subr.bf16.mxu0 0
  %1305 = vmatpush1.bf16.msra.mxu0 %v946
  %1306 = vmatprep.subr.bf16.mxu0 0
  %1307 = vmatpush1.bf16.msra.mxu0 %v947
  %1308 = vmatprep.subr.bf16.mxu0 0
  %1309 = vmatpush1.bf16.msra.mxu0 %v948
  %1310 = vmatprep.subr.bf16.mxu0 0
  %1311 = vmatpush1.bf16.msra.mxu0 %v949
  %1312 = vmatprep.subr.bf16.mxu0 0
  %1313 = vmatpush1.bf16.msra.mxu0 %v950
  %1314 = vmatprep.subr.bf16.mxu0 0
  %1315 = vmatpush1.bf16.msra.mxu0 %v951
  %1316 = vmatprep.subr.bf16.mxu0 0
  %1317 = vmatpush1.bf16.msra.mxu0 %v952
  %1318 = vmatprep.subr.bf16.mxu0 0
  %1319 = vmatpush1.bf16.msra.mxu0 %v953
  %1320 = vmatprep.subr.bf16.mxu0 0
  %1321 = vmatpush1.bf16.msra.mxu0 %v954
  %1322 = vmatprep.subr.bf16.mxu0 0
  %1323 = vmatpush1.bf16.msra.mxu0 %v955
  %1324 = vmatprep.subr.bf16.mxu0 0
  %1325 = vmatpush1.bf16.msra.mxu0 %v956
  %1326 = vmatprep.subr.bf16.mxu0 0
  %1327 = vmatpush1.bf16.msra.mxu0 %v957
  %1328 = vmatprep.subr.bf16.mxu0 0
  %1329 = vmatpush1.bf16.msra.mxu0 %v958
  %1330 = vmatprep.mubr.bf16.mxu0 %v95
  %1331 = vmatmul.mubr.bf16.gmra.mrb[0].mxu0 %v94
  %v1332 = vpop.f32.mrb[0].mxu0
  %v1333 = vadd.f32 %v1284, %v1332
  %v1334 = vpop.f32.mrb[0].mxu0
  %v1335 = vpop.f32.mrb[0].mxu0
  %v1336 = vadd.f32 %v1287, %v1335
  %v1337 = vpop.f32.mrb[0].mxu0
  %1338 = vmatprep.mubr.bf16.mxu0 %v111
  %1339 = vmatmul.mubr.bf16.gmra.mrb[0].mxu0 %v110
  %v1340 = vpop.f32.mrb[0].mxu0
  %v1341 = vadd.f32 %v1292, %v1340
  %v1342 = vpop.f32.mrb[0].mxu0
  %v1343 = vpop.f32.mrb[0].mxu0
  %v1344 = vadd.f32 %v1295, %v1343
  %v1345 = vpop.f32.mrb[0].mxu0
  %1346 = vdwg.mxu0
  %1347 = vmatprep.subr.bf16.mxu0 0
  %1348 = vmatpush1.bf16.msra.mxu0 %v959
  %1349 = vmatprep.subr.bf16.mxu0 0
  %1350 = vmatpush1.bf16.msra.mxu0 %v960
  %1351 = vmatprep.subr.bf16.mxu0 0
  %1352 = vmatpush1.bf16.msra.mxu0 %v961
  %1353 = vmatprep.subr.bf16.mxu0 0
  %1354 = vmatpush1.bf16.msra.mxu0 %v962
  %1355 = vmatprep.subr.bf16.mxu0 0
  %1356 = vmatpush1.bf16.msra.mxu0 %v963
  %1357 = vmatprep.subr.bf16.mxu0 0
  %1358 = vmatpush1.bf16.msra.mxu0 %v964
  %1359 = vmatprep.subr.bf16.mxu0 0
  %1360 = vmatpush1.bf16.msra.mxu0 %v965
  %1361 = vmatprep.subr.bf16.mxu0 0
  %1362 = vmatpush1.bf16.msra.mxu0 %v966
  %1363 = vmatprep.subr.bf16.mxu0 0
  %1364 = vmatpush1.bf16.msra.mxu0 %v967
  %1365 = vmatprep.subr.bf16.mxu0 0
  %1366 = vmatpush1.bf16.msra.mxu0 %v968
  %1367 = vmatprep.subr.bf16.mxu0 0
  %1368 = vmatpush1.bf16.msra.mxu0 %v969
  %1369 = vmatprep.subr.bf16.mxu0 0
  %1370 = vmatpush1.bf16.msra.mxu0 %v970
  %1371 = vmatprep.subr.bf16.mxu0 0
  %1372 = vmatpush1.bf16.msra.mxu0 %v971
  %1373 = vmatprep.subr.bf16.mxu0 0
  %1374 = vmatpush1.bf16.msra.mxu0 %v972
  %1375 = vmatprep.subr.bf16.mxu0 0
  %1376 = vmatpush1.bf16.msra.mxu0 %v973
  %1377 = vmatprep.subr.bf16.mxu0 0
  %1378 = vmatpush1.bf16.msra.mxu0 %v974
  %1379 = vmatprep.mubr.bf16.mxu0 %v97
  %1380 = vmatmul.mubr.bf16.gmra.mrb[0].mxu0 %v96
  %v1381 = vpop.f32.mrb[0].mxu0
  %v1382 = vadd.f32 %v1333, %v1381
  %v1383 = vpop.f32.mrb[0].mxu0
  %v1384 = vpop.f32.mrb[0].mxu0
  %v1385 = vadd.f32 %v1336, %v1384
  %v1386 = vpop.f32.mrb[0].mxu0
  %1387 = vmatprep.mubr.bf16.mxu0 %v113
  %1388 = vmatmul.mubr.bf16.gmra.mrb[0].mxu0 %v112
  %v1389 = vpop.f32.mrb[0].mxu0
  %v1390 = vadd.f32 %v1341, %v1389
  %v1391 = vpop.f32.mrb[0].mxu0
  %v1392 = vpop.f32.mrb[0].mxu0
  %v1393 = vadd.f32 %v1344, %v1392
  %v1394 = vpop.f32.mrb[0].mxu0
  %1395 = vdwg.mxu0
  %1396 = vmatprep.subr.bf16.mxu0 0
  %1397 = vmatpush1.bf16.msra.mxu0 %v975
  %1398 = vmatprep.subr.bf16.mxu0 0
  %1399 = vmatpush1.bf16.msra.mxu0 %v976
  %1400 = vmatprep.subr.bf16.mxu0 0
  %1401 = vmatpush1.bf16.msra.mxu0 %v977
  %1402 = vmatprep.subr.bf16.mxu0 0
  %1403 = vmatpush1.bf16.msra.mxu0 %v978
  %1404 = vmatprep.subr.bf16.mxu0 0
  %1405 = vmatpush1.bf16.msra.mxu0 %v979
  %1406 = vmatprep.subr.bf16.mxu0 0
  %1407 = vmatpush1.bf16.msra.mxu0 %v980
  %1408 = vmatprep.subr.bf16.mxu0 0
  %1409 = vmatpush1.bf16.msra.mxu0 %v981
  %1410 = vmatprep.subr.bf16.mxu0 0
  %1411 = vmatpush1.bf16.msra.mxu0 %v982
  %1412 = vmatprep.subr.bf16.mxu0 0
  %1413 = vmatpush1.bf16.msra.mxu0 %v983
  %1414 = vmatprep.subr.bf16.mxu0 0
  %1415 = vmatpush1.bf16.msra.mxu0 %v984
  %1416 = vmatprep.subr.bf16.mxu0 0
  %1417 = vmatpush1.bf16.msra.mxu0 %v985
  %1418 = vmatprep.subr.bf16.mxu0 0
  %1419 = vmatpush1.bf16.msra.mxu0 %v986
  %1420 = vmatprep.subr.bf16.mxu0 0
  %1421 = vmatpush1.bf16.msra.mxu0 %v987
  %1422 = vmatprep.subr.bf16.mxu0 0
  %1423 = vmatpush1.bf16.msra.mxu0 %v988
  %1424 = vmatprep.subr.bf16.mxu0 0
  %1425 = vmatpush1.bf16.msra.mxu0 %v989
  %1426 = vmatprep.subr.bf16.mxu0 0
  %1427 = vmatpush1.bf16.msra.mxu0 %v990
  %1428 = vmatprep.mubr.bf16.mxu0 %v99
  %1429 = vmatmul.mubr.bf16.gmra.mrb[0].mxu0 %v98
  %v1430 = vpop.f32.mrb[0].mxu0
  %v1431 = vadd.f32 %v1382, %v1430
  %v1432 = vpop.f32.mrb[0].mxu0
  %v1433 = vpop.f32.mrb[0].mxu0
  %v1434 = vadd.f32 %v1385, %v1433
  %v1435 = vpop.f32.mrb[0].mxu0
  %1436 = vmatprep.mubr.bf16.mxu0 %v115
  %1437 = vmatmul.mubr.bf16.gmra.mrb[0].mxu0 %v114
  %v1438 = vpop.f32.mrb[0].mxu0
  %v1439 = vadd.f32 %v1390, %v1438
  %v1440 = vpop.f32.mrb[0].mxu0
  %v1441 = vpop.f32.mrb[0].mxu0
  %v1442 = vadd.f32 %v1393, %v1441
  %v1443 = vpop.f32.mrb[0].mxu0
  %1444 = vdwg.mxu0
  %1445 = vmatprep.subr.bf16.mxu0 0
  %1446 = vmatpush1.bf16.msra.mxu0 %v991
  %1447 = vmatprep.subr.bf16.mxu0 0
  %1448 = vmatpush1.bf16.msra.mxu0 %v992
  %1449 = vmatprep.subr.bf16.mxu0 0
  %1450 = vmatpush1.bf16.msra.mxu0 %v993
  %1451 = vmatprep.subr.bf16.mxu0 0
  %1452 = vmatpush1.bf16.msra.mxu0 %v994
  %1453 = vmatprep.subr.bf16.mxu0 0
  %1454 = vmatpush1.bf16.msra.mxu0 %v995
  %1455 = vmatprep.subr.bf16.mxu0 0
  %1456 = vmatpush1.bf16.msra.mxu0 %v996
  %1457 = vmatprep.subr.bf16.mxu0 0
  %1458 = vmatpush1.bf16.msra.mxu0 %v997
  %1459 = vmatprep.subr.bf16.mxu0 0
  %1460 = vmatpush1.bf16.msra.mxu0 %v998
  %1461 = vmatprep.subr.bf16.mxu0 0
  %1462 = vmatpush1.bf16.msra.mxu0 %v999
  %1463 = vmatprep.subr.bf16.mxu0 0
  %1464 = vmatpush1.bf16.msra.mxu0 %v1000
  %1465 = vmatprep.subr.bf16.mxu0 0
  %1466 = vmatpush1.bf16.msra.mxu0 %v1001
  %1467 = vmatprep.subr.bf16.mxu0 0
  %1468 = vmatpush1.bf16.msra.mxu0 %v1002
  %1469 = vmatprep.subr.bf16.mxu0 0
  %1470 = vmatpush1.bf16.msra.mxu0 %v1003
  %1471 = vmatprep.subr.bf16.mxu0 0
  %1472 = vmatpush1.bf16.msra.mxu0 %v1004
  %1473 = vmatprep.subr.bf16.mxu0 0
  %1474 = vmatpush1.bf16.msra.mxu0 %v1005
  %1475 = vmatprep.subr.bf16.mxu0 0
  %1476 = vmatpush1.bf16.msra.mxu0 %v1006
  %1477 = vmatprep.mubr.bf16.mxu0 %v101
  %1478 = vmatmul.mubr.bf16.gmra.mrb[0].mxu0 %v100
  %v1479 = vpop.f32.mrb[0].mxu0
  %v1480 = vadd.f32 %v1431, %v1479
  %v1481 = vpop.f32.mrb[0].mxu0
  %v1482 = vpop.f32.mrb[0].mxu0
  %v1483 = vadd.f32 %v1434, %v1482
  %v1484 = vpop.f32.mrb[0].mxu0
  %1485 = vmatprep.mubr.bf16.mxu0 %v117
  %1486 = vmatmul.mubr.bf16.gmra.mrb[0].mxu0 %v116
  %v1487 = vpop.f32.mrb[0].mxu0
  %v1488 = vadd.f32 %v1439, %v1487
  %v1489 = vpop.f32.mrb[0].mxu0
  %v1490 = vpop.f32.mrb[0].mxu0
  %v1491 = vadd.f32 %v1442, %v1490
  %v1492 = vpop.f32.mrb[0].mxu0
  %1493 = vdwg.mxu0
  %1494 = vmatprep.subr.bf16.mxu0 0
  %1495 = vmatpush1.bf16.msra.mxu0 %v1007
  %1496 = vmatprep.subr.bf16.mxu0 0
  %1497 = vmatpush1.bf16.msra.mxu0 %v1008
  %1498 = vmatprep.subr.bf16.mxu0 0
  %1499 = vmatpush1.bf16.msra.mxu0 %v1009
  %1500 = vmatprep.subr.bf16.mxu0 0
  %1501 = vmatpush1.bf16.msra.mxu0 %v1010
  %1502 = vmatprep.subr.bf16.mxu0 0
  %1503 = vmatpush1.bf16.msra.mxu0 %v1011
  %1504 = vmatprep.subr.bf16.mxu0 0
  %1505 = vmatpush1.bf16.msra.mxu0 %v1012
  %1506 = vmatprep.subr.bf16.mxu0 0
  %1507 = vmatpush1.bf16.msra.mxu0 %v1013
  %1508 = vmatprep.subr.bf16.mxu0 0
  %1509 = vmatpush1.bf16.msra.mxu0 %v1014
  %1510 = vmatprep.subr.bf16.mxu0 0
  %1511 = vmatpush1.bf16.msra.mxu0 %v1015
  %1512 = vmatprep.subr.bf16.mxu0 0
  %1513 = vmatpush1.bf16.msra.mxu0 %v1016
  %1514 = vmatprep.subr.bf16.mxu0 0
  %1515 = vmatpush1.bf16.msra.mxu0 %v1017
  %1516 = vmatprep.subr.bf16.mxu0 0
  %1517 = vmatpush1.bf16.msra.mxu0 %v1018
  %1518 = vmatprep.subr.bf16.mxu0 0
  %1519 = vmatpush1.bf16.msra.mxu0 %v1019
  %1520 = vmatprep.subr.bf16.mxu0 0
  %1521 = vmatpush1.bf16.msra.mxu0 %v1020
  %1522 = vmatprep.subr.bf16.mxu0 0
  %1523 = vmatpush1.bf16.msra.mxu0 %v1021
  %1524 = vmatprep.subr.bf16.mxu0 0
  %1525 = vmatpush1.bf16.msra.mxu0 %v1022
  %1526 = vmatprep.mubr.bf16.mxu0 %v103
  %1527 = vmatmul.mubr.bf16.gmra.mrb[0].mxu0 %v102
  %v1528 = vpop.f32.mrb[0].mxu0
  %v1529 = vadd.f32 %v1480, %v1528
  %v1530 = vpop.f32.mrb[0].mxu0
  %v1531 = vpop.f32.mrb[0].mxu0
  %v1532 = vadd.f32 %v1483, %v1531
  %v1533 = vpop.f32.mrb[0].mxu0
  %1534 = vmatprep.mubr.bf16.mxu0 %v119
  %1535 = vmatmul.mubr.bf16.gmra.mrb[0].mxu0 %v118
  %v1536 = vpop.f32.mrb[0].mxu0
  %v1537 = vadd.f32 %v1488, %v1536
  %v1538 = vpop.f32.mrb[0].mxu0
  %v1539 = vpop.f32.mrb[0].mxu0
  %v1540 = vadd.f32 %v1491, %v1539
  %v1541 = vpop.f32.mrb[0].mxu0
  %1542 = vdwg.mxu0
  %v1543 = vld [vmem:[%s3] sm:$0xff]
  %v1544 = vld [vmem:[%s3 + $0x8] sm:$0xff]
  %v1545 = vld [vmem:[%s3 + $0x10] sm:$0xff]
  %v1546 = vld [vmem:[%s3 + $0x18] sm:$0xff]
  %v1547 = vadd.f32 %v1529, %v1543
  %v1548 = vadd.f32 %v1532, %v1544
  %v1549 = vadd.f32 %v1537, %v1545
  %v1550 = vadd.f32 %v1540, %v1546
  %vm1551 = vcmask 261120
  %v1552 = vsel %vm1551, %v1547, 0.0
  %1553 = vadd.xlane.f32.xlu0 %v1552
  %v1554 = vpop.xlane.xlu0 %1553
  %v1555 = vsel %vm1551, %v1548, 0.0
  %1556 = vadd.xlane.f32.xlu0 %v1555
  %v1557 = vpop.xlane.xlu0 %1556
  %v1558 = vsel %vm1551, %v1549, 0.0
  %1559 = vadd.xlane.f32.xlu0 %v1558
  %v1560 = vpop.xlane.xlu0 %1559
  %v1561 = vsel %vm1551, %v1550, 0.0
  %1562 = vadd.xlane.f32.xlu0 %v1561
  %v1563 = vpop.xlane.xlu0 %1562
  %v1564 = vrcp.pop 32.0
  %v1565 = vmul.f32 %v1554, %v1564
  %v1566 = vmul.f32 %v1557, %v1564
  %v1567 = vmul.f32 %v1560, %v1564
  %v1568 = vmul.f32 %v1563, %v1564
  %v1569 = vsub.f32 %v1547, %v1565
  %v1570 = vsub.f32 %v1548, %v1566
  %v1571 = vsub.f32 %v1549, %v1567
  %v1572 = vsub.f32 %v1550, %v1568
  %v1573 = vmul.f32 %v1569, %v1569
  %v1574 = vmul.f32 %v1570, %v1570
  %v1575 = vmul.f32 %v1571, %v1571
  %v1576 = vmul.f32 %v1572, %v1572
  %v1577 = vsel %vm1551, %v1573, 0.0
  %1578 = vadd.xlane.f32.xlu0 %v1577
  %v1579 = vpop.xlane.xlu0 %1578
  %v1580 = vsel %vm1551, %v1574, 0.0
  %1581 = vadd.xlane.f32.xlu0 %v1580
  %v1582 = vpop.xlane.xlu0 %1581
  %v1583 = vsel %vm1551, %v1575, 0.0
  %1584 = vadd.xlane.f32.xlu0 %v1583
  %v1585 = vpop.xlane.xlu0 %1584
  %v1586 = vsel %vm1551, %v1576, 0.0
  %1587 = vadd.xlane.f32.xlu0 %v1586
  %v1588 = vpop.xlane.xlu0 %1587
  %v1589 = vmul.f32 %v1579, %v1564
  %v1590 = vmul.f32 %v1582, %v1564
  %v1591 = vmul.f32 %v1585, %v1564
  %v1592 = vmul.f32 %v1588, %v1564
  %v1593 = vadd.f32 %v1589, 1e-05
  %v1594 = vadd.f32 %v1590, 1e-05
  %v1595 = vadd.f32 %v1591, 1e-05
  %v1596 = vadd.f32 %v1592, 1e-05
  %v1597 = vrsqrt.pop %v1593
  %v1598 = vrsqrt.pop %v1594
  %v1599 = vrsqrt.pop %v1595
  %v1600 = vrsqrt.pop %v1596
  %v1601 = vmul.f32 %v1569, %v1597
  %v1602 = vmul.f32 %v1570, %v1598
  %v1603 = vmul.f32 %v1571, %v1599
  %v1604 = vmul.f32 %v1572, %v1600
  %v1605 = vld [vmem:[%s4] sm:$0x1]
  %v1607 = vlaneseq
  %v1608 = vshrl.u32 %v1607, 7
  %v1609 = vsub.s32 0, %v1608
  %v1610 = vrot.slane %v1605, %v1609
  %v1612 = vmul.f32 %v1601, %v1610
  %v1613 = vmul.f32 %v1602, %v1610
  %v1614 = vmul.f32 %v1603, %v1610
  %v1615 = vmul.f32 %v1604, %v1610
  %v1616 = vld [vmem:[%s5] sm:$0x1]
  %v1618 = vlaneseq
  %v1619 = vshrl.u32 %v1618, 7
  %v1620 = vsub.s32 0, %v1619
  %v1621 = vrot.slane %v1616, %v1620
  %v1623 = vadd.f32 %v1612, %v1621
  %v1624 = vadd.f32 %v1613, %v1621
  %v1625 = vadd.f32 %v1614, %v1621
  %v1626 = vadd.f32 %v1615, %v1621
  %1627 = vst.msk [vmem:[%s6] sm:$0xff] %vm1551, %v1623
  %1628 = vst.msk [vmem:[%s6 + $0x8] sm:$0xff] %vm1551, %v1624
  %1629 = vst.msk [vmem:[%s6 + $0x10] sm:$0xff] %vm1551, %v1625
  %1630 = vst.msk [vmem:[%s6 + $0x18] sm:$0xff] %vm1551, %v1626
  // Predicated region
  $region26: #{decoder_forward.21} parent=0 // pred_check
    _
  $region27: #{decoder_forward.21} parent=0 // pred_check_branch
    %1632 = sbr.rel (0) target = $region29
  $region28: #{decoder_forward.21} parent=0 // pred_region
    _
  $region29: #{decoder_forward.21} parent=0 // pred_fallthru
    _
  // Predicated region
  $region30: #{decoder_forward.21} parent=0 // pred_check
    _
  $region31: #{decoder_forward.21} parent=0 // pred_check_branch
    %1634 = sbr.rel (0) target = $region33
  $region32: #{decoder_forward.21} parent=0 // pred_region
    _
  $region33: #{decoder_forward.21} parent=0 // pred_fallthru
    _

</llo_original>
